<compile_context>
chip_gen: v7x
topology: tpu7x:2x2x1
jax: 0.10.0
libtpu: 0.0.40
codegen_flags: <defaults>
</compile_context>

<pallas_src>
import jax
import jax.numpy as jnp
from jax.experimental import pallas as pl
from jax.experimental.pallas import tpu as pltpu


# ----------------------------------------------------------------------------
# Fused kernel: conv1(matmul) -> pool -> conv2(9 acc. matmuls) -> pool
#               -> fc1 (accumulated over spatial positions) -> ReLU -> fc2
# ----------------------------------------------------------------------------
def _cnn_fused_kernel(p_ref, w1_ref, b1_ref, w2_ref, b2_ref,
                      wf1_ref, bf1_ref, wf2_ref, bf2_ref,
                      o_ref, pad2_ref):
    NB, H, W, K1 = p_ref.shape          # K1 = 9 * C0 (im2col built in wrapper)
    C1 = w1_ref.shape[1]
    C2 = w2_ref.shape[2]
    Hh, Wh = H // 2, W // 2             # after pool 1
    Hq, Wq = Hh // 2, Wh // 2           # after pool 2

    # Zero the conv2 halo scratch ONCE.  The scratch persists across grid
    # steps, the interior is fully overwritten every step and the 1-px border
    # is never written, so a step-0 memset is sufficient (keep this invariant
    # if the conv geometry ever changes).
    @pl.when(pl.program_id(0) == 0)
    def _():
        pad2_ref[...] = jnp.zeros(pad2_ref.shape, pad2_ref.dtype)

    def bias_relu_pool(acc, b, nb, h, w, cout):
        """acc: (nb*h*w, cout) f32 -> (nb, h//2, w//2, cout) f32."""
        acc = jnp.maximum(acc + b, 0.0)                     # bias + ReLU (f32)
        a = acc.reshape(nb * (h // 2), 2, w, cout)
        r = jnp.maximum(a[:, 0], a[:, 1])                   # 2x2 pool: H pairs
        r = r.reshape(nb * (h // 2), w // 2, 2, cout)
        r = jnp.maximum(r[:, :, 0], r[:, :, 1])             # 2x2 pool: W pairs
        return r.reshape(nb, h // 2, w // 2, cout)

    # ---- conv1: single MXU matmul on the wrapper-built im2col patches ------
    patches = p_ref[...].reshape(NB * H * W, K1)            # bf16
    acc1 = jnp.dot(patches, w1_ref[...],
                   preferred_element_type=jnp.float32)      # (NB*H*W, C1) f32
    p1 = bias_relu_pool(acc1, b1_ref[...], NB, H, W, C1)    # (NB, Hh, Wh, C1)

    # ---- conv2: halo in VMEM scratch + 9 accumulating K=C1 matmuls ---------
    pad2_ref[:, 1:Hh + 1, 1:Wh + 1, :] = p1                 # interior only
    acc2 = None
    for t, (dy, dx) in enumerate((dy, dx) for dy in range(3) for dx in range(3)):
        win = pad2_ref[:, dy:dy + Hh, dx:dx + Wh, :]
        win = win.reshape(NB * Hh * Wh, C1).astype(jnp.bfloat16)
        d = jnp.dot(win, w2_ref[t], preferred_element_type=jnp.float32)
        acc2 = d if acc2 is None else acc2 + d
    p2 = bias_relu_pool(acc2, b2_ref[...], NB, Hh, Wh, C2)  # (NB, Hq, Wq, C2)
    p2 = p2.astype(jnp.bfloat16)

    # ---- fc1 accumulated over spatial positions (no flatten concatenate) ---
    h1 = None
    for hh in range(Hq):
        for ww in range(Wq):
            d = jnp.dot(p2[:, hh, ww, :], wf1_ref[hh * Wq + ww],
                        preferred_element_type=jnp.float32)
            h1 = d if h1 is None else h1 + d
    h1 = jnp.maximum(h1 + bf1_ref[...], 0.0)                # (NB, n_hidden) f32

    # ---- fc2 (output lane-padded to 128 by the wrapper) ---------------------
    out = jnp.dot(h1.astype(jnp.bfloat16), wf2_ref[...],
                  preferred_element_type=jnp.float32)
    o_ref[...] = (out + bf2_ref[...]).astype(o_ref.dtype)


# ----------------------------------------------------------------------------
# Wrapper
# ----------------------------------------------------------------------------
def cnn_forward(x_nchw, kparams):
    N, C0, H, W = x_nchw.shape
    assert H % 4 == 0 and W % 4 == 0, "spatial dims must be divisible by 4"
    C1 = kparams["b_conv1"].shape[-1]
    C2 = kparams["b_conv2"].shape[-1]
    n_hidden = kparams["b_fc1"].shape[-1]
    out_dim = kparams["out_dim"]
    out_pad = kparams["b_fc2"].shape[-1]                 # lane-padded (x128)
    Hh, Wh = H // 2, W // 2
    Hq, Wq = Hh // 2, Wh // 2
    assert kparams["w_conv1"].shape == (9 * C0, C1)
    assert kparams["w_fc1"].shape == (Hq * Wq, C2, n_hidden)

    # Batch block: whole batch when small; otherwise the largest divisor of N
    # that is <= 32 (amortizes per-step overhead, gives fc matmuls a usable M,
    # and keeps N//NB >= 2 blocks so v7x's two TensorCores both get work).
    NB = N if N <= 32 else max(d for d in range(1, 33) if N % d == 0)

    # conv1 halo + im2col in XLA (cheap, hidden by BlockSpec double-buffering):
    # removes the pad1 scratch, its memset, and the 9-way lane concatenate
    # from the kernel, and makes conv1 a single matmul with K = 9*C0.
    x_nhwc = jnp.transpose(x_nchw, (0, 2, 3, 1))
    xp = jnp.pad(x_nhwc, ((0, 0), (1, 1), (1, 1), (0, 0)))
    patches = jnp.concatenate(
        [xp[:, dy:dy + H, dx:dx + W, :] for dy in range(3) for dx in range(3)],
        axis=-1).astype(jnp.bfloat16)                    # (N, H, W, 9*C0)

    # Rough per-block VMEM budget; raise the scoped limit only when needed
    # (wf1 is the first thing to grow as input_size scales).
    vmem_est = (2 * NB * H * W * 9 * C0 * 2              # patches (bf16, 2 bufs)
                + Hq * Wq * C2 * n_hidden * 2            # wf1 (bf16, resident)
                + NB * (Hh + 2) * (Wh + 2) * C1 * 4      # conv2 halo scratch
                + (2 << 20))                             # other weights / slack
    cparams = {"dimension_semantics": ("parallel",)}
    if vmem_est > (24 << 20):
        cparams["vmem_limit_bytes"] = min(int(vmem_est * 3 // 2), 56 << 20)

    fwd = pl.pallas_call(
        _cnn_fused_kernel,
        out_shape=jax.ShapeDtypeStruct((N, out_pad), jnp.float32),
        grid=(N // NB,),
        in_specs=[
            pl.BlockSpec((NB, H, W, 9 * C0), lambda n: (n, 0, 0, 0)),
            pl.BlockSpec((9 * C0, C1), lambda n: (0, 0)),
            pl.BlockSpec((1, C1), lambda n: (0, 0)),
            pl.BlockSpec((9, C1, C2), lambda n: (0, 0, 0)),
            pl.BlockSpec((1, C2), lambda n: (0, 0)),
            pl.BlockSpec((Hq * Wq, C2, n_hidden), lambda n: (0, 0, 0)),
            pl.BlockSpec((1, n_hidden), lambda n: (0, 0)),
            pl.BlockSpec((n_hidden, out_pad), lambda n: (0, 0)),
            pl.BlockSpec((1, out_pad), lambda n: (0, 0)),
        ],
        out_specs=pl.BlockSpec((NB, out_pad), lambda n: (n, 0)),
        scratch_shapes=[
            pltpu.VMEM((NB, Hh + 2, Wh + 2, C1), jnp.float32),   # conv2 halo
        ],
        compiler_params=pltpu.CompilerParams(**cparams),
    )
    out = fwd(patches,
              kparams["w_conv1"], kparams["b_conv1"],
              kparams["w_conv2"], kparams["b_conv2"],
              kparams["w_fc1"], kparams["b_fc1"],
              kparams["w_fc2"], kparams["b_fc2"])
    return out[:, :out_dim]


# ----------------------------------------------------------------------------
# Parameter construction (PyTorch layouts) + conversion to kernel layouts
# ----------------------------------------------------------------------------
def init_torch_params(key, input_channels, output_dim, input_size):
    ks = jax.random.split(key, 8)
    s = input_size[0] // 4                       # two 2x2 max-pools
    fc_in = 64 * s * s
    return {
        "w_conv1": 0.05 * jax.random.normal(ks[0], (32, input_channels, 3, 3), jnp.float32),
        "b_conv1": 0.05 * jax.random.normal(ks[1], (32,), jnp.float32),
        "w_conv2": 0.05 * jax.random.normal(ks[2], (64, 32, 3, 3), jnp.float32),
        "b_conv2": 0.05 * jax.random.normal(ks[3], (64,), jnp.float32),
        "w_fc1":   0.05 * jax.random.normal(ks[4], (256, fc_in), jnp.float32),
        "b_fc1":   0.05 * jax.random.normal(ks[5], (256,), jnp.float32),
        "w_fc2":   0.05 * jax.random.normal(ks[6], (output_dim, 256), jnp.float32),
        "b_fc2":   0.05 * jax.random.normal(ks[7], (output_dim,), jnp.float32),
    }


def to_kernel_params(tp, input_size):
    c1 = tp["w_conv1"].shape[0]                  # 32
    c2 = tp["w_conv2"].shape[0]                  # 64
    hq, wq = input_size[0] // 4, input_size[1] // 4
    n_hidden = tp["w_fc1"].shape[0]              # 256
    out_dim = tp["w_fc2"].shape[0]
    out_pad = -(-out_dim // 128) * 128           # lane-dense output block
    bf16 = jnp.bfloat16

    # conv1: (Cout, Cin, 3, 3) -> (9*Cin, Cout), rows ordered (dy, dx, ci)
    # to match the wrapper-side im2col lane order.
    w1 = jnp.transpose(tp["w_conv1"], (2, 3, 1, 0)).reshape(-1, c1)

    # conv2: kept as 9 separate (Cin, Cout) tap matrices (tap = dy*3+dx) for
    # the accumulating-dot formulation.
    w2 = jnp.transpose(tp["w_conv2"], (2, 3, 1, 0)).reshape(9, c1, c2)

    # fc1: PyTorch rows index the NCHW flatten (c, h, w); regroup to
    # (Hq*Wq, C2, n_hidden) so the kernel accumulates one matmul per NHWC
    # spatial position (no activation transpose / flatten concat needed).
    wf1 = jnp.transpose(tp["w_fc1"], (1, 0))                       # (fc_in, nh)
    wf1 = wf1.reshape(c2, hq, wq, n_hidden).transpose(1, 2, 0, 3)
    wf1 = wf1.reshape(hq * wq, c2, n_hidden)

    # fc2: transpose + lane-pad columns to a multiple of 128.
    wf2 = jnp.transpose(tp["w_fc2"], (1, 0))                       # (nh, out)
    wf2 = jnp.pad(wf2, ((0, 0), (0, out_pad - out_dim)))
    bf2 = jnp.pad(tp["b_fc2"], ((0, out_pad - out_dim),))

    return {
        "w_conv1": w1.astype(bf16),  "b_conv1": tp["b_conv1"].reshape(1, -1),
        "w_conv2": w2.astype(bf16),  "b_conv2": tp["b_conv2"].reshape(1, -1),
        "w_fc1":   wf1.astype(bf16), "b_fc1":   tp["b_fc1"].reshape(1, -1),
        "w_fc2":   wf2.astype(bf16), "b_fc2":   bf2.reshape(1, -1),
        "out_dim": out_dim,
    }


def reference_forward(x_nchw, tp):
    """Plain-JAX/XLA reference of the PyTorch module (NCHW, PyTorch layouts)."""
    hp = jax.lax.Precision.HIGHEST

    def conv_relu_pool(x, w, b):
        y = jax.lax.conv_general_dilated(
            x, w, window_strides=(1, 1), padding=((1, 1), (1, 1)),
            dimension_numbers=("NCHW", "OIHW", "NCHW"), precision=hp)
        y = jnp.maximum(y + b[None, :, None, None], 0.0)
        return jax.lax.reduce_window(y, -jnp.inf, jax.lax.max,
                                     (1, 1, 2, 2), (1, 1, 2, 2), "VALID")

    x = conv_relu_pool(x_nchw, tp["w_conv1"], tp["b_conv1"])
    x = conv_relu_pool(x, tp["w_conv2"], tp["b_conv2"])
    x = x.reshape(x.shape[0], -1)                                  # NCHW flatten
    x = jnp.maximum(jnp.dot(x, tp["w_fc1"].T, precision=hp) + tp["b_fc1"], 0.0)
    return jnp.dot(x, tp["w_fc2"].T, precision=hp) + tp["b_fc2"]


if __name__ == "__main__":
    key = jax.random.PRNGKey(0)
    k_in, k_par = jax.random.split(key)

    batch, in_ch, H, W = 2, 4, 16, 16
    output_dim = 8

    x = jax.random.normal(k_in, (batch, in_ch, H, W), jnp.float32)   # NCHW
    torch_params = init_torch_params(k_par, in_ch, output_dim, (H, W))
    kernel_params = to_kernel_params(torch_params, (H, W))

    out = cnn_forward(x, kernel_params)
    out = jax.block_until_ready(out)
    assert out.shape == (batch, output_dim), out.shape

    # Cross-check against a plain-JAX reference of the PyTorch module.
    # (bf16 matmul operands with f32 accumulation -> slightly looser tolerance.)
    ref = reference_forward(x, torch_params)
    max_err = float(jnp.max(jnp.abs(out - ref)))
    assert max_err < 5e-2, f"kernel/reference mismatch: max |err| = {max_err}"

    print("KERNEL_OK")
</pallas_src>

<mosaic_0001>
module attributes {stable_mosaic.version = 11 : i64} {
  func.func @_cnn_fused_kernel(%arg0: i32, %arg1: memref<2x16x16x36xbf16, #tpu.memory_space<vmem>>, %arg2: memref<36x32xbf16, #tpu.memory_space<vmem>>, %arg3: memref<1x32xf32, #tpu.memory_space<vmem>>, %arg4: memref<9x32x64xbf16, #tpu.memory_space<vmem>>, %arg5: memref<1x64xf32, #tpu.memory_space<vmem>>, %arg6: memref<16x64x256xbf16, #tpu.memory_space<vmem>>, %arg7: memref<1x256xf32, #tpu.memory_space<vmem>>, %arg8: memref<256x128xbf16, #tpu.memory_space<vmem>>, %arg9: memref<1x128xf32, #tpu.memory_space<vmem>>, %arg10: memref<2x128xf32, #tpu.memory_space<vmem>>, %arg11: memref<2x10x10x32xf32, #tpu.memory_space<vmem>>) attributes {dimension_semantics = [#tpu.dimension_semantics<parallel>], iteration_bounds = array<i64: 1>, scalar_prefetch = 0 : i64, scratch_operands = 1 : i64, tpu.core_type = #tpu.core_type<tc>, window_params = [{transform_indices = @transform_0, window_bounds = array<i64: 2, 16, 16, 36>}, {pipeline_mode = #tpu.pipeline_mode<synchronous>, transform_indices = @transform_1, window_bounds = array<i64: 36, 32>}, {pipeline_mode = #tpu.pipeline_mode<synchronous>, transform_indices = @transform_2, window_bounds = array<i64: 1, 32>}, {pipeline_mode = #tpu.pipeline_mode<synchronous>, transform_indices = @transform_3, window_bounds = array<i64: 9, 32, 64>}, {pipeline_mode = #tpu.pipeline_mode<synchronous>, transform_indices = @transform_4, window_bounds = array<i64: 1, 64>}, {pipeline_mode = #tpu.pipeline_mode<synchronous>, transform_indices = @transform_5, window_bounds = array<i64: 16, 64, 256>}, {pipeline_mode = #tpu.pipeline_mode<synchronous>, transform_indices = @transform_6, window_bounds = array<i64: 1, 256>}, {pipeline_mode = #tpu.pipeline_mode<synchronous>, transform_indices = @transform_7, window_bounds = array<i64: 256, 128>}, {pipeline_mode = #tpu.pipeline_mode<synchronous>, transform_indices = @transform_8, window_bounds = array<i64: 1, 128>}, {transform_indices = @transform_9, window_bounds = array<i64: 2, 128>}]} {
    %c0_i32 = arith.constant 0 : i32
    %0 = arith.cmpi eq, %arg0, %c0_i32 : i32
    %1 = arith.extui %0 : i1 to i32
    %c0_i32_0 = arith.constant 0 : i32
    %2 = arith.cmpi ne, %1, %c0_i32_0 : i32
    scf.if %2 {
      %cst_147 = arith.constant 0.000000e+00 : f32
      %214 = vector.broadcast %cst_147 : f32 to vector<2x10x10x32xf32>
      %c0_148 = arith.constant 0 : index
      %c0_149 = arith.constant 0 : index
      %c0_150 = arith.constant 0 : index
      %c0_151 = arith.constant 0 : index
      %215 = vector.load %arg11[%c0_148, %c0_149, %c0_150, %c0_151] : memref<2x10x10x32xf32, #tpu.memory_space<vmem>>, vector<2x10x10x32xf32>
      tpu.vector_store %arg11[%c0_148, %c0_149, %c0_150, %c0_151], %214 {strides = array<i32>} : memref<2x10x10x32xf32, #tpu.memory_space<vmem>>, vector<2x10x10x32xf32>,
    } else {
    }
    %c0 = arith.constant 0 : index
    %c0_1 = arith.constant 0 : index
    %c0_2 = arith.constant 0 : index
    %c0_3 = arith.constant 0 : index
    %3 = vector.load %arg1[%c0, %c0_1, %c0_2, %c0_3] : memref<2x16x16x36xbf16, #tpu.memory_space<vmem>>, vector<2x16x16x36xbf16>
    %4 = vector.shape_cast %3 : vector<2x16x16x36xbf16> to vector<512x36xbf16>
    %c0_4 = arith.constant 0 : index
    %c0_5 = arith.constant 0 : index
    %5 = vector.load %arg2[%c0_4, %c0_5] : memref<36x32xbf16, #tpu.memory_space<vmem>>, vector<36x32xbf16>
    %cst = arith.constant dense<0.000000e+00> : vector<512x32xf32>
    %6 = tpu.matmul %4, %5, %cst {dimension_numbers = #tpu.dot_dimension_numbers<[1], [0], [0], [1], [0, 0, 1, 1], [], []>} : vector<512x36xbf16>, vector<36x32xbf16>, vector<512x32xf32> -> vector<512x32xf32>
    %c0_6 = arith.constant 0 : index
    %c0_7 = arith.constant 0 : index
    %7 = vector.load %arg3[%c0_6, %c0_7] : memref<1x32xf32, #tpu.memory_space<vmem>>, vector<1x32xf32>
    %8 = vector.broadcast %7 : vector<1x32xf32> to vector<512x32xf32>
    %9 = arith.addf %6, %8 : vector<512x32xf32>
    %cst_8 = arith.constant 0.000000e+00 : f32
    %10 = vector.broadcast %cst_8 : f32 to vector<512x32xf32>
    %11 = arith.maximumf %9, %10 : vector<512x32xf32>
    %12 = vector.shape_cast %11 : vector<512x32xf32> to vector<16x2x16x32xf32>
    %13 = vector.extract_strided_slice %12 {offsets = [0, 0, 0, 0], sizes = [16, 1, 16, 32], strides = [1, 1, 1, 1]} : vector<16x2x16x32xf32> to vector<16x1x16x32xf32>
    %14 = vector.shape_cast %13 : vector<16x1x16x32xf32> to vector<16x16x32xf32>
    %15 = vector.extract_strided_slice %12 {offsets = [0, 1, 0, 0], sizes = [16, 1, 16, 32], strides = [1, 1, 1, 1]} : vector<16x2x16x32xf32> to vector<16x1x16x32xf32>
    %16 = vector.shape_cast %15 : vector<16x1x16x32xf32> to vector<16x16x32xf32>
    %17 = arith.maximumf %14, %16 : vector<16x16x32xf32>
    %18 = vector.shape_cast %17 : vector<16x16x32xf32> to vector<16x8x2x32xf32>
    %19 = vector.extract_strided_slice %18 {offsets = [0, 0, 0, 0], sizes = [16, 8, 1, 32], strides = [1, 1, 1, 1]} : vector<16x8x2x32xf32> to vector<16x8x1x32xf32>
    %20 = vector.shape_cast %19 : vector<16x8x1x32xf32> to vector<16x8x32xf32>
    %21 = vector.extract_strided_slice %18 {offsets = [0, 0, 1, 0], sizes = [16, 8, 1, 32], strides = [1, 1, 1, 1]} : vector<16x8x2x32xf32> to vector<16x8x1x32xf32>
    %22 = vector.shape_cast %21 : vector<16x8x1x32xf32> to vector<16x8x32xf32>
    %23 = arith.maximumf %20, %22 : vector<16x8x32xf32>
    %24 = vector.shape_cast %23 : vector<16x8x32xf32> to vector<2x8x8x32xf32>
    %c0_9 = arith.constant 0 : index
    %c1 = arith.constant 1 : index
    %c1_10 = arith.constant 1 : index
    %c0_11 = arith.constant 0 : index
    %25 = vector.load %arg11[%c0_9, %c1, %c1_10, %c0_11] : memref<2x10x10x32xf32, #tpu.memory_space<vmem>>, vector<2x8x8x32xf32>
    tpu.vector_store %arg11[%c0_9, %c1, %c1_10, %c0_11], %24 {strides = array<i32>} : memref<2x10x10x32xf32, #tpu.memory_space<vmem>>, vector<2x8x8x32xf32>,
    %c0_12 = arith.constant 0 : index
    %c0_13 = arith.constant 0 : index
    %c0_14 = arith.constant 0 : index
    %c0_15 = arith.constant 0 : index
    %26 = vector.load %arg11[%c0_12, %c0_13, %c0_14, %c0_15] : memref<2x10x10x32xf32, #tpu.memory_space<vmem>>, vector<2x8x8x32xf32>
    %27 = vector.shape_cast %26 : vector<2x8x8x32xf32> to vector<128x32xf32>
    %28 = arith.truncf %27 : vector<128x32xf32> to vector<128x32xbf16>
    %c0_16 = arith.constant 0 : index
    %c0_17 = arith.constant 0 : index
    %c0_18 = arith.constant 0 : index
    %29 = vector.load %arg4[%c0_16, %c0_17, %c0_18] : memref<9x32x64xbf16, #tpu.memory_space<vmem>>, vector<1x32x64xbf16>
    %30 = vector.shape_cast %29 : vector<1x32x64xbf16> to vector<32x64xbf16>
    %cst_19 = arith.constant dense<0.000000e+00> : vector<128x64xf32>
    %31 = tpu.matmul %28, %30, %cst_19 {dimension_numbers = #tpu.dot_dimension_numbers<[1], [0], [0], [1], [0, 0, 1, 1], [], []>} : vector<128x32xbf16>, vector<32x64xbf16>, vector<128x64xf32> -> vector<128x64xf32>
    %c0_20 = arith.constant 0 : index
    %c0_21 = arith.constant 0 : index
    %c1_22 = arith.constant 1 : index
    %c0_23 = arith.constant 0 : index
    %32 = vector.load %arg11[%c0_20, %c0_21, %c1_22, %c0_23] : memref<2x10x10x32xf32, #tpu.memory_space<vmem>>, vector<2x8x8x32xf32>
    %33 = vector.shape_cast %32 : vector<2x8x8x32xf32> to vector<128x32xf32>
    %34 = arith.truncf %33 : vector<128x32xf32> to vector<128x32xbf16>
    %c1_24 = arith.constant 1 : index
    %c0_25 = arith.constant 0 : index
    %c0_26 = arith.constant 0 : index
    %35 = vector.load %arg4[%c1_24, %c0_25, %c0_26] : memref<9x32x64xbf16, #tpu.memory_space<vmem>>, vector<1x32x64xbf16>
    %36 = vector.shape_cast %35 : vector<1x32x64xbf16> to vector<32x64xbf16>
    %cst_27 = arith.constant dense<0.000000e+00> : vector<128x64xf32>
    %37 = tpu.matmul %34, %36, %cst_27 {dimension_numbers = #tpu.dot_dimension_numbers<[1], [0], [0], [1], [0, 0, 1, 1], [], []>} : vector<128x32xbf16>, vector<32x64xbf16>, vector<128x64xf32> -> vector<128x64xf32>
    %38 = arith.addf %31, %37 : vector<128x64xf32>
    %c0_28 = arith.constant 0 : index
    %c0_29 = arith.constant 0 : index
    %c2 = arith.constant 2 : index
    %c0_30 = arith.constant 0 : index
    %39 = vector.load %arg11[%c0_28, %c0_29, %c2, %c0_30] : memref<2x10x10x32xf32, #tpu.memory_space<vmem>>, vector<2x8x8x32xf32>
    %40 = vector.shape_cast %39 : vector<2x8x8x32xf32> to vector<128x32xf32>
    %41 = arith.truncf %40 : vector<128x32xf32> to vector<128x32xbf16>
    %c2_31 = arith.constant 2 : index
    %c0_32 = arith.constant 0 : index
    %c0_33 = arith.constant 0 : index
    %42 = vector.load %arg4[%c2_31, %c0_32, %c0_33] : memref<9x32x64xbf16, #tpu.memory_space<vmem>>, vector<1x32x64xbf16>
    %43 = vector.shape_cast %42 : vector<1x32x64xbf16> to vector<32x64xbf16>
    %cst_34 = arith.constant dense<0.000000e+00> : vector<128x64xf32>
    %44 = tpu.matmul %41, %43, %cst_34 {dimension_numbers = #tpu.dot_dimension_numbers<[1], [0], [0], [1], [0, 0, 1, 1], [], []>} : vector<128x32xbf16>, vector<32x64xbf16>, vector<128x64xf32> -> vector<128x64xf32>
    %45 = arith.addf %38, %44 : vector<128x64xf32>
    %c0_35 = arith.constant 0 : index
    %c1_36 = arith.constant 1 : index
    %c0_37 = arith.constant 0 : index
    %c0_38 = arith.constant 0 : index
    %46 = vector.load %arg11[%c0_35, %c1_36, %c0_37, %c0_38] : memref<2x10x10x32xf32, #tpu.memory_space<vmem>>, vector<2x8x8x32xf32>
    %47 = vector.shape_cast %46 : vector<2x8x8x32xf32> to vector<128x32xf32>
    %48 = arith.truncf %47 : vector<128x32xf32> to vector<128x32xbf16>
    %c3 = arith.constant 3 : index
    %c0_39 = arith.constant 0 : index
    %c0_40 = arith.constant 0 : index
    %49 = vector.load %arg4[%c3, %c0_39, %c0_40] : memref<9x32x64xbf16, #tpu.memory_space<vmem>>, vector<1x32x64xbf16>
    %50 = vector.shape_cast %49 : vector<1x32x64xbf16> to vector<32x64xbf16>
    %cst_41 = arith.constant dense<0.000000e+00> : vector<128x64xf32>
    %51 = tpu.matmul %48, %50, %cst_41 {dimension_numbers = #tpu.dot_dimension_numbers<[1], [0], [0], [1], [0, 0, 1, 1], [], []>} : vector<128x32xbf16>, vector<32x64xbf16>, vector<128x64xf32> -> vector<128x64xf32>
    %52 = arith.addf %45, %51 : vector<128x64xf32>
    %c0_42 = arith.constant 0 : index
    %c1_43 = arith.constant 1 : index
    %c1_44 = arith.constant 1 : index
    %c0_45 = arith.constant 0 : index
    %53 = vector.load %arg11[%c0_42, %c1_43, %c1_44, %c0_45] : memref<2x10x10x32xf32, #tpu.memory_space<vmem>>, vector<2x8x8x32xf32>
    %54 = vector.shape_cast %53 : vector<2x8x8x32xf32> to vector<128x32xf32>
    %55 = arith.truncf %54 : vector<128x32xf32> to vector<128x32xbf16>
    %c4 = arith.constant 4 : index
    %c0_46 = arith.constant 0 : index
    %c0_47 = arith.constant 0 : index
    %56 = vector.load %arg4[%c4, %c0_46, %c0_47] : memref<9x32x64xbf16, #tpu.memory_space<vmem>>, vector<1x32x64xbf16>
    %57 = vector.shape_cast %56 : vector<1x32x64xbf16> to vector<32x64xbf16>
    %cst_48 = arith.constant dense<0.000000e+00> : vector<128x64xf32>
    %58 = tpu.matmul %55, %57, %cst_48 {dimension_numbers = #tpu.dot_dimension_numbers<[1], [0], [0], [1], [0, 0, 1, 1], [], []>} : vector<128x32xbf16>, vector<32x64xbf16>, vector<128x64xf32> -> vector<128x64xf32>
    %59 = arith.addf %52, %58 : vector<128x64xf32>
    %c0_49 = arith.constant 0 : index
    %c1_50 = arith.constant 1 : index
    %c2_51 = arith.constant 2 : index
    %c0_52 = arith.constant 0 : index
    %60 = vector.load %arg11[%c0_49, %c1_50, %c2_51, %c0_52] : memref<2x10x10x32xf32, #tpu.memory_space<vmem>>, vector<2x8x8x32xf32>
    %61 = vector.shape_cast %60 : vector<2x8x8x32xf32> to vector<128x32xf32>
    %62 = arith.truncf %61 : vector<128x32xf32> to vector<128x32xbf16>
    %c5 = arith.constant 5 : index
    %c0_53 = arith.constant 0 : index
    %c0_54 = arith.constant 0 : index
    %63 = vector.load %arg4[%c5, %c0_53, %c0_54] : memref<9x32x64xbf16, #tpu.memory_space<vmem>>, vector<1x32x64xbf16>
    %64 = vector.shape_cast %63 : vector<1x32x64xbf16> to vector<32x64xbf16>
    %cst_55 = arith.constant dense<0.000000e+00> : vector<128x64xf32>
    %65 = tpu.matmul %62, %64, %cst_55 {dimension_numbers = #tpu.dot_dimension_numbers<[1], [0], [0], [1], [0, 0, 1, 1], [], []>} : vector<128x32xbf16>, vector<32x64xbf16>, vector<128x64xf32> -> vector<128x64xf32>
    %66 = arith.addf %59, %65 : vector<128x64xf32>
    %c0_56 = arith.constant 0 : index
    %c2_57 = arith.constant 2 : index
    %c0_58 = arith.constant 0 : index
    %c0_59 = arith.constant 0 : index
    %67 = vector.load %arg11[%c0_56, %c2_57, %c0_58, %c0_59] : memref<2x10x10x32xf32, #tpu.memory_space<vmem>>, vector<2x8x8x32xf32>
    %68 = vector.shape_cast %67 : vector<2x8x8x32xf32> to vector<128x32xf32>
    %69 = arith.truncf %68 : vector<128x32xf32> to vector<128x32xbf16>
    %c6 = arith.constant 6 : index
    %c0_60 = arith.constant 0 : index
    %c0_61 = arith.constant 0 : index
    %70 = vector.load %arg4[%c6, %c0_60, %c0_61] : memref<9x32x64xbf16, #tpu.memory_space<vmem>>, vector<1x32x64xbf16>
    %71 = vector.shape_cast %70 : vector<1x32x64xbf16> to vector<32x64xbf16>
    %cst_62 = arith.constant dense<0.000000e+00> : vector<128x64xf32>
    %72 = tpu.matmul %69, %71, %cst_62 {dimension_numbers = #tpu.dot_dimension_numbers<[1], [0], [0], [1], [0, 0, 1, 1], [], []>} : vector<128x32xbf16>, vector<32x64xbf16>, vector<128x64xf32> -> vector<128x64xf32>
    %73 = arith.addf %66, %72 : vector<128x64xf32>
    %c0_63 = arith.constant 0 : index
    %c2_64 = arith.constant 2 : index
    %c1_65 = arith.constant 1 : index
    %c0_66 = arith.constant 0 : index
    %74 = vector.load %arg11[%c0_63, %c2_64, %c1_65, %c0_66] : memref<2x10x10x32xf32, #tpu.memory_space<vmem>>, vector<2x8x8x32xf32>
    %75 = vector.shape_cast %74 : vector<2x8x8x32xf32> to vector<128x32xf32>
    %76 = arith.truncf %75 : vector<128x32xf32> to vector<128x32xbf16>
    %c7 = arith.constant 7 : index
    %c0_67 = arith.constant 0 : index
    %c0_68 = arith.constant 0 : index
    %77 = vector.load %arg4[%c7, %c0_67, %c0_68] : memref<9x32x64xbf16, #tpu.memory_space<vmem>>, vector<1x32x64xbf16>
    %78 = vector.shape_cast %77 : vector<1x32x64xbf16> to vector<32x64xbf16>
    %cst_69 = arith.constant dense<0.000000e+00> : vector<128x64xf32>
    %79 = tpu.matmul %76, %78, %cst_69 {dimension_numbers = #tpu.dot_dimension_numbers<[1], [0], [0], [1], [0, 0, 1, 1], [], []>} : vector<128x32xbf16>, vector<32x64xbf16>, vector<128x64xf32> -> vector<128x64xf32>
    %80 = arith.addf %73, %79 : vector<128x64xf32>
    %c0_70 = arith.constant 0 : index
    %c2_71 = arith.constant 2 : index
    %c2_72 = arith.constant 2 : index
    %c0_73 = arith.constant 0 : index
    %81 = vector.load %arg11[%c0_70, %c2_71, %c2_72, %c0_73] : memref<2x10x10x32xf32, #tpu.memory_space<vmem>>, vector<2x8x8x32xf32>
    %82 = vector.shape_cast %81 : vector<2x8x8x32xf32> to vector<128x32xf32>
    %83 = arith.truncf %82 : vector<128x32xf32> to vector<128x32xbf16>
    %c8 = arith.constant 8 : index
    %c0_74 = arith.constant 0 : index
    %c0_75 = arith.constant 0 : index
    %84 = vector.load %arg4[%c8, %c0_74, %c0_75] : memref<9x32x64xbf16, #tpu.memory_space<vmem>>, vector<1x32x64xbf16>
    %85 = vector.shape_cast %84 : vector<1x32x64xbf16> to vector<32x64xbf16>
    %cst_76 = arith.constant dense<0.000000e+00> : vector<128x64xf32>
    %86 = tpu.matmul %83, %85, %cst_76 {dimension_numbers = #tpu.dot_dimension_numbers<[1], [0], [0], [1], [0, 0, 1, 1], [], []>} : vector<128x32xbf16>, vector<32x64xbf16>, vector<128x64xf32> -> vector<128x64xf32>
    %87 = arith.addf %80, %86 : vector<128x64xf32>
    %c0_77 = arith.constant 0 : index
    %c0_78 = arith.constant 0 : index
    %88 = vector.load %arg5[%c0_77, %c0_78] : memref<1x64xf32, #tpu.memory_space<vmem>>, vector<1x64xf32>
    %89 = vector.broadcast %88 : vector<1x64xf32> to vector<128x64xf32>
    %90 = arith.addf %87, %89 : vector<128x64xf32>
    %cst_79 = arith.constant 0.000000e+00 : f32
    %91 = vector.broadcast %cst_79 : f32 to vector<128x64xf32>
    %92 = arith.maximumf %90, %91 : vector<128x64xf32>
    %93 = vector.shape_cast %92 : vector<128x64xf32> to vector<8x2x8x64xf32>
    %94 = vector.extract_strided_slice %93 {offsets = [0, 0, 0, 0], sizes = [8, 1, 8, 64], strides = [1, 1, 1, 1]} : vector<8x2x8x64xf32> to vector<8x1x8x64xf32>
    %95 = vector.shape_cast %94 : vector<8x1x8x64xf32> to vector<8x8x64xf32>
    %96 = vector.extract_strided_slice %93 {offsets = [0, 1, 0, 0], sizes = [8, 1, 8, 64], strides = [1, 1, 1, 1]} : vector<8x2x8x64xf32> to vector<8x1x8x64xf32>
    %97 = vector.shape_cast %96 : vector<8x1x8x64xf32> to vector<8x8x64xf32>
    %98 = arith.maximumf %95, %97 : vector<8x8x64xf32>
    %99 = vector.shape_cast %98 : vector<8x8x64xf32> to vector<8x4x2x64xf32>
    %100 = vector.extract_strided_slice %99 {offsets = [0, 0, 0, 0], sizes = [8, 4, 1, 64], strides = [1, 1, 1, 1]} : vector<8x4x2x64xf32> to vector<8x4x1x64xf32>
    %101 = vector.shape_cast %100 : vector<8x4x1x64xf32> to vector<8x4x64xf32>
    %102 = vector.extract_strided_slice %99 {offsets = [0, 0, 1, 0], sizes = [8, 4, 1, 64], strides = [1, 1, 1, 1]} : vector<8x4x2x64xf32> to vector<8x4x1x64xf32>
    %103 = vector.shape_cast %102 : vector<8x4x1x64xf32> to vector<8x4x64xf32>
    %104 = arith.maximumf %101, %103 : vector<8x4x64xf32>
    %105 = vector.shape_cast %104 : vector<8x4x64xf32> to vector<2x4x4x64xf32>
    %106 = arith.truncf %105 : vector<2x4x4x64xf32> to vector<2x4x4x64xbf16>
    %107 = vector.extract_strided_slice %106 {offsets = [0, 0, 0, 0], sizes = [2, 1, 1, 64], strides = [1, 1, 1, 1]} : vector<2x4x4x64xbf16> to vector<2x1x1x64xbf16>
    %108 = vector.shape_cast %107 : vector<2x1x1x64xbf16> to vector<2x64xbf16>
    %c0_80 = arith.constant 0 : index
    %c0_81 = arith.constant 0 : index
    %c0_82 = arith.constant 0 : index
    %109 = vector.load %arg6[%c0_80, %c0_81, %c0_82] : memref<16x64x256xbf16, #tpu.memory_space<vmem>>, vector<1x64x256xbf16>
    %110 = vector.shape_cast %109 : vector<1x64x256xbf16> to vector<64x256xbf16>
    %cst_83 = arith.constant dense<0.000000e+00> : vector<2x256xf32>
    %111 = tpu.matmul %108, %110, %cst_83 {dimension_numbers = #tpu.dot_dimension_numbers<[1], [0], [0], [1], [0, 0, 1, 1], [], []>} : vector<2x64xbf16>, vector<64x256xbf16>, vector<2x256xf32> -> vector<2x256xf32>
    %112 = vector.extract_strided_slice %106 {offsets = [0, 0, 1, 0], sizes = [2, 1, 1, 64], strides = [1, 1, 1, 1]} : vector<2x4x4x64xbf16> to vector<2x1x1x64xbf16>
    %113 = vector.shape_cast %112 : vector<2x1x1x64xbf16> to vector<2x64xbf16>
    %c1_84 = arith.constant 1 : index
    %c0_85 = arith.constant 0 : index
    %c0_86 = arith.constant 0 : index
    %114 = vector.load %arg6[%c1_84, %c0_85, %c0_86] : memref<16x64x256xbf16, #tpu.memory_space<vmem>>, vector<1x64x256xbf16>
    %115 = vector.shape_cast %114 : vector<1x64x256xbf16> to vector<64x256xbf16>
    %cst_87 = arith.constant dense<0.000000e+00> : vector<2x256xf32>
    %116 = tpu.matmul %113, %115, %cst_87 {dimension_numbers = #tpu.dot_dimension_numbers<[1], [0], [0], [1], [0, 0, 1, 1], [], []>} : vector<2x64xbf16>, vector<64x256xbf16>, vector<2x256xf32> -> vector<2x256xf32>
    %117 = arith.addf %111, %116 : vector<2x256xf32>
    %118 = vector.extract_strided_slice %106 {offsets = [0, 0, 2, 0], sizes = [2, 1, 1, 64], strides = [1, 1, 1, 1]} : vector<2x4x4x64xbf16> to vector<2x1x1x64xbf16>
    %119 = vector.shape_cast %118 : vector<2x1x1x64xbf16> to vector<2x64xbf16>
    %c2_88 = arith.constant 2 : index
    %c0_89 = arith.constant 0 : index
    %c0_90 = arith.constant 0 : index
    %120 = vector.load %arg6[%c2_88, %c0_89, %c0_90] : memref<16x64x256xbf16, #tpu.memory_space<vmem>>, vector<1x64x256xbf16>
    %121 = vector.shape_cast %120 : vector<1x64x256xbf16> to vector<64x256xbf16>
    %cst_91 = arith.constant dense<0.000000e+00> : vector<2x256xf32>
    %122 = tpu.matmul %119, %121, %cst_91 {dimension_numbers = #tpu.dot_dimension_numbers<[1], [0], [0], [1], [0, 0, 1, 1], [], []>} : vector<2x64xbf16>, vector<64x256xbf16>, vector<2x256xf32> -> vector<2x256xf32>
    %123 = arith.addf %117, %122 : vector<2x256xf32>
    %124 = vector.extract_strided_slice %106 {offsets = [0, 0, 3, 0], sizes = [2, 1, 1, 64], strides = [1, 1, 1, 1]} : vector<2x4x4x64xbf16> to vector<2x1x1x64xbf16>
    %125 = vector.shape_cast %124 : vector<2x1x1x64xbf16> to vector<2x64xbf16>
    %c3_92 = arith.constant 3 : index
    %c0_93 = arith.constant 0 : index
    %c0_94 = arith.constant 0 : index
    %126 = vector.load %arg6[%c3_92, %c0_93, %c0_94] : memref<16x64x256xbf16, #tpu.memory_space<vmem>>, vector<1x64x256xbf16>
    %127 = vector.shape_cast %126 : vector<1x64x256xbf16> to vector<64x256xbf16>
    %cst_95 = arith.constant dense<0.000000e+00> : vector<2x256xf32>
    %128 = tpu.matmul %125, %127, %cst_95 {dimension_numbers = #tpu.dot_dimension_numbers<[1], [0], [0], [1], [0, 0, 1, 1], [], []>} : vector<2x64xbf16>, vector<64x256xbf16>, vector<2x256xf32> -> vector<2x256xf32>
    %129 = arith.addf %123, %128 : vector<2x256xf32>
    %130 = vector.extract_strided_slice %106 {offsets = [0, 1, 0, 0], sizes = [2, 1, 1, 64], strides = [1, 1, 1, 1]} : vector<2x4x4x64xbf16> to vector<2x1x1x64xbf16>
    %131 = vector.shape_cast %130 : vector<2x1x1x64xbf16> to vector<2x64xbf16>
    %c4_96 = arith.constant 4 : index
    %c0_97 = arith.constant 0 : index
    %c0_98 = arith.constant 0 : index
    %132 = vector.load %arg6[%c4_96, %c0_97, %c0_98] : memref<16x64x256xbf16, #tpu.memory_space<vmem>>, vector<1x64x256xbf16>
    %133 = vector.shape_cast %132 : vector<1x64x256xbf16> to vector<64x256xbf16>
    %cst_99 = arith.constant dense<0.000000e+00> : vector<2x256xf32>
    %134 = tpu.matmul %131, %133, %cst_99 {dimension_numbers = #tpu.dot_dimension_numbers<[1], [0], [0], [1], [0, 0, 1, 1], [], []>} : vector<2x64xbf16>, vector<64x256xbf16>, vector<2x256xf32> -> vector<2x256xf32>
    %135 = arith.addf %129, %134 : vector<2x256xf32>
    %136 = vector.extract_strided_slice %106 {offsets = [0, 1, 1, 0], sizes = [2, 1, 1, 64], strides = [1, 1, 1, 1]} : vector<2x4x4x64xbf16> to vector<2x1x1x64xbf16>
    %137 = vector.shape_cast %136 : vector<2x1x1x64xbf16> to vector<2x64xbf16>
    %c5_100 = arith.constant 5 : index
    %c0_101 = arith.constant 0 : index
    %c0_102 = arith.constant 0 : index
    %138 = vector.load %arg6[%c5_100, %c0_101, %c0_102] : memref<16x64x256xbf16, #tpu.memory_space<vmem>>, vector<1x64x256xbf16>
    %139 = vector.shape_cast %138 : vector<1x64x256xbf16> to vector<64x256xbf16>
    %cst_103 = arith.constant dense<0.000000e+00> : vector<2x256xf32>
    %140 = tpu.matmul %137, %139, %cst_103 {dimension_numbers = #tpu.dot_dimension_numbers<[1], [0], [0], [1], [0, 0, 1, 1], [], []>} : vector<2x64xbf16>, vector<64x256xbf16>, vector<2x256xf32> -> vector<2x256xf32>
    %141 = arith.addf %135, %140 : vector<2x256xf32>
    %142 = vector.extract_strided_slice %106 {offsets = [0, 1, 2, 0], sizes = [2, 1, 1, 64], strides = [1, 1, 1, 1]} : vector<2x4x4x64xbf16> to vector<2x1x1x64xbf16>
    %143 = vector.shape_cast %142 : vector<2x1x1x64xbf16> to vector<2x64xbf16>
    %c6_104 = arith.constant 6 : index
    %c0_105 = arith.constant 0 : index
    %c0_106 = arith.constant 0 : index
    %144 = vector.load %arg6[%c6_104, %c0_105, %c0_106] : memref<16x64x256xbf16, #tpu.memory_space<vmem>>, vector<1x64x256xbf16>
    %145 = vector.shape_cast %144 : vector<1x64x256xbf16> to vector<64x256xbf16>
    %cst_107 = arith.constant dense<0.000000e+00> : vector<2x256xf32>
    %146 = tpu.matmul %143, %145, %cst_107 {dimension_numbers = #tpu.dot_dimension_numbers<[1], [0], [0], [1], [0, 0, 1, 1], [], []>} : vector<2x64xbf16>, vector<64x256xbf16>, vector<2x256xf32> -> vector<2x256xf32>
    %147 = arith.addf %141, %146 : vector<2x256xf32>
    %148 = vector.extract_strided_slice %106 {offsets = [0, 1, 3, 0], sizes = [2, 1, 1, 64], strides = [1, 1, 1, 1]} : vector<2x4x4x64xbf16> to vector<2x1x1x64xbf16>
    %149 = vector.shape_cast %148 : vector<2x1x1x64xbf16> to vector<2x64xbf16>
    %c7_108 = arith.constant 7 : index
    %c0_109 = arith.constant 0 : index
    %c0_110 = arith.constant 0 : index
    %150 = vector.load %arg6[%c7_108, %c0_109, %c0_110] : memref<16x64x256xbf16, #tpu.memory_space<vmem>>, vector<1x64x256xbf16>
    %151 = vector.shape_cast %150 : vector<1x64x256xbf16> to vector<64x256xbf16>
    %cst_111 = arith.constant dense<0.000000e+00> : vector<2x256xf32>
    %152 = tpu.matmul %149, %151, %cst_111 {dimension_numbers = #tpu.dot_dimension_numbers<[1], [0], [0], [1], [0, 0, 1, 1], [], []>} : vector<2x64xbf16>, vector<64x256xbf16>, vector<2x256xf32> -> vector<2x256xf32>
    %153 = arith.addf %147, %152 : vector<2x256xf32>
    %154 = vector.extract_strided_slice %106 {offsets = [0, 2, 0, 0], sizes = [2, 1, 1, 64], strides = [1, 1, 1, 1]} : vector<2x4x4x64xbf16> to vector<2x1x1x64xbf16>
    %155 = vector.shape_cast %154 : vector<2x1x1x64xbf16> to vector<2x64xbf16>
    %c8_112 = arith.constant 8 : index
    %c0_113 = arith.constant 0 : index
    %c0_114 = arith.constant 0 : index
    %156 = vector.load %arg6[%c8_112, %c0_113, %c0_114] : memref<16x64x256xbf16, #tpu.memory_space<vmem>>, vector<1x64x256xbf16>
    %157 = vector.shape_cast %156 : vector<1x64x256xbf16> to vector<64x256xbf16>
    %cst_115 = arith.constant dense<0.000000e+00> : vector<2x256xf32>
    %158 = tpu.matmul %155, %157, %cst_115 {dimension_numbers = #tpu.dot_dimension_numbers<[1], [0], [0], [1], [0, 0, 1, 1], [], []>} : vector<2x64xbf16>, vector<64x256xbf16>, vector<2x256xf32> -> vector<2x256xf32>
    %159 = arith.addf %153, %158 : vector<2x256xf32>
    %160 = vector.extract_strided_slice %106 {offsets = [0, 2, 1, 0], sizes = [2, 1, 1, 64], strides = [1, 1, 1, 1]} : vector<2x4x4x64xbf16> to vector<2x1x1x64xbf16>
    %161 = vector.shape_cast %160 : vector<2x1x1x64xbf16> to vector<2x64xbf16>
    %c9 = arith.constant 9 : index
    %c0_116 = arith.constant 0 : index
    %c0_117 = arith.constant 0 : index
    %162 = vector.load %arg6[%c9, %c0_116, %c0_117] : memref<16x64x256xbf16, #tpu.memory_space<vmem>>, vector<1x64x256xbf16>
    %163 = vector.shape_cast %162 : vector<1x64x256xbf16> to vector<64x256xbf16>
    %cst_118 = arith.constant dense<0.000000e+00> : vector<2x256xf32>
    %164 = tpu.matmul %161, %163, %cst_118 {dimension_numbers = #tpu.dot_dimension_numbers<[1], [0], [0], [1], [0, 0, 1, 1], [], []>} : vector<2x64xbf16>, vector<64x256xbf16>, vector<2x256xf32> -> vector<2x256xf32>
    %165 = arith.addf %159, %164 : vector<2x256xf32>
    %166 = vector.extract_strided_slice %106 {offsets = [0, 2, 2, 0], sizes = [2, 1, 1, 64], strides = [1, 1, 1, 1]} : vector<2x4x4x64xbf16> to vector<2x1x1x64xbf16>
    %167 = vector.shape_cast %166 : vector<2x1x1x64xbf16> to vector<2x64xbf16>
    %c10 = arith.constant 10 : index
    %c0_119 = arith.constant 0 : index
    %c0_120 = arith.constant 0 : index
    %168 = vector.load %arg6[%c10, %c0_119, %c0_120] : memref<16x64x256xbf16, #tpu.memory_space<vmem>>, vector<1x64x256xbf16>
    %169 = vector.shape_cast %168 : vector<1x64x256xbf16> to vector<64x256xbf16>
    %cst_121 = arith.constant dense<0.000000e+00> : vector<2x256xf32>
    %170 = tpu.matmul %167, %169, %cst_121 {dimension_numbers = #tpu.dot_dimension_numbers<[1], [0], [0], [1], [0, 0, 1, 1], [], []>} : vector<2x64xbf16>, vector<64x256xbf16>, vector<2x256xf32> -> vector<2x256xf32>
    %171 = arith.addf %165, %170 : vector<2x256xf32>
    %172 = vector.extract_strided_slice %106 {offsets = [0, 2, 3, 0], sizes = [2, 1, 1, 64], strides = [1, 1, 1, 1]} : vector<2x4x4x64xbf16> to vector<2x1x1x64xbf16>
    %173 = vector.shape_cast %172 : vector<2x1x1x64xbf16> to vector<2x64xbf16>
    %c11 = arith.constant 11 : index
    %c0_122 = arith.constant 0 : index
    %c0_123 = arith.constant 0 : index
    %174 = vector.load %arg6[%c11, %c0_122, %c0_123] : memref<16x64x256xbf16, #tpu.memory_space<vmem>>, vector<1x64x256xbf16>
    %175 = vector.shape_cast %174 : vector<1x64x256xbf16> to vector<64x256xbf16>
    %cst_124 = arith.constant dense<0.000000e+00> : vector<2x256xf32>
    %176 = tpu.matmul %173, %175, %cst_124 {dimension_numbers = #tpu.dot_dimension_numbers<[1], [0], [0], [1], [0, 0, 1, 1], [], []>} : vector<2x64xbf16>, vector<64x256xbf16>, vector<2x256xf32> -> vector<2x256xf32>
    %177 = arith.addf %171, %176 : vector<2x256xf32>
    %178 = vector.extract_strided_slice %106 {offsets = [0, 3, 0, 0], sizes = [2, 1, 1, 64], strides = [1, 1, 1, 1]} : vector<2x4x4x64xbf16> to vector<2x1x1x64xbf16>
    %179 = vector.shape_cast %178 : vector<2x1x1x64xbf16> to vector<2x64xbf16>
    %c12 = arith.constant 12 : index
    %c0_125 = arith.constant 0 : index
    %c0_126 = arith.constant 0 : index
    %180 = vector.load %arg6[%c12, %c0_125, %c0_126] : memref<16x64x256xbf16, #tpu.memory_space<vmem>>, vector<1x64x256xbf16>
    %181 = vector.shape_cast %180 : vector<1x64x256xbf16> to vector<64x256xbf16>
    %cst_127 = arith.constant dense<0.000000e+00> : vector<2x256xf32>
    %182 = tpu.matmul %179, %181, %cst_127 {dimension_numbers = #tpu.dot_dimension_numbers<[1], [0], [0], [1], [0, 0, 1, 1], [], []>} : vector<2x64xbf16>, vector<64x256xbf16>, vector<2x256xf32> -> vector<2x256xf32>
    %183 = arith.addf %177, %182 : vector<2x256xf32>
    %184 = vector.extract_strided_slice %106 {offsets = [0, 3, 1, 0], sizes = [2, 1, 1, 64], strides = [1, 1, 1, 1]} : vector<2x4x4x64xbf16> to vector<2x1x1x64xbf16>
    %185 = vector.shape_cast %184 : vector<2x1x1x64xbf16> to vector<2x64xbf16>
    %c13 = arith.constant 13 : index
    %c0_128 = arith.constant 0 : index
    %c0_129 = arith.constant 0 : index
    %186 = vector.load %arg6[%c13, %c0_128, %c0_129] : memref<16x64x256xbf16, #tpu.memory_space<vmem>>, vector<1x64x256xbf16>
    %187 = vector.shape_cast %186 : vector<1x64x256xbf16> to vector<64x256xbf16>
    %cst_130 = arith.constant dense<0.000000e+00> : vector<2x256xf32>
    %188 = tpu.matmul %185, %187, %cst_130 {dimension_numbers = #tpu.dot_dimension_numbers<[1], [0], [0], [1], [0, 0, 1, 1], [], []>} : vector<2x64xbf16>, vector<64x256xbf16>, vector<2x256xf32> -> vector<2x256xf32>
    %189 = arith.addf %183, %188 : vector<2x256xf32>
    %190 = vector.extract_strided_slice %106 {offsets = [0, 3, 2, 0], sizes = [2, 1, 1, 64], strides = [1, 1, 1, 1]} : vector<2x4x4x64xbf16> to vector<2x1x1x64xbf16>
    %191 = vector.shape_cast %190 : vector<2x1x1x64xbf16> to vector<2x64xbf16>
    %c14 = arith.constant 14 : index
    %c0_131 = arith.constant 0 : index
    %c0_132 = arith.constant 0 : index
    %192 = vector.load %arg6[%c14, %c0_131, %c0_132] : memref<16x64x256xbf16, #tpu.memory_space<vmem>>, vector<1x64x256xbf16>
    %193 = vector.shape_cast %192 : vector<1x64x256xbf16> to vector<64x256xbf16>
    %cst_133 = arith.constant dense<0.000000e+00> : vector<2x256xf32>
    %194 = tpu.matmul %191, %193, %cst_133 {dimension_numbers = #tpu.dot_dimension_numbers<[1], [0], [0], [1], [0, 0, 1, 1], [], []>} : vector<2x64xbf16>, vector<64x256xbf16>, vector<2x256xf32> -> vector<2x256xf32>
    %195 = arith.addf %189, %194 : vector<2x256xf32>
    %196 = vector.extract_strided_slice %106 {offsets = [0, 3, 3, 0], sizes = [2, 1, 1, 64], strides = [1, 1, 1, 1]} : vector<2x4x4x64xbf16> to vector<2x1x1x64xbf16>
    %197 = vector.shape_cast %196 : vector<2x1x1x64xbf16> to vector<2x64xbf16>
    %c15 = arith.constant 15 : index
    %c0_134 = arith.constant 0 : index
    %c0_135 = arith.constant 0 : index
    %198 = vector.load %arg6[%c15, %c0_134, %c0_135] : memref<16x64x256xbf16, #tpu.memory_space<vmem>>, vector<1x64x256xbf16>
    %199 = vector.shape_cast %198 : vector<1x64x256xbf16> to vector<64x256xbf16>
    %cst_136 = arith.constant dense<0.000000e+00> : vector<2x256xf32>
    %200 = tpu.matmul %197, %199, %cst_136 {dimension_numbers = #tpu.dot_dimension_numbers<[1], [0], [0], [1], [0, 0, 1, 1], [], []>} : vector<2x64xbf16>, vector<64x256xbf16>, vector<2x256xf32> -> vector<2x256xf32>
    %201 = arith.addf %195, %200 : vector<2x256xf32>
    %c0_137 = arith.constant 0 : index
    %c0_138 = arith.constant 0 : index
    %202 = vector.load %arg7[%c0_137, %c0_138] : memref<1x256xf32, #tpu.memory_space<vmem>>, vector<1x256xf32>
    %203 = vector.broadcast %202 : vector<1x256xf32> to vector<2x256xf32>
    %204 = arith.addf %201, %203 : vector<2x256xf32>
    %cst_139 = arith.constant 0.000000e+00 : f32
    %205 = vector.broadcast %cst_139 : f32 to vector<2x256xf32>
    %206 = arith.maximumf %204, %205 : vector<2x256xf32>
    %207 = arith.truncf %206 : vector<2x256xf32> to vector<2x256xbf16>
    %c0_140 = arith.constant 0 : index
    %c0_141 = arith.constant 0 : index
    %208 = vector.load %arg8[%c0_140, %c0_141] : memref<256x128xbf16, #tpu.memory_space<vmem>>, vector<256x128xbf16>
    %cst_142 = arith.constant dense<0.000000e+00> : vector<2x128xf32>
    %209 = tpu.matmul %207, %208, %cst_142 {dimension_numbers = #tpu.dot_dimension_numbers<[1], [0], [0], [1], [0, 0, 1, 1], [], []>} : vector<2x256xbf16>, vector<256x128xbf16>, vector<2x128xf32> -> vector<2x128xf32>
    %c0_143 = arith.constant 0 : index
    %c0_144 = arith.constant 0 : index
    %210 = vector.load %arg9[%c0_143, %c0_144] : memref<1x128xf32, #tpu.memory_space<vmem>>, vector<1x128xf32>
    %211 = vector.broadcast %210 : vector<1x128xf32> to vector<2x128xf32>
    %212 = arith.addf %209, %211 : vector<2x128xf32>
    %c0_145 = arith.constant 0 : index
    %c0_146 = arith.constant 0 : index
    %213 = vector.load %arg10[%c0_145, %c0_146] : memref<2x128xf32, #tpu.memory_space<vmem>>, vector<2x128xf32>
    tpu.vector_store %arg10[%c0_145, %c0_146], %212 {strides = array<i32>} : memref<2x128xf32, #tpu.memory_space<vmem>>, vector<2x128xf32>,
    return
  }
  func.func @transform_0(%arg0: i32) -> (i32, i32, i32, i32) {
    %c0_i32 = arith.constant 0 : i32
    %c0_i32_0 = arith.constant 0 : i32
    %c0_i32_1 = arith.constant 0 : i32
    %c0_i32_2 = arith.constant 0 : i32
    return %arg0, %c0_i32, %c0_i32_0, %c0_i32_1 : i32, i32, i32, i32
  }
  func.func @transform_1(%arg0: i32) -> (i32, i32) {
    %c0_i32 = arith.constant 0 : i32
    %c0_i32_0 = arith.constant 0 : i32
    %c0_i32_1 = arith.constant 0 : i32
    return %c0_i32, %c0_i32_0 : i32, i32
  }
  func.func @transform_2(%arg0: i32) -> (i32, i32) {
    %c0_i32 = arith.constant 0 : i32
    %c0_i32_0 = arith.constant 0 : i32
    %c0_i32_1 = arith.constant 0 : i32
    return %c0_i32, %c0_i32_0 : i32, i32
  }
  func.func @transform_3(%arg0: i32) -> (i32, i32, i32) {
    %c0_i32 = arith.constant 0 : i32
    %c0_i32_0 = arith.constant 0 : i32
    %c0_i32_1 = arith.constant 0 : i32
    %c0_i32_2 = arith.constant 0 : i32
    return %c0_i32, %c0_i32_0, %c0_i32_1 : i32, i32, i32
  }
  func.func @transform_4(%arg0: i32) -> (i32, i32) {
    %c0_i32 = arith.constant 0 : i32
    %c0_i32_0 = arith.constant 0 : i32
    %c0_i32_1 = arith.constant 0 : i32
    return %c0_i32, %c0_i32_0 : i32, i32
  }
  func.func @transform_5(%arg0: i32) -> (i32, i32, i32) {
    %c0_i32 = arith.constant 0 : i32
    %c0_i32_0 = arith.constant 0 : i32
    %c0_i32_1 = arith.constant 0 : i32
    %c0_i32_2 = arith.constant 0 : i32
    return %c0_i32, %c0_i32_0, %c0_i32_1 : i32, i32, i32
  }
  func.func @transform_6(%arg0: i32) -> (i32, i32) {
    %c0_i32 = arith.constant 0 : i32
    %c0_i32_0 = arith.constant 0 : i32
    %c0_i32_1 = arith.constant 0 : i32
    return %c0_i32, %c0_i32_0 : i32, i32
  }
  func.func @transform_7(%arg0: i32) -> (i32, i32) {
    %c0_i32 = arith.constant 0 : i32
    %c0_i32_0 = arith.constant 0 : i32
    %c0_i32_1 = arith.constant 0 : i32
    return %c0_i32, %c0_i32_0 : i32, i32
  }
  func.func @transform_8(%arg0: i32) -> (i32, i32) {
    %c0_i32 = arith.constant 0 : i32
    %c0_i32_0 = arith.constant 0 : i32
    %c0_i32_1 = arith.constant 0 : i32
    return %c0_i32, %c0_i32_0 : i32, i32
  }
  func.func @transform_9(%arg0: i32) -> (i32, i32) {
    %c0_i32 = arith.constant 0 : i32
    %c0_i32_0 = arith.constant 0 : i32
    return %arg0, %c0_i32 : i32, i32
  }
}

</mosaic_0001>

<llo_original>
// kernel: tpu_custom_call.1
$region0: #{tpu_custom_call.1}
  #allocation0 [shape = 'u32[]', space=smem, size = 0x4, offset = 0x4, fixed_abs, tag = 'smem constant byte address 0x4 - core index']
  #allocation1 [shape = 'u32[144,128]{1,0:T(1,128)}', space=vmem, size = 0x12000, scoped, tag = 'internal scratch']
  #allocation2 [shape = 'f32[2,10,10,32]{3,2,1,0:T(8,128)}', space=vmem, size = 0x28000, scoped, tag = 'scratch operand']
  %s0 = inlined_call_operand.hbm [shape: bf16[2,16,16,36], index: 0, kind: input, shape index: {}]
  %s1 = inlined_call_operand.vmem [shape: bf16[36,32], index: 1, kind: input, shape index: {}]
  %s2 = inlined_call_operand.vmem [shape: f32[1,32], index: 2, kind: input, shape index: {}]
  %s3 = inlined_call_operand.hbm [shape: bf16[9,32,64], index: 3, kind: input, shape index: {}]
  %s4 = inlined_call_operand.vmem [shape: f32[1,64], index: 4, kind: input, shape index: {}]
  %s5 = inlined_call_operand.hbm [shape: bf16[16,64,256], index: 5, kind: input, shape index: {}]
  %s6 = inlined_call_operand.vmem [shape: f32[1,256], index: 6, kind: input, shape index: {}]
  %s7 = inlined_call_operand.hbm [shape: bf16[256,128], index: 7, kind: input, shape index: {}]
  %s8 = inlined_call_operand.vmem [shape: f32[1,128], index: 8, kind: input, shape index: {}]
  %s9 = inlined_call_operand.hbm [shape: f32[2,128], index: 9, kind: output, shape index: {}]
  %s10 = sld [smem:[#allocation0]]
  $region66: #{tpu_custom_call.1} parent=0
    _
  %s12 = ssub.s32 1, %s10
  %s13 = scalar_select 0, %s12, %s10
  $region1: #{tpu_custom_call.1} parent=0
    #allocation3 [shape = 'u8[131072]{0}', space=vmem, size = 0x20000, scoped, tag = 'input window, operand 0, single buffered']
    #allocation4 [shape = 's32[1]{0}', space=sflag, size = 0x4, scoped, tag = 'scoped memory for tpu_custom_call.1']
    #allocation5 [shape = 's32[1]{0}', space=sflag, size = 0x4, scoped, tag = 'scoped memory for tpu_custom_call.1']
    #allocation6 [shape = 'u8[73728]{0}', space=vmem, size = 0x12000, scoped, tag = 'input window, operand 3, single buffered']
    #allocation7 [shape = 's32[1]{0}', space=sflag, size = 0x4, scoped, tag = 'scoped memory for tpu_custom_call.1']
    #allocation8 [shape = 'u8[524288]{0}', space=vmem, size = 0x80000, scoped, tag = 'input window, operand 5, single buffered']
    #allocation9 [shape = 'u8[65536]{0}', space=vmem, size = 0x10000, scoped, tag = 'input window, operand 7, single buffered']
    #allocation10 [shape = 's32[1]{0}', space=sflag, size = 0x4, scoped, tag = 'scoped memory for tpu_custom_call.1']
    #allocation11 [shape = 'u8[1024]{0}', space=vmem, size = 0x400, scoped, tag = 'output window, operand 0, single buffered']
    %14 = vsyncpa [#allocation4], 0
    %15 = vsyncpa [#allocation7], 0
    %16 = vsyncpa [#allocation10], 0
    %17 = vsyncpa [#allocation5], 0
    // Predicated region
    $region2: #{tpu_custom_call.1} parent=1 // pred_check
      _
    $region3: #{tpu_custom_call.1} parent=1 // pred_check_branch
      %19 = sbr.rel (0) target = $region5
    $region4: #{tpu_custom_call.1} parent=1 // pred_region
      %s21 = ssub.s32 4096, 4096
      %22 = vsyncadd [#allocation4], %s21
      %s23 = sshll.u32 [#allocation3], 4
      %s24 = int_to_ptr.vmem [resolvable:$true] %s23
      %29 = dma.hbm_to_vmem [thread:$0]  %s0, 4096, %s24, [#allocation4], 64, 64, 4
    $region5: #{tpu_custom_call.1} parent=1 // pred_fallthru
      _
    // Predicated region
    $region6: #{tpu_custom_call.1} parent=1 // pred_check
      _
    $region7: #{tpu_custom_call.1} parent=1 // pred_check_branch
      %31 = sbr.rel (0) target = $region9
    $region8: #{tpu_custom_call.1} parent=1 // pred_region
      _
    $region9: #{tpu_custom_call.1} parent=1 // pred_fallthru
      _
    // Predicated region
    $region10: #{tpu_custom_call.1} parent=1 // pred_check
      _
    $region11: #{tpu_custom_call.1} parent=1 // pred_check_branch
      %33 = sbr.rel (0) target = $region13
    $region12: #{tpu_custom_call.1} parent=1 // pred_region
      _
    $region13: #{tpu_custom_call.1} parent=1 // pred_fallthru
      _
    // Predicated region
    $region14: #{tpu_custom_call.1} parent=1 // pred_check
      _
    $region15: #{tpu_custom_call.1} parent=1 // pred_check_branch
      %35 = sbr.rel (0) target = $region17
    $region16: #{tpu_custom_call.1} parent=1 // pred_region
      %s37 = ssub.s32 2304, 2304
      %38 = vsyncadd [#allocation7], %s37
      %s39 = sshll.u32 [#allocation6], 4
      %s40 = int_to_ptr.vmem [resolvable:$true] %s39
      %45 = dma.hbm_to_vmem [thread:$0]  %s3, 2304, %s40, [#allocation7], 64, 64, 4
    $region17: #{tpu_custom_call.1} parent=1 // pred_fallthru
      _
    // Predicated region
    $region18: #{tpu_custom_call.1} parent=1 // pred_check
      _
    $region19: #{tpu_custom_call.1} parent=1 // pred_check_branch
      %47 = sbr.rel (0) target = $region21
    $region20: #{tpu_custom_call.1} parent=1 // pred_region
      _
    $region21: #{tpu_custom_call.1} parent=1 // pred_fallthru
      _
    // Predicated region
    $region22: #{tpu_custom_call.1} parent=1 // pred_check
      _
    $region23: #{tpu_custom_call.1} parent=1 // pred_check_branch
      %49 = sbr.rel (0) target = $region25
    $region24: #{tpu_custom_call.1} parent=1 // pred_region
      %s51 = ssub.s32 16384, 16384
      %52 = vsyncadd [#allocation7], %s51
      %s53 = sshll.u32 [#allocation8], 4
      %s54 = int_to_ptr.vmem [resolvable:$true] %s53
      %59 = dma.hbm_to_vmem [thread:$0]  %s5, 16384, %s54, [#allocation7], 128, 128, 8
    $region25: #{tpu_custom_call.1} parent=1 // pred_fallthru
      _
    // Predicated region
    $region26: #{tpu_custom_call.1} parent=1 // pred_check
      _
    $region27: #{tpu_custom_call.1} parent=1 // pred_check_branch
      %61 = sbr.rel (0) target = $region29
    $region28: #{tpu_custom_call.1} parent=1 // pred_region
      _
    $region29: #{tpu_custom_call.1} parent=1 // pred_fallthru
      _
    // Predicated region
    $region30: #{tpu_custom_call.1} parent=1 // pred_check
      _
    $region31: #{tpu_custom_call.1} parent=1 // pred_check_branch
      %63 = sbr.rel (0) target = $region33
    $region32: #{tpu_custom_call.1} parent=1 // pred_region
      %s65 = ssub.s32 2048, 2048
      %66 = vsyncadd [#allocation10], %s65
      %s67 = sshll.u32 [#allocation9], 4
      %s68 = int_to_ptr.vmem [resolvable:$true] %s67
      %73 = dma.hbm_to_vmem [thread:$0]  %s7, 2048, %s68, [#allocation10], 64, 64, 4
    $region33: #{tpu_custom_call.1} parent=1 // pred_fallthru
      _
    // Predicated region
    $region34: #{tpu_custom_call.1} parent=1 // pred_check
      _
    $region35: #{tpu_custom_call.1} parent=1 // pred_check_branch
      %75 = sbr.rel (0) target = $region37
    $region36: #{tpu_custom_call.1} parent=1 // pred_region
      _
    $region37: #{tpu_custom_call.1} parent=1 // pred_fallthru
      _
    // Predicated region
    $region38: #{tpu_custom_call.1} parent=1 // pred_check
      _
    $region39: #{tpu_custom_call.1} parent=1 // pred_check_branch
      %77 = sbr.rel (0) target = $region41
    $region40: #{tpu_custom_call.1} parent=1 // pred_region
      %78 = dma.done [#allocation4], 4096
    $region41: #{tpu_custom_call.1} parent=1 // pred_fallthru
      _
    // Predicated region
    $region42: #{tpu_custom_call.1} parent=1 // pred_check
      _
    $region43: #{tpu_custom_call.1} parent=1 // pred_check_branch
      %80 = sbr.rel (0) target = $region45
    $region44: #{tpu_custom_call.1} parent=1 // pred_region
      %81 = dma.done [#allocation7], 2304
    $region45: #{tpu_custom_call.1} parent=1 // pred_fallthru
      _
    // Predicated region
    $region46: #{tpu_custom_call.1} parent=1 // pred_check
      _
    $region47: #{tpu_custom_call.1} parent=1 // pred_check_branch
      %83 = sbr.rel (0) target = $region49
    $region48: #{tpu_custom_call.1} parent=1 // pred_region
      %84 = dma.done [#allocation7], 16384
    $region49: #{tpu_custom_call.1} parent=1 // pred_fallthru
      _
    // Predicated region
    $region50: #{tpu_custom_call.1} parent=1 // pred_check
      _
    $region51: #{tpu_custom_call.1} parent=1 // pred_check_branch
      %86 = sbr.rel (0) target = $region53
    $region52: #{tpu_custom_call.1} parent=1 // pred_region
      %87 = dma.done [#allocation10], 2048
    $region53: #{tpu_custom_call.1} parent=1 // pred_fallthru
      _
    %p89 = scmp.eq.s32.totalorder 0, 0
    // Predicated region
    $region54: #{tpu_custom_call.1} parent=1 // pred_check
      %p90 = pneg %p89
    $region55: #{tpu_custom_call.1} parent=1 // pred_check_branch
      %92 = sbr.rel (%p90) target = $region57
    $region56: #{tpu_custom_call.1} parent=1 // pred_region
      %vm93 = vcmask 261120
      %94 = vst.msk [vmem:[#allocation2] sm:$0xff] %vm93, 0.0
      %vm95 = vcmask 254976
      %96 = vst.msk [vmem:[#allocation2 + $0x8] sm:$0x3] %vm95, 0.0
      %97 = vst.msk [vmem:[#allocation2 + $0x10] sm:$0xff] %vm93, 0.0
      %98 = vst.msk [vmem:[#allocation2 + $0x18] sm:$0x3] %vm95, 0.0
      %99 = vst.msk [vmem:[#allocation2 + $0x20] sm:$0xff] %vm93, 0.0
      %100 = vst.msk [vmem:[#allocation2 + $0x28] sm:$0x3] %vm95, 0.0
      %101 = vst.msk [vmem:[#allocation2 + $0x30] sm:$0xff] %vm93, 0.0
      %102 = vst.msk [vmem:[#allocation2 + $0x38] sm:$0x3] %vm95, 0.0
      %103 = vst.msk [vmem:[#allocation2 + $0x40] sm:$0xff] %vm93, 0.0
      %104 = vst.msk [vmem:[#allocation2 + $0x48] sm:$0x3] %vm95, 0.0
      %105 = vst.msk [vmem:[#allocation2 + $0x50] sm:$0xff] %vm93, 0.0
      %106 = vst.msk [vmem:[#allocation2 + $0x58] sm:$0x3] %vm95, 0.0
      %107 = vst.msk [vmem:[#allocation2 + $0x60] sm:$0xff] %vm93, 0.0
      %108 = vst.msk [vmem:[#allocation2 + $0x68] sm:$0x3] %vm95, 0.0
      %109 = vst.msk [vmem:[#allocation2 + $0x70] sm:$0xff] %vm93, 0.0
      %110 = vst.msk [vmem:[#allocation2 + $0x78] sm:$0x3] %vm95, 0.0
      %111 = vst.msk [vmem:[#allocation2 + $0x80] sm:$0xff] %vm93, 0.0
      %112 = vst.msk [vmem:[#allocation2 + $0x88] sm:$0x3] %vm95, 0.0
      %113 = vst.msk [vmem:[#allocation2 + $0x90] sm:$0xff] %vm93, 0.0
      %114 = vst.msk [vmem:[#allocation2 + $0x98] sm:$0x3] %vm95, 0.0
      %115 = vst.msk [vmem:[#allocation2 + $0xa0] sm:$0xff] %vm93, 0.0
      %116 = vst.msk [vmem:[#allocation2 + $0xa8] sm:$0x3] %vm95, 0.0
      %117 = vst.msk [vmem:[#allocation2 + $0xb0] sm:$0xff] %vm93, 0.0
      %118 = vst.msk [vmem:[#allocation2 + $0xb8] sm:$0x3] %vm95, 0.0
      %119 = vst.msk [vmem:[#allocation2 + $0xc0] sm:$0xff] %vm93, 0.0
      %120 = vst.msk [vmem:[#allocation2 + $0xc8] sm:$0x3] %vm95, 0.0
      %121 = vst.msk [vmem:[#allocation2 + $0xd0] sm:$0xff] %vm93, 0.0
      %122 = vst.msk [vmem:[#allocation2 + $0xd8] sm:$0x3] %vm95, 0.0
      %123 = vst.msk [vmem:[#allocation2 + $0xe0] sm:$0xff] %vm93, 0.0
      %124 = vst.msk [vmem:[#allocation2 + $0xe8] sm:$0x3] %vm95, 0.0
      %125 = vst.msk [vmem:[#allocation2 + $0xf0] sm:$0xff] %vm93, 0.0
      %126 = vst.msk [vmem:[#allocation2 + $0xf8] sm:$0x3] %vm95, 0.0
      %127 = vst.msk [vmem:[#allocation2 + $0x100] sm:$0xff] %vm93, 0.0
      %128 = vst.msk [vmem:[#allocation2 + $0x108] sm:$0x3] %vm95, 0.0
      %129 = vst.msk [vmem:[#allocation2 + $0x110] sm:$0xff] %vm93, 0.0
      %130 = vst.msk [vmem:[#allocation2 + $0x118] sm:$0x3] %vm95, 0.0
      %131 = vst.msk [vmem:[#allocation2 + $0x120] sm:$0xff] %vm93, 0.0
      %132 = vst.msk [vmem:[#allocation2 + $0x128] sm:$0x3] %vm95, 0.0
      %133 = vst.msk [vmem:[#allocation2 + $0x130] sm:$0xff] %vm93, 0.0
      %134 = vst.msk [vmem:[#allocation2 + $0x138] sm:$0x3] %vm95, 0.0
    $region57: #{tpu_custom_call.1} parent=1 // pred_fallthru
      _
    %v135 = vld [vmem:[#allocation3] sm:$0xf]
    %v136 = vld [vmem:[#allocation3 + $0x4] sm:$0xf]
    %v137 = vld [vmem:[#allocation3 + $0x8] sm:$0xf]
    %v138 = vld [vmem:[#allocation3 + $0xc] sm:$0xf]
    %v139 = vld [vmem:[#allocation3 + $0x10] sm:$0xf]
    %v140 = vld [vmem:[#allocation3 + $0x14] sm:$0xf]
    %v141 = vld [vmem:[#allocation3 + $0x18] sm:$0xf]
    %v142 = vld [vmem:[#allocation3 + $0x1c] sm:$0xf]
    %v143 = vld [vmem:[#allocation3 + $0x20] sm:$0xf]
    %v144 = vld [vmem:[#allocation3 + $0x24] sm:$0xf]
    %v145 = vld [vmem:[#allocation3 + $0x28] sm:$0xf]
    %v146 = vld [vmem:[#allocation3 + $0x2c] sm:$0xf]
    %v147 = vld [vmem:[#allocation3 + $0x30] sm:$0xf]
    %v148 = vld [vmem:[#allocation3 + $0x34] sm:$0xf]
    %v149 = vld [vmem:[#allocation3 + $0x38] sm:$0xf]
    %v150 = vld [vmem:[#allocation3 + $0x3c] sm:$0xf]
    %v151 = vld [vmem:[#allocation3 + $0x40] sm:$0xf]
    %v152 = vld [vmem:[#allocation3 + $0x44] sm:$0xf]
    %v153 = vld [vmem:[#allocation3 + $0x48] sm:$0xf]
    %v154 = vld [vmem:[#allocation3 + $0x4c] sm:$0xf]
    %v155 = vld [vmem:[#allocation3 + $0x50] sm:$0xf]
    %v156 = vld [vmem:[#allocation3 + $0x54] sm:$0xf]
    %v157 = vld [vmem:[#allocation3 + $0x58] sm:$0xf]
    %v158 = vld [vmem:[#allocation3 + $0x5c] sm:$0xf]
    %v159 = vld [vmem:[#allocation3 + $0x60] sm:$0xf]
    %v160 = vld [vmem:[#allocation3 + $0x64] sm:$0xf]
    %v161 = vld [vmem:[#allocation3 + $0x68] sm:$0xf]
    %v162 = vld [vmem:[#allocation3 + $0x6c] sm:$0xf]
    %v163 = vld [vmem:[#allocation3 + $0x70] sm:$0xf]
    %v164 = vld [vmem:[#allocation3 + $0x74] sm:$0xf]
    %v165 = vld [vmem:[#allocation3 + $0x78] sm:$0xf]
    %v166 = vld [vmem:[#allocation3 + $0x7c] sm:$0xf]
    %v167 = vld [vmem:[#allocation3 + $0x80] sm:$0xf]
    %v168 = vld [vmem:[#allocation3 + $0x84] sm:$0xf]
    %v169 = vld [vmem:[#allocation3 + $0x88] sm:$0xf]
    %v170 = vld [vmem:[#allocation3 + $0x8c] sm:$0xf]
    %v171 = vld [vmem:[#allocation3 + $0x90] sm:$0xf]
    %v172 = vld [vmem:[#allocation3 + $0x94] sm:$0xf]
    %v173 = vld [vmem:[#allocation3 + $0x98] sm:$0xf]
    %v174 = vld [vmem:[#allocation3 + $0x9c] sm:$0xf]
    %v175 = vld [vmem:[#allocation3 + $0xa0] sm:$0xf]
    %v176 = vld [vmem:[#allocation3 + $0xa4] sm:$0xf]
    %v177 = vld [vmem:[#allocation3 + $0xa8] sm:$0xf]
    %v178 = vld [vmem:[#allocation3 + $0xac] sm:$0xf]
    %v179 = vld [vmem:[#allocation3 + $0xb0] sm:$0xf]
    %v180 = vld [vmem:[#allocation3 + $0xb4] sm:$0xf]
    %v181 = vld [vmem:[#allocation3 + $0xb8] sm:$0xf]
    %v182 = vld [vmem:[#allocation3 + $0xbc] sm:$0xf]
    %v183 = vld [vmem:[#allocation3 + $0xc0] sm:$0xf]
    %v184 = vld [vmem:[#allocation3 + $0xc4] sm:$0xf]
    %v185 = vld [vmem:[#allocation3 + $0xc8] sm:$0xf]
    %v186 = vld [vmem:[#allocation3 + $0xcc] sm:$0xf]
    %v187 = vld [vmem:[#allocation3 + $0xd0] sm:$0xf]
    %v188 = vld [vmem:[#allocation3 + $0xd4] sm:$0xf]
    %v189 = vld [vmem:[#allocation3 + $0xd8] sm:$0xf]
    %v190 = vld [vmem:[#allocation3 + $0xdc] sm:$0xf]
    %v191 = vld [vmem:[#allocation3 + $0xe0] sm:$0xf]
    %v192 = vld [vmem:[#allocation3 + $0xe4] sm:$0xf]
    %v193 = vld [vmem:[#allocation3 + $0xe8] sm:$0xf]
    %v194 = vld [vmem:[#allocation3 + $0xec] sm:$0xf]
    %v195 = vld [vmem:[#allocation3 + $0xf0] sm:$0xf]
    %v196 = vld [vmem:[#allocation3 + $0xf4] sm:$0xf]
    %v197 = vld [vmem:[#allocation3 + $0xf8] sm:$0xf]
    %v198 = vld [vmem:[#allocation3 + $0xfc] sm:$0xf]
    %v199 = vld [vmem:[%s1] sm:$0xf]
    %v200 = vld [vmem:[%s1 + $0x4] sm:$0xf]
    %v201 = vld [vmem:[%s1 + $0x8] sm:$0xf]
    %v202 = vld [vmem:[%s1 + $0xc] sm:$0xf]
    %v203 = vld [vmem:[%s1 + $0x10] sm:$0x3]
    %v204 = vld [vmem:[%s2] sm:$0x1]
    %v206 = vlaneseq
    %v207 = vshrl.u32 %v206, 7
    %v208 = vsub.s32 0, %v207
    %v209 = vrot.slane %v204, %v208
    %v275 = vunpack.c.l.b16 %v135
    %v276 = vunpack.c.l.b16 %v136
    %v277 = vunpack.c.l.b16 %v137
    %v278 = vunpack.c.l.b16 %v138
    %v279 = vunpack.c.l.b16 %v139
    %v280 = vunpack.c.l.b16 %v140
    %v281 = vunpack.c.l.b16 %v141
    %v282 = vunpack.c.l.b16 %v142
    %v283 = vunpack.c.l.b16 %v143
    %v284 = vunpack.c.l.b16 %v144
    %v285 = vunpack.c.l.b16 %v145
    %v286 = vunpack.c.l.b16 %v146
    %v287 = vunpack.c.l.b16 %v147
    %v288 = vunpack.c.l.b16 %v148
    %v289 = vunpack.c.l.b16 %v149
    %v290 = vunpack.c.l.b16 %v150
    %v291 = vunpack.c.l.b16 %v151
    %v292 = vunpack.c.l.b16 %v152
    %v293 = vunpack.c.l.b16 %v153
    %v294 = vunpack.c.l.b16 %v154
    %v295 = vunpack.c.l.b16 %v155
    %v296 = vunpack.c.l.b16 %v156
    %v297 = vunpack.c.l.b16 %v157
    %v298 = vunpack.c.l.b16 %v158
    %v299 = vunpack.c.l.b16 %v159
    %v300 = vunpack.c.l.b16 %v160
    %v301 = vunpack.c.l.b16 %v161
    %v302 = vunpack.c.l.b16 %v162
    %v303 = vunpack.c.l.b16 %v163
    %v304 = vunpack.c.l.b16 %v164
    %v305 = vunpack.c.l.b16 %v165
    %v306 = vunpack.c.l.b16 %v166
    %v307 = vunpack.c.l.b16 %v167
    %v308 = vunpack.c.l.b16 %v168
    %v309 = vunpack.c.l.b16 %v169
    %v310 = vunpack.c.l.b16 %v170
    %v311 = vunpack.c.l.b16 %v171
    %v312 = vunpack.c.l.b16 %v172
    %v313 = vunpack.c.l.b16 %v173
    %v314 = vunpack.c.l.b16 %v174
    %v315 = vunpack.c.l.b16 %v175
    %v316 = vunpack.c.l.b16 %v176
    %v317 = vunpack.c.l.b16 %v177
    %v318 = vunpack.c.l.b16 %v178
    %v319 = vunpack.c.l.b16 %v179
    %v320 = vunpack.c.l.b16 %v180
    %v321 = vunpack.c.l.b16 %v181
    %v322 = vunpack.c.l.b16 %v182
    %v323 = vunpack.c.l.b16 %v183
    %v324 = vunpack.c.l.b16 %v184
    %v325 = vunpack.c.l.b16 %v185
    %v326 = vunpack.c.l.b16 %v186
    %v327 = vunpack.c.l.b16 %v187
    %v328 = vunpack.c.l.b16 %v188
    %v329 = vunpack.c.l.b16 %v189
    %v330 = vunpack.c.l.b16 %v190
    %v331 = vunpack.c.l.b16 %v191
    %v332 = vunpack.c.l.b16 %v192
    %v333 = vunpack.c.l.b16 %v193
    %v334 = vunpack.c.l.b16 %v194
    %v335 = vunpack.c.l.b16 %v195
    %v336 = vunpack.c.l.b16 %v196
    %v337 = vunpack.c.l.b16 %v197
    %v338 = vunpack.c.l.b16 %v198
    %v339 = vpack.c.b16 %v276, %v275
    %v340 = vpack.c.b16 %v278, %v277
    %v341 = vpack.c.b16 %v280, %v279
    %v342 = vpack.c.b16 %v282, %v281
    %v343 = vpack.c.b16 %v284, %v283
    %v344 = vpack.c.b16 %v286, %v285
    %v345 = vpack.c.b16 %v288, %v287
    %v346 = vpack.c.b16 %v290, %v289
    %v347 = vpack.c.b16 %v292, %v291
    %v348 = vpack.c.b16 %v294, %v293
    %v349 = vpack.c.b16 %v296, %v295
    %v350 = vpack.c.b16 %v298, %v297
    %v351 = vpack.c.b16 %v300, %v299
    %v352 = vpack.c.b16 %v302, %v301
    %v353 = vpack.c.b16 %v304, %v303
    %v354 = vpack.c.b16 %v306, %v305
    %v355 = vpack.c.b16 %v308, %v307
    %v356 = vpack.c.b16 %v310, %v309
    %v357 = vpack.c.b16 %v312, %v311
    %v358 = vpack.c.b16 %v314, %v313
    %v359 = vpack.c.b16 %v316, %v315
    %v360 = vpack.c.b16 %v318, %v317
    %v361 = vpack.c.b16 %v320, %v319
    %v362 = vpack.c.b16 %v322, %v321
    %v363 = vpack.c.b16 %v324, %v323
    %v364 = vpack.c.b16 %v326, %v325
    %v365 = vpack.c.b16 %v328, %v327
    %v366 = vpack.c.b16 %v330, %v329
    %v367 = vpack.c.b16 %v332, %v331
    %v368 = vpack.c.b16 %v334, %v333
    %v369 = vpack.c.b16 %v336, %v335
    %v370 = vpack.c.b16 %v338, %v337
    %v376 = vunpack.c.l.b16 %v199
    %v377 = vunpack.c.l.b16 %v200
    %v378 = vunpack.c.l.b16 %v201
    %v379 = vunpack.c.l.b16 %v202
    %v380 = vunpack.c.l.b16 %v203
    %v381 = vpack.c.b16 %v377, %v376
    %v382 = vpack.c.b16 %v379, %v378
    %v383 = vpack.c.b16 %v380, %v380
    %vm386 = vcmask 293888
    %v388 = vsel %vm386, %v339, 0
    %v391 = vsel %vm386, %v340, 0
    %v394 = vsel %vm386, %v341, 0
    %v397 = vsel %vm386, %v342, 0
    %v400 = vsel %vm386, %v343, 0
    %v403 = vsel %vm386, %v344, 0
    %v406 = vsel %vm386, %v345, 0
    %v409 = vsel %vm386, %v346, 0
    %v412 = vsel %vm386, %v347, 0
    %v415 = vsel %vm386, %v348, 0
    %v418 = vsel %vm386, %v349, 0
    %v421 = vsel %vm386, %v350, 0
    %v424 = vsel %vm386, %v351, 0
    %v427 = vsel %vm386, %v352, 0
    %v430 = vsel %vm386, %v353, 0
    %v433 = vsel %vm386, %v354, 0
    %v436 = vsel %vm386, %v355, 0
    %v439 = vsel %vm386, %v356, 0
    %v442 = vsel %vm386, %v357, 0
    %v445 = vsel %vm386, %v358, 0
    %v448 = vsel %vm386, %v359, 0
    %v451 = vsel %vm386, %v360, 0
    %v454 = vsel %vm386, %v361, 0
    %v457 = vsel %vm386, %v362, 0
    %v460 = vsel %vm386, %v363, 0
    %v463 = vsel %vm386, %v364, 0
    %v466 = vsel %vm386, %v365, 0
    %v469 = vsel %vm386, %v366, 0
    %v472 = vsel %vm386, %v367, 0
    %v475 = vsel %vm386, %v368, 0
    %v478 = vsel %vm386, %v369, 0
    %v481 = vsel %vm386, %v370, 0
    %vm483 = vcmask 1041408
    %v485 = vsel %vm483, %v383, 0
    %487 = vmatprep.subr.bf16.mxu0 0
    %488 = vmatpush1.bf16.msra.mxu0 %v381
    %489 = vmatprep.subr.bf16.mxu0 0
    %490 = vmatpush1.bf16.msra.mxu0 %v382
    %491 = vmatprep.subr.bf16.mxu0 0
    %492 = vmatpush1.bf16.msra.mxu0 %v485
    %493 = vmatprep.subr.bf16.mxu0 0
    %494 = vmatpush1.bf16.msra.mxu0 0
    %495 = vmatprep.subr.bf16.mxu0 0
    %496 = vmatpush1.bf16.msra.mxu0 0
    %497 = vmatprep.subr.bf16.mxu0 0
    %498 = vmatpush1.bf16.msra.mxu0 0
    %499 = vmatprep.subr.bf16.mxu0 0
    %500 = vmatpush1.bf16.msra.mxu0 0
    %501 = vmatprep.subr.bf16.mxu0 0
    %502 = vmatpush1.bf16.msra.mxu0 0
    %503 = vmatprep.subr.bf16.mxu0 0
    %504 = vmatpush1.bf16.msra.mxu0 0
    %505 = vmatprep.subr.bf16.mxu0 0
    %506 = vmatpush1.bf16.msra.mxu0 0
    %507 = vmatprep.subr.bf16.mxu0 0
    %508 = vmatpush1.bf16.msra.mxu0 0
    %509 = vmatprep.subr.bf16.mxu0 0
    %510 = vmatpush1.bf16.msra.mxu0 0
    %511 = vmatprep.subr.bf16.mxu0 0
    %512 = vmatpush1.bf16.msra.mxu0 0
    %513 = vmatprep.subr.bf16.mxu0 0
    %514 = vmatpush1.bf16.msra.mxu0 0
    %515 = vmatprep.subr.bf16.mxu0 0
    %516 = vmatpush1.bf16.msra.mxu0 0
    %517 = vmatprep.subr.bf16.mxu0 0
    %518 = vmatpush1.bf16.msra.mxu0 0
    %519 = vmatprep.mubr.bf16.mxu0 0
    %520 = vmatmul.mubr.bf16.gmra.mrb[0].mxu0 %v388
    %v521 = vpop.f32.mrb[0].mxu0
    %v522 = vadd.f32 %v209, %v521
    %v523 = vpop.f32.mrb[0].mxu0
    %v524 = vpop.f32.mrb[0].mxu0
    %v525 = vadd.f32 %v209, %v524
    %v526 = vpop.f32.mrb[0].mxu0
    %527 = vmatprep.mubr.bf16.mxu0 0
    %528 = vmatmul.mubr.bf16.gmra.mrb[0].mxu0 %v391
    %v529 = vpop.f32.mrb[0].mxu0
    %v530 = vadd.f32 %v209, %v529
    %v531 = vpop.f32.mrb[0].mxu0
    %v532 = vpop.f32.mrb[0].mxu0
    %v533 = vadd.f32 %v209, %v532
    %v534 = vpop.f32.mrb[0].mxu0
    %535 = vmatprep.mubr.bf16.mxu0 0
    %536 = vmatmul.mubr.bf16.gmra.mrb[0].mxu0 %v394
    %v537 = vpop.f32.mrb[0].mxu0
    %v538 = vadd.f32 %v209, %v537
    %v539 = vpop.f32.mrb[0].mxu0
    %v540 = vpop.f32.mrb[0].mxu0
    %v541 = vadd.f32 %v209, %v540
    %v542 = vpop.f32.mrb[0].mxu0
    %543 = vmatprep.mubr.bf16.mxu0 0
    %544 = vmatmul.mubr.bf16.gmra.mrb[0].mxu0 %v397
    %v545 = vpop.f32.mrb[0].mxu0
    %v546 = vadd.f32 %v209, %v545
    %v547 = vpop.f32.mrb[0].mxu0
    %v548 = vpop.f32.mrb[0].mxu0
    %v549 = vadd.f32 %v209, %v548
    %v550 = vpop.f32.mrb[0].mxu0
    %551 = vmatprep.mubr.bf16.mxu0 0
    %552 = vmatmul.mubr.bf16.gmra.mrb[0].mxu0 %v400
    %v553 = vpop.f32.mrb[0].mxu0
    %v554 = vadd.f32 %v209, %v553
    %v555 = vpop.f32.mrb[0].mxu0
    %v556 = vpop.f32.mrb[0].mxu0
    %v557 = vadd.f32 %v209, %v556
    %v558 = vpop.f32.mrb[0].mxu0
    %559 = vmatprep.mubr.bf16.mxu0 0
    %560 = vmatmul.mubr.bf16.gmra.mrb[0].mxu0 %v403
    %v561 = vpop.f32.mrb[0].mxu0
    %v562 = vadd.f32 %v209, %v561
    %v563 = vpop.f32.mrb[0].mxu0
    %v564 = vpop.f32.mrb[0].mxu0
    %v565 = vadd.f32 %v209, %v564
    %v566 = vpop.f32.mrb[0].mxu0
    %567 = vmatprep.mubr.bf16.mxu0 0
    %568 = vmatmul.mubr.bf16.gmra.mrb[0].mxu0 %v406
    %v569 = vpop.f32.mrb[0].mxu0
    %v570 = vadd.f32 %v209, %v569
    %v571 = vpop.f32.mrb[0].mxu0
    %v572 = vpop.f32.mrb[0].mxu0
    %v573 = vadd.f32 %v209, %v572
    %v574 = vpop.f32.mrb[0].mxu0
    %575 = vmatprep.mubr.bf16.mxu0 0
    %576 = vmatmul.mubr.bf16.gmra.mrb[0].mxu0 %v409
    %v577 = vpop.f32.mrb[0].mxu0
    %v578 = vadd.f32 %v209, %v577
    %v579 = vpop.f32.mrb[0].mxu0
    %v580 = vpop.f32.mrb[0].mxu0
    %v581 = vadd.f32 %v209, %v580
    %v582 = vpop.f32.mrb[0].mxu0
    %583 = vmatprep.mubr.bf16.mxu0 0
    %584 = vmatmul.mubr.bf16.gmra.mrb[0].mxu0 %v412
    %v585 = vpop.f32.mrb[0].mxu0
    %v586 = vadd.f32 %v209, %v585
    %v587 = vpop.f32.mrb[0].mxu0
    %v588 = vpop.f32.mrb[0].mxu0
    %v589 = vadd.f32 %v209, %v588
    %v590 = vpop.f32.mrb[0].mxu0
    %591 = vmatprep.mubr.bf16.mxu0 0
    %592 = vmatmul.mubr.bf16.gmra.mrb[0].mxu0 %v415
    %v593 = vpop.f32.mrb[0].mxu0
    %v594 = vadd.f32 %v209, %v593
    %v595 = vpop.f32.mrb[0].mxu0
    %v596 = vpop.f32.mrb[0].mxu0
    %v597 = vadd.f32 %v209, %v596
    %v598 = vpop.f32.mrb[0].mxu0
    %599 = vmatprep.mubr.bf16.mxu0 0
    %600 = vmatmul.mubr.bf16.gmra.mrb[0].mxu0 %v418
    %v601 = vpop.f32.mrb[0].mxu0
    %v602 = vadd.f32 %v209, %v601
    %v603 = vpop.f32.mrb[0].mxu0
    %v604 = vpop.f32.mrb[0].mxu0
    %v605 = vadd.f32 %v209, %v604
    %v606 = vpop.f32.mrb[0].mxu0
    %607 = vmatprep.mubr.bf16.mxu0 0
    %608 = vmatmul.mubr.bf16.gmra.mrb[0].mxu0 %v421
    %v609 = vpop.f32.mrb[0].mxu0
    %v610 = vadd.f32 %v209, %v609
    %v611 = vpop.f32.mrb[0].mxu0
    %v612 = vpop.f32.mrb[0].mxu0
    %v613 = vadd.f32 %v209, %v612
    %v614 = vpop.f32.mrb[0].mxu0
    %615 = vmatprep.mubr.bf16.mxu0 0
    %616 = vmatmul.mubr.bf16.gmra.mrb[0].mxu0 %v424
    %v617 = vpop.f32.mrb[0].mxu0
    %v618 = vadd.f32 %v209, %v617
    %v619 = vpop.f32.mrb[0].mxu0
    %v620 = vpop.f32.mrb[0].mxu0
    %v621 = vadd.f32 %v209, %v620
    %v622 = vpop.f32.mrb[0].mxu0
    %623 = vmatprep.mubr.bf16.mxu0 0
    %624 = vmatmul.mubr.bf16.gmra.mrb[0].mxu0 %v427
    %v625 = vpop.f32.mrb[0].mxu0
    %v626 = vadd.f32 %v209, %v625
    %v627 = vpop.f32.mrb[0].mxu0
    %v628 = vpop.f32.mrb[0].mxu0
    %v629 = vadd.f32 %v209, %v628
    %v630 = vpop.f32.mrb[0].mxu0
    %631 = vmatprep.mubr.bf16.mxu0 0
    %632 = vmatmul.mubr.bf16.gmra.mrb[0].mxu0 %v430
    %v633 = vpop.f32.mrb[0].mxu0
    %v634 = vadd.f32 %v209, %v633
    %v635 = vpop.f32.mrb[0].mxu0
    %v636 = vpop.f32.mrb[0].mxu0
    %v637 = vadd.f32 %v209, %v636
    %v638 = vpop.f32.mrb[0].mxu0
    %639 = vmatprep.mubr.bf16.mxu0 0
    %640 = vmatmul.mubr.bf16.gmra.mrb[0].mxu0 %v433
    %v641 = vpop.f32.mrb[0].mxu0
    %v642 = vadd.f32 %v209, %v641
    %v643 = vpop.f32.mrb[0].mxu0
    %v644 = vpop.f32.mrb[0].mxu0
    %v645 = vadd.f32 %v209, %v644
    %v646 = vpop.f32.mrb[0].mxu0
    %647 = vmatprep.mubr.bf16.mxu0 0
    %648 = vmatmul.mubr.bf16.gmra.mrb[0].mxu0 %v436
    %v649 = vpop.f32.mrb[0].mxu0
    %v650 = vadd.f32 %v209, %v649
    %v651 = vpop.f32.mrb[0].mxu0
    %v652 = vpop.f32.mrb[0].mxu0
    %v653 = vadd.f32 %v209, %v652
    %v654 = vpop.f32.mrb[0].mxu0
    %655 = vmatprep.mubr.bf16.mxu0 0
    %656 = vmatmul.mubr.bf16.gmra.mrb[0].mxu0 %v439
    %v657 = vpop.f32.mrb[0].mxu0
    %v658 = vadd.f32 %v209, %v657
    %v659 = vpop.f32.mrb[0].mxu0
    %v660 = vpop.f32.mrb[0].mxu0
    %v661 = vadd.f32 %v209, %v660
    %v662 = vpop.f32.mrb[0].mxu0
    %663 = vmatprep.mubr.bf16.mxu0 0
    %664 = vmatmul.mubr.bf16.gmra.mrb[0].mxu0 %v442
    %v665 = vpop.f32.mrb[0].mxu0
    %v666 = vadd.f32 %v209, %v665
    %v667 = vpop.f32.mrb[0].mxu0
    %v668 = vpop.f32.mrb[0].mxu0
    %v669 = vadd.f32 %v209, %v668
    %v670 = vpop.f32.mrb[0].mxu0
    %671 = vmatprep.mubr.bf16.mxu0 0
    %672 = vmatmul.mubr.bf16.gmra.mrb[0].mxu0 %v445
    %v673 = vpop.f32.mrb[0].mxu0
    %v674 = vadd.f32 %v209, %v673
    %v675 = vpop.f32.mrb[0].mxu0
    %v676 = vpop.f32.mrb[0].mxu0
    %v677 = vadd.f32 %v209, %v676
    %v678 = vpop.f32.mrb[0].mxu0
    %679 = vmatprep.mubr.bf16.mxu0 0
    %680 = vmatmul.mubr.bf16.gmra.mrb[0].mxu0 %v448
    %v681 = vpop.f32.mrb[0].mxu0
    %v682 = vadd.f32 %v209, %v681
    %v683 = vpop.f32.mrb[0].mxu0
    %v684 = vpop.f32.mrb[0].mxu0
    %v685 = vadd.f32 %v209, %v684
    %v686 = vpop.f32.mrb[0].mxu0
    %687 = vmatprep.mubr.bf16.mxu0 0
    %688 = vmatmul.mubr.bf16.gmra.mrb[0].mxu0 %v451
    %v689 = vpop.f32.mrb[0].mxu0
    %v690 = vadd.f32 %v209, %v689
    %v691 = vpop.f32.mrb[0].mxu0
    %v692 = vpop.f32.mrb[0].mxu0
    %v693 = vadd.f32 %v209, %v692
    %v694 = vpop.f32.mrb[0].mxu0
    %695 = vmatprep.mubr.bf16.mxu0 0
    %696 = vmatmul.mubr.bf16.gmra.mrb[0].mxu0 %v454
    %v697 = vpop.f32.mrb[0].mxu0
    %v698 = vadd.f32 %v209, %v697
    %v699 = vpop.f32.mrb[0].mxu0
    %v700 = vpop.f32.mrb[0].mxu0
    %v701 = vadd.f32 %v209, %v700
    %v702 = vpop.f32.mrb[0].mxu0
    %703 = vmatprep.mubr.bf16.mxu0 0
    %704 = vmatmul.mubr.bf16.gmra.mrb[0].mxu0 %v457
    %v705 = vpop.f32.mrb[0].mxu0
    %v706 = vadd.f32 %v209, %v705
    %v707 = vpop.f32.mrb[0].mxu0
    %v708 = vpop.f32.mrb[0].mxu0
    %v709 = vadd.f32 %v209, %v708
    %v710 = vpop.f32.mrb[0].mxu0
    %711 = vmatprep.mubr.bf16.mxu0 0
    %712 = vmatmul.mubr.bf16.gmra.mrb[0].mxu0 %v460
    %v713 = vpop.f32.mrb[0].mxu0
    %v714 = vadd.f32 %v209, %v713
    %v715 = vpop.f32.mrb[0].mxu0
    %v716 = vpop.f32.mrb[0].mxu0
    %v717 = vadd.f32 %v209, %v716
    %v718 = vpop.f32.mrb[0].mxu0
    %719 = vmatprep.mubr.bf16.mxu0 0
    %720 = vmatmul.mubr.bf16.gmra.mrb[0].mxu0 %v463
    %v721 = vpop.f32.mrb[0].mxu0
    %v722 = vadd.f32 %v209, %v721
    %v723 = vpop.f32.mrb[0].mxu0
    %v724 = vpop.f32.mrb[0].mxu0
    %v725 = vadd.f32 %v209, %v724
    %v726 = vpop.f32.mrb[0].mxu0
    %727 = vmatprep.mubr.bf16.mxu0 0
    %728 = vmatmul.mubr.bf16.gmra.mrb[0].mxu0 %v466
    %v729 = vpop.f32.mrb[0].mxu0
    %v730 = vadd.f32 %v209, %v729
    %v731 = vpop.f32.mrb[0].mxu0
    %v732 = vpop.f32.mrb[0].mxu0
    %v733 = vadd.f32 %v209, %v732
    %v734 = vpop.f32.mrb[0].mxu0
    %735 = vmatprep.mubr.bf16.mxu0 0
    %736 = vmatmul.mubr.bf16.gmra.mrb[0].mxu0 %v469
    %v737 = vpop.f32.mrb[0].mxu0
    %v738 = vadd.f32 %v209, %v737
    %v739 = vpop.f32.mrb[0].mxu0
    %v740 = vpop.f32.mrb[0].mxu0
    %v741 = vadd.f32 %v209, %v740
    %v742 = vpop.f32.mrb[0].mxu0
    %743 = vmatprep.mubr.bf16.mxu0 0
    %744 = vmatmul.mubr.bf16.gmra.mrb[0].mxu0 %v472
    %v745 = vpop.f32.mrb[0].mxu0
    %v746 = vadd.f32 %v209, %v745
    %v747 = vpop.f32.mrb[0].mxu0
    %v748 = vpop.f32.mrb[0].mxu0
    %v749 = vadd.f32 %v209, %v748
    %v750 = vpop.f32.mrb[0].mxu0
    %751 = vmatprep.mubr.bf16.mxu0 0
    %752 = vmatmul.mubr.bf16.gmra.mrb[0].mxu0 %v475
    %v753 = vpop.f32.mrb[0].mxu0
    %v754 = vadd.f32 %v209, %v753
    %v755 = vpop.f32.mrb[0].mxu0
    %v756 = vpop.f32.mrb[0].mxu0
    %v757 = vadd.f32 %v209, %v756
    %v758 = vpop.f32.mrb[0].mxu0
    %759 = vmatprep.mubr.bf16.mxu0 0
    %760 = vmatmul.mubr.bf16.gmra.mrb[0].mxu0 %v478
    %v761 = vpop.f32.mrb[0].mxu0
    %v762 = vadd.f32 %v209, %v761
    %v763 = vpop.f32.mrb[0].mxu0
    %v764 = vpop.f32.mrb[0].mxu0
    %v765 = vadd.f32 %v209, %v764
    %v766 = vpop.f32.mrb[0].mxu0
    %767 = vmatprep.mubr.bf16.mxu0 0
    %768 = vmatmul.mubr.bf16.gmra.mrb[0].mxu0 %v481
    %v769 = vpop.f32.mrb[0].mxu0
    %v770 = vadd.f32 %v209, %v769
    %v771 = vpop.f32.mrb[0].mxu0
    %v772 = vpop.f32.mrb[0].mxu0
    %v773 = vadd.f32 %v209, %v772
    %v774 = vpop.f32.mrb[0].mxu0
    %775 = vdwg.mxu0
    %v776 = vmax.f32 %v522, 0.0
    %v777 = vmax.f32 %v525, 0.0
    %v778 = vmax.f32 %v530, 0.0
    %v779 = vmax.f32 %v533, 0.0
    %v780 = vmax.f32 %v538, 0.0
    %v781 = vmax.f32 %v541, 0.0
    %v782 = vmax.f32 %v546, 0.0
    %v783 = vmax.f32 %v549, 0.0
    %v784 = vmax.f32 %v554, 0.0
    %v785 = vmax.f32 %v557, 0.0
    %v786 = vmax.f32 %v562, 0.0
    %v787 = vmax.f32 %v565, 0.0
    %v788 = vmax.f32 %v570, 0.0
    %v789 = vmax.f32 %v573, 0.0
    %v790 = vmax.f32 %v578, 0.0
    %v791 = vmax.f32 %v581, 0.0
    %v792 = vmax.f32 %v586, 0.0
    %v793 = vmax.f32 %v589, 0.0
    %v794 = vmax.f32 %v594, 0.0
    %v795 = vmax.f32 %v597, 0.0
    %v796 = vmax.f32 %v602, 0.0
    %v797 = vmax.f32 %v605, 0.0
    %v798 = vmax.f32 %v610, 0.0
    %v799 = vmax.f32 %v613, 0.0
    %v800 = vmax.f32 %v618, 0.0
    %v801 = vmax.f32 %v621, 0.0
    %v802 = vmax.f32 %v626, 0.0
    %v803 = vmax.f32 %v629, 0.0
    %v804 = vmax.f32 %v634, 0.0
    %v805 = vmax.f32 %v637, 0.0
    %v806 = vmax.f32 %v642, 0.0
    %v807 = vmax.f32 %v645, 0.0
    %v808 = vmax.f32 %v650, 0.0
    %v809 = vmax.f32 %v653, 0.0
    %v810 = vmax.f32 %v658, 0.0
    %v811 = vmax.f32 %v661, 0.0
    %v812 = vmax.f32 %v666, 0.0
    %v813 = vmax.f32 %v669, 0.0
    %v814 = vmax.f32 %v674, 0.0
    %v815 = vmax.f32 %v677, 0.0
    %v816 = vmax.f32 %v682, 0.0
    %v817 = vmax.f32 %v685, 0.0
    %v818 = vmax.f32 %v690, 0.0
    %v819 = vmax.f32 %v693, 0.0
    %v820 = vmax.f32 %v698, 0.0
    %v821 = vmax.f32 %v701, 0.0
    %v822 = vmax.f32 %v706, 0.0
    %v823 = vmax.f32 %v709, 0.0
    %v824 = vmax.f32 %v714, 0.0
    %v825 = vmax.f32 %v717, 0.0
    %v826 = vmax.f32 %v722, 0.0
    %v827 = vmax.f32 %v725, 0.0
    %v828 = vmax.f32 %v730, 0.0
    %v829 = vmax.f32 %v733, 0.0
    %v830 = vmax.f32 %v738, 0.0
    %v831 = vmax.f32 %v741, 0.0
    %v832 = vmax.f32 %v746, 0.0
    %v833 = vmax.f32 %v749, 0.0
    %v834 = vmax.f32 %v754, 0.0
    %v835 = vmax.f32 %v757, 0.0
    %v836 = vmax.f32 %v762, 0.0
    %v837 = vmax.f32 %v765, 0.0
    %v838 = vmax.f32 %v770, 0.0
    %v839 = vmax.f32 %v773, 0.0
    %v840 = vmax.f32 %v776, %v778
    %v841 = vmax.f32 %v777, %v779
    %v842 = vmax.f32 %v780, %v782
    %v843 = vmax.f32 %v781, %v783
    %v844 = vmax.f32 %v784, %v786
    %v845 = vmax.f32 %v785, %v787
    %v846 = vmax.f32 %v788, %v790
    %v847 = vmax.f32 %v789, %v791
    %v848 = vmax.f32 %v792, %v794
    %v849 = vmax.f32 %v793, %v795
    %v850 = vmax.f32 %v796, %v798
    %v851 = vmax.f32 %v797, %v799
    %v852 = vmax.f32 %v800, %v802
    %v853 = vmax.f32 %v801, %v803
    %v854 = vmax.f32 %v804, %v806
    %v855 = vmax.f32 %v805, %v807
    %v856 = vmax.f32 %v808, %v810
    %v857 = vmax.f32 %v809, %v811
    %v858 = vmax.f32 %v812, %v814
    %v859 = vmax.f32 %v813, %v815
    %v860 = vmax.f32 %v816, %v818
    %v861 = vmax.f32 %v817, %v819
    %v862 = vmax.f32 %v820, %v822
    %v863 = vmax.f32 %v821, %v823
    %v864 = vmax.f32 %v824, %v826
    %v865 = vmax.f32 %v825, %v827
    %v866 = vmax.f32 %v828, %v830
    %v867 = vmax.f32 %v829, %v831
    %v868 = vmax.f32 %v832, %v834
    %v869 = vmax.f32 %v833, %v835
    %v870 = vmax.f32 %v836, %v838
    %v871 = vmax.f32 %v837, %v839
    %v904 = vcombine.high %v840, %v840
    %v906 = vunpack.c.l.s4 1983009808
    %v907 = vunpack.c.0.s8 %v906
    %v908 = vlaneseq
    %v909 = vshrl.u32 %v908, 7
    %v910 = vsub.s32 %v907, %v909
    %v911 = vrot.slane %v840, %v910
    %v913 = vunpack.c.l.s4 1983009808
    %v914 = vunpack.c.0.s8 %v913
    %v915 = vlaneseq
    %v916 = vshrl.u32 %v915, 7
    %v917 = vsub.s32 %v914, %v916
    %v918 = vrot.slane %v904, %v917
    %v919 = vcombine.high %v911, %v911
    %v920 = vcombine.high %v918, %v918
    %v921 = vcombine.high %v841, %v841
    %v923 = vunpack.c.l.s4 1983009808
    %v924 = vunpack.c.0.s8 %v923
    %v925 = vlaneseq
    %v926 = vshrl.u32 %v925, 7
    %v927 = vsub.s32 %v924, %v926
    %v928 = vrot.slane %v841, %v927
    %v930 = vunpack.c.l.s4 1983009808
    %v931 = vunpack.c.0.s8 %v930
    %v932 = vlaneseq
    %v933 = vshrl.u32 %v932, 7
    %v934 = vsub.s32 %v931, %v933
    %v935 = vrot.slane %v921, %v934
    %v936 = vcombine.high %v928, %v928
    %v937 = vcombine.high %v935, %v935
    %v938 = vcombine.high %v842, %v842
    %v940 = vunpack.c.l.s4 1983009808
    %v941 = vunpack.c.0.s8 %v940
    %v942 = vlaneseq
    %v943 = vshrl.u32 %v942, 7
    %v944 = vsub.s32 %v941, %v943
    %v945 = vrot.slane %v842, %v944
    %v947 = vunpack.c.l.s4 1983009808
    %v948 = vunpack.c.0.s8 %v947
    %v949 = vlaneseq
    %v950 = vshrl.u32 %v949, 7
    %v951 = vsub.s32 %v948, %v950
    %v952 = vrot.slane %v938, %v951
    %v953 = vcombine.high %v945, %v945
    %v954 = vcombine.high %v952, %v952
    %v955 = vcombine.high %v843, %v843
    %v957 = vunpack.c.l.s4 1983009808
    %v958 = vunpack.c.0.s8 %v957
    %v959 = vlaneseq
    %v960 = vshrl.u32 %v959, 7
    %v961 = vsub.s32 %v958, %v960
    %v962 = vrot.slane %v843, %v961
    %v964 = vunpack.c.l.s4 1983009808
    %v965 = vunpack.c.0.s8 %v964
    %v966 = vlaneseq
    %v967 = vshrl.u32 %v966, 7
    %v968 = vsub.s32 %v965, %v967
    %v969 = vrot.slane %v955, %v968
    %v970 = vcombine.high %v962, %v962
    %v971 = vcombine.high %v969, %v969
    %v972 = vcombine.high %v844, %v844
    %v974 = vunpack.c.l.s4 1983009808
    %v975 = vunpack.c.0.s8 %v974
    %v976 = vlaneseq
    %v977 = vshrl.u32 %v976, 7
    %v978 = vsub.s32 %v975, %v977
    %v979 = vrot.slane %v844, %v978
    %v981 = vunpack.c.l.s4 1983009808
    %v982 = vunpack.c.0.s8 %v981
    %v983 = vlaneseq
    %v984 = vshrl.u32 %v983, 7
    %v985 = vsub.s32 %v982, %v984
    %v986 = vrot.slane %v972, %v985
    %v987 = vcombine.high %v979, %v979
    %v988 = vcombine.high %v986, %v986
    %v989 = vcombine.high %v845, %v845
    %v991 = vunpack.c.l.s4 1983009808
    %v992 = vunpack.c.0.s8 %v991
    %v993 = vlaneseq
    %v994 = vshrl.u32 %v993, 7
    %v995 = vsub.s32 %v992, %v994
    %v996 = vrot.slane %v845, %v995
    %v998 = vunpack.c.l.s4 1983009808
    %v999 = vunpack.c.0.s8 %v998
    %v1000 = vlaneseq
    %v1001 = vshrl.u32 %v1000, 7
    %v1002 = vsub.s32 %v999, %v1001
    %v1003 = vrot.slane %v989, %v1002
    %v1004 = vcombine.high %v996, %v996
    %v1005 = vcombine.high %v1003, %v1003
    %v1006 = vcombine.high %v846, %v846
    %v1008 = vunpack.c.l.s4 1983009808
    %v1009 = vunpack.c.0.s8 %v1008
    %v1010 = vlaneseq
    %v1011 = vshrl.u32 %v1010, 7
    %v1012 = vsub.s32 %v1009, %v1011
    %v1013 = vrot.slane %v846, %v1012
    %v1015 = vunpack.c.l.s4 1983009808
    %v1016 = vunpack.c.0.s8 %v1015
    %v1017 = vlaneseq
    %v1018 = vshrl.u32 %v1017, 7
    %v1019 = vsub.s32 %v1016, %v1018
    %v1020 = vrot.slane %v1006, %v1019
    %v1021 = vcombine.high %v1013, %v1013
    %v1022 = vcombine.high %v1020, %v1020
    %v1023 = vcombine.high %v847, %v847
    %v1025 = vunpack.c.l.s4 1983009808
    %v1026 = vunpack.c.0.s8 %v1025
    %v1027 = vlaneseq
    %v1028 = vshrl.u32 %v1027, 7
    %v1029 = vsub.s32 %v1026, %v1028
    %v1030 = vrot.slane %v847, %v1029
    %v1032 = vunpack.c.l.s4 1983009808
    %v1033 = vunpack.c.0.s8 %v1032
    %v1034 = vlaneseq
    %v1035 = vshrl.u32 %v1034, 7
    %v1036 = vsub.s32 %v1033, %v1035
    %v1037 = vrot.slane %v1023, %v1036
    %v1038 = vcombine.high %v1030, %v1030
    %v1039 = vcombine.high %v1037, %v1037
    %v1040 = vcombine.high %v848, %v848
    %v1042 = vunpack.c.l.s4 1983009808
    %v1043 = vunpack.c.0.s8 %v1042
    %v1044 = vlaneseq
    %v1045 = vshrl.u32 %v1044, 7
    %v1046 = vsub.s32 %v1043, %v1045
    %v1047 = vrot.slane %v848, %v1046
    %v1049 = vunpack.c.l.s4 1983009808
    %v1050 = vunpack.c.0.s8 %v1049
    %v1051 = vlaneseq
    %v1052 = vshrl.u32 %v1051, 7
    %v1053 = vsub.s32 %v1050, %v1052
    %v1054 = vrot.slane %v1040, %v1053
    %v1055 = vcombine.high %v1047, %v1047
    %v1056 = vcombine.high %v1054, %v1054
    %v1057 = vcombine.high %v849, %v849
    %v1059 = vunpack.c.l.s4 1983009808
    %v1060 = vunpack.c.0.s8 %v1059
    %v1061 = vlaneseq
    %v1062 = vshrl.u32 %v1061, 7
    %v1063 = vsub.s32 %v1060, %v1062
    %v1064 = vrot.slane %v849, %v1063
    %v1066 = vunpack.c.l.s4 1983009808
    %v1067 = vunpack.c.0.s8 %v1066
    %v1068 = vlaneseq
    %v1069 = vshrl.u32 %v1068, 7
    %v1070 = vsub.s32 %v1067, %v1069
    %v1071 = vrot.slane %v1057, %v1070
    %v1072 = vcombine.high %v1064, %v1064
    %v1073 = vcombine.high %v1071, %v1071
    %v1074 = vcombine.high %v850, %v850
    %v1076 = vunpack.c.l.s4 1983009808
    %v1077 = vunpack.c.0.s8 %v1076
    %v1078 = vlaneseq
    %v1079 = vshrl.u32 %v1078, 7
    %v1080 = vsub.s32 %v1077, %v1079
    %v1081 = vrot.slane %v850, %v1080
    %v1083 = vunpack.c.l.s4 1983009808
    %v1084 = vunpack.c.0.s8 %v1083
    %v1085 = vlaneseq
    %v1086 = vshrl.u32 %v1085, 7
    %v1087 = vsub.s32 %v1084, %v1086
    %v1088 = vrot.slane %v1074, %v1087
    %v1089 = vcombine.high %v1081, %v1081
    %v1090 = vcombine.high %v1088, %v1088
    %v1091 = vcombine.high %v851, %v851
    %v1093 = vunpack.c.l.s4 1983009808
    %v1094 = vunpack.c.0.s8 %v1093
    %v1095 = vlaneseq
    %v1096 = vshrl.u32 %v1095, 7
    %v1097 = vsub.s32 %v1094, %v1096
    %v1098 = vrot.slane %v851, %v1097
    %v1100 = vunpack.c.l.s4 1983009808
    %v1101 = vunpack.c.0.s8 %v1100
    %v1102 = vlaneseq
    %v1103 = vshrl.u32 %v1102, 7
    %v1104 = vsub.s32 %v1101, %v1103
    %v1105 = vrot.slane %v1091, %v1104
    %v1106 = vcombine.high %v1098, %v1098
    %v1107 = vcombine.high %v1105, %v1105
    %v1108 = vcombine.high %v852, %v852
    %v1110 = vunpack.c.l.s4 1983009808
    %v1111 = vunpack.c.0.s8 %v1110
    %v1112 = vlaneseq
    %v1113 = vshrl.u32 %v1112, 7
    %v1114 = vsub.s32 %v1111, %v1113
    %v1115 = vrot.slane %v852, %v1114
    %v1117 = vunpack.c.l.s4 1983009808
    %v1118 = vunpack.c.0.s8 %v1117
    %v1119 = vlaneseq
    %v1120 = vshrl.u32 %v1119, 7
    %v1121 = vsub.s32 %v1118, %v1120
    %v1122 = vrot.slane %v1108, %v1121
    %v1123 = vcombine.high %v1115, %v1115
    %v1124 = vcombine.high %v1122, %v1122
    %v1125 = vcombine.high %v853, %v853
    %v1127 = vunpack.c.l.s4 1983009808
    %v1128 = vunpack.c.0.s8 %v1127
    %v1129 = vlaneseq
    %v1130 = vshrl.u32 %v1129, 7
    %v1131 = vsub.s32 %v1128, %v1130
    %v1132 = vrot.slane %v853, %v1131
    %v1134 = vunpack.c.l.s4 1983009808
    %v1135 = vunpack.c.0.s8 %v1134
    %v1136 = vlaneseq
    %v1137 = vshrl.u32 %v1136, 7
    %v1138 = vsub.s32 %v1135, %v1137
    %v1139 = vrot.slane %v1125, %v1138
    %v1140 = vcombine.high %v1132, %v1132
    %v1141 = vcombine.high %v1139, %v1139
    %v1142 = vcombine.high %v854, %v854
    %v1144 = vunpack.c.l.s4 1983009808
    %v1145 = vunpack.c.0.s8 %v1144
    %v1146 = vlaneseq
    %v1147 = vshrl.u32 %v1146, 7
    %v1148 = vsub.s32 %v1145, %v1147
    %v1149 = vrot.slane %v854, %v1148
    %v1151 = vunpack.c.l.s4 1983009808
    %v1152 = vunpack.c.0.s8 %v1151
    %v1153 = vlaneseq
    %v1154 = vshrl.u32 %v1153, 7
    %v1155 = vsub.s32 %v1152, %v1154
    %v1156 = vrot.slane %v1142, %v1155
    %v1157 = vcombine.high %v1149, %v1149
    %v1158 = vcombine.high %v1156, %v1156
    %v1159 = vcombine.high %v855, %v855
    %v1161 = vunpack.c.l.s4 1983009808
    %v1162 = vunpack.c.0.s8 %v1161
    %v1163 = vlaneseq
    %v1164 = vshrl.u32 %v1163, 7
    %v1165 = vsub.s32 %v1162, %v1164
    %v1166 = vrot.slane %v855, %v1165
    %v1168 = vunpack.c.l.s4 1983009808
    %v1169 = vunpack.c.0.s8 %v1168
    %v1170 = vlaneseq
    %v1171 = vshrl.u32 %v1170, 7
    %v1172 = vsub.s32 %v1169, %v1171
    %v1173 = vrot.slane %v1159, %v1172
    %v1174 = vcombine.high %v1166, %v1166
    %v1175 = vcombine.high %v1173, %v1173
    %v1176 = vcombine.high %v856, %v856
    %v1178 = vunpack.c.l.s4 1983009808
    %v1179 = vunpack.c.0.s8 %v1178
    %v1180 = vlaneseq
    %v1181 = vshrl.u32 %v1180, 7
    %v1182 = vsub.s32 %v1179, %v1181
    %v1183 = vrot.slane %v856, %v1182
    %v1185 = vunpack.c.l.s4 1983009808
    %v1186 = vunpack.c.0.s8 %v1185
    %v1187 = vlaneseq
    %v1188 = vshrl.u32 %v1187, 7
    %v1189 = vsub.s32 %v1186, %v1188
    %v1190 = vrot.slane %v1176, %v1189
    %v1191 = vcombine.high %v1183, %v1183
    %v1192 = vcombine.high %v1190, %v1190
    %v1193 = vcombine.high %v857, %v857
    %v1195 = vunpack.c.l.s4 1983009808
    %v1196 = vunpack.c.0.s8 %v1195
    %v1197 = vlaneseq
    %v1198 = vshrl.u32 %v1197, 7
    %v1199 = vsub.s32 %v1196, %v1198
    %v1200 = vrot.slane %v857, %v1199
    %v1202 = vunpack.c.l.s4 1983009808
    %v1203 = vunpack.c.0.s8 %v1202
    %v1204 = vlaneseq
    %v1205 = vshrl.u32 %v1204, 7
    %v1206 = vsub.s32 %v1203, %v1205
    %v1207 = vrot.slane %v1193, %v1206
    %v1208 = vcombine.high %v1200, %v1200
    %v1209 = vcombine.high %v1207, %v1207
    %v1210 = vcombine.high %v858, %v858
    %v1212 = vunpack.c.l.s4 1983009808
    %v1213 = vunpack.c.0.s8 %v1212
    %v1214 = vlaneseq
    %v1215 = vshrl.u32 %v1214, 7
    %v1216 = vsub.s32 %v1213, %v1215
    %v1217 = vrot.slane %v858, %v1216
    %v1219 = vunpack.c.l.s4 1983009808
    %v1220 = vunpack.c.0.s8 %v1219
    %v1221 = vlaneseq
    %v1222 = vshrl.u32 %v1221, 7
    %v1223 = vsub.s32 %v1220, %v1222
    %v1224 = vrot.slane %v1210, %v1223
    %v1225 = vcombine.high %v1217, %v1217
    %v1226 = vcombine.high %v1224, %v1224
    %v1227 = vcombine.high %v859, %v859
    %v1229 = vunpack.c.l.s4 1983009808
    %v1230 = vunpack.c.0.s8 %v1229
    %v1231 = vlaneseq
    %v1232 = vshrl.u32 %v1231, 7
    %v1233 = vsub.s32 %v1230, %v1232
    %v1234 = vrot.slane %v859, %v1233
    %v1236 = vunpack.c.l.s4 1983009808
    %v1237 = vunpack.c.0.s8 %v1236
    %v1238 = vlaneseq
    %v1239 = vshrl.u32 %v1238, 7
    %v1240 = vsub.s32 %v1237, %v1239
    %v1241 = vrot.slane %v1227, %v1240
    %v1242 = vcombine.high %v1234, %v1234
    %v1243 = vcombine.high %v1241, %v1241
    %v1244 = vcombine.high %v860, %v860
    %v1246 = vunpack.c.l.s4 1983009808
    %v1247 = vunpack.c.0.s8 %v1246
    %v1248 = vlaneseq
    %v1249 = vshrl.u32 %v1248, 7
    %v1250 = vsub.s32 %v1247, %v1249
    %v1251 = vrot.slane %v860, %v1250
    %v1253 = vunpack.c.l.s4 1983009808
    %v1254 = vunpack.c.0.s8 %v1253
    %v1255 = vlaneseq
    %v1256 = vshrl.u32 %v1255, 7
    %v1257 = vsub.s32 %v1254, %v1256
    %v1258 = vrot.slane %v1244, %v1257
    %v1259 = vcombine.high %v1251, %v1251
    %v1260 = vcombine.high %v1258, %v1258
    %v1261 = vcombine.high %v861, %v861
    %v1263 = vunpack.c.l.s4 1983009808
    %v1264 = vunpack.c.0.s8 %v1263
    %v1265 = vlaneseq
    %v1266 = vshrl.u32 %v1265, 7
    %v1267 = vsub.s32 %v1264, %v1266
    %v1268 = vrot.slane %v861, %v1267
    %v1270 = vunpack.c.l.s4 1983009808
    %v1271 = vunpack.c.0.s8 %v1270
    %v1272 = vlaneseq
    %v1273 = vshrl.u32 %v1272, 7
    %v1274 = vsub.s32 %v1271, %v1273
    %v1275 = vrot.slane %v1261, %v1274
    %v1276 = vcombine.high %v1268, %v1268
    %v1277 = vcombine.high %v1275, %v1275
    %v1278 = vcombine.high %v862, %v862
    %v1280 = vunpack.c.l.s4 1983009808
    %v1281 = vunpack.c.0.s8 %v1280
    %v1282 = vlaneseq
    %v1283 = vshrl.u32 %v1282, 7
    %v1284 = vsub.s32 %v1281, %v1283
    %v1285 = vrot.slane %v862, %v1284
    %v1287 = vunpack.c.l.s4 1983009808
    %v1288 = vunpack.c.0.s8 %v1287
    %v1289 = vlaneseq
    %v1290 = vshrl.u32 %v1289, 7
    %v1291 = vsub.s32 %v1288, %v1290
    %v1292 = vrot.slane %v1278, %v1291
    %v1293 = vcombine.high %v1285, %v1285
    %v1294 = vcombine.high %v1292, %v1292
    %v1295 = vcombine.high %v863, %v863
    %v1297 = vunpack.c.l.s4 1983009808
    %v1298 = vunpack.c.0.s8 %v1297
    %v1299 = vlaneseq
    %v1300 = vshrl.u32 %v1299, 7
    %v1301 = vsub.s32 %v1298, %v1300
    %v1302 = vrot.slane %v863, %v1301
    %v1304 = vunpack.c.l.s4 1983009808
    %v1305 = vunpack.c.0.s8 %v1304
    %v1306 = vlaneseq
    %v1307 = vshrl.u32 %v1306, 7
    %v1308 = vsub.s32 %v1305, %v1307
    %v1309 = vrot.slane %v1295, %v1308
    %v1310 = vcombine.high %v1302, %v1302
    %v1311 = vcombine.high %v1309, %v1309
    %v1312 = vcombine.high %v864, %v864
    %v1314 = vunpack.c.l.s4 1983009808
    %v1315 = vunpack.c.0.s8 %v1314
    %v1316 = vlaneseq
    %v1317 = vshrl.u32 %v1316, 7
    %v1318 = vsub.s32 %v1315, %v1317
    %v1319 = vrot.slane %v864, %v1318
    %v1321 = vunpack.c.l.s4 1983009808
    %v1322 = vunpack.c.0.s8 %v1321
    %v1323 = vlaneseq
    %v1324 = vshrl.u32 %v1323, 7
    %v1325 = vsub.s32 %v1322, %v1324
    %v1326 = vrot.slane %v1312, %v1325
    %v1327 = vcombine.high %v1319, %v1319
    %v1328 = vcombine.high %v1326, %v1326
    %v1329 = vcombine.high %v865, %v865
    %v1331 = vunpack.c.l.s4 1983009808
    %v1332 = vunpack.c.0.s8 %v1331
    %v1333 = vlaneseq
    %v1334 = vshrl.u32 %v1333, 7
    %v1335 = vsub.s32 %v1332, %v1334
    %v1336 = vrot.slane %v865, %v1335
    %v1338 = vunpack.c.l.s4 1983009808
    %v1339 = vunpack.c.0.s8 %v1338
    %v1340 = vlaneseq
    %v1341 = vshrl.u32 %v1340, 7
    %v1342 = vsub.s32 %v1339, %v1341
    %v1343 = vrot.slane %v1329, %v1342
    %v1344 = vcombine.high %v1336, %v1336
    %v1345 = vcombine.high %v1343, %v1343
    %v1346 = vcombine.high %v866, %v866
    %v1348 = vunpack.c.l.s4 1983009808
    %v1349 = vunpack.c.0.s8 %v1348
    %v1350 = vlaneseq
    %v1351 = vshrl.u32 %v1350, 7
    %v1352 = vsub.s32 %v1349, %v1351
    %v1353 = vrot.slane %v866, %v1352
    %v1355 = vunpack.c.l.s4 1983009808
    %v1356 = vunpack.c.0.s8 %v1355
    %v1357 = vlaneseq
    %v1358 = vshrl.u32 %v1357, 7
    %v1359 = vsub.s32 %v1356, %v1358
    %v1360 = vrot.slane %v1346, %v1359
    %v1361 = vcombine.high %v1353, %v1353
    %v1362 = vcombine.high %v1360, %v1360
    %v1363 = vcombine.high %v867, %v867
    %v1365 = vunpack.c.l.s4 1983009808
    %v1366 = vunpack.c.0.s8 %v1365
    %v1367 = vlaneseq
    %v1368 = vshrl.u32 %v1367, 7
    %v1369 = vsub.s32 %v1366, %v1368
    %v1370 = vrot.slane %v867, %v1369
    %v1372 = vunpack.c.l.s4 1983009808
    %v1373 = vunpack.c.0.s8 %v1372
    %v1374 = vlaneseq
    %v1375 = vshrl.u32 %v1374, 7
    %v1376 = vsub.s32 %v1373, %v1375
    %v1377 = vrot.slane %v1363, %v1376
    %v1378 = vcombine.high %v1370, %v1370
    %v1379 = vcombine.high %v1377, %v1377
    %v1380 = vcombine.high %v868, %v868
    %v1382 = vunpack.c.l.s4 1983009808
    %v1383 = vunpack.c.0.s8 %v1382
    %v1384 = vlaneseq
    %v1385 = vshrl.u32 %v1384, 7
    %v1386 = vsub.s32 %v1383, %v1385
    %v1387 = vrot.slane %v868, %v1386
    %v1389 = vunpack.c.l.s4 1983009808
    %v1390 = vunpack.c.0.s8 %v1389
    %v1391 = vlaneseq
    %v1392 = vshrl.u32 %v1391, 7
    %v1393 = vsub.s32 %v1390, %v1392
    %v1394 = vrot.slane %v1380, %v1393
    %v1395 = vcombine.high %v1387, %v1387
    %v1396 = vcombine.high %v1394, %v1394
    %v1397 = vcombine.high %v869, %v869
    %v1399 = vunpack.c.l.s4 1983009808
    %v1400 = vunpack.c.0.s8 %v1399
    %v1401 = vlaneseq
    %v1402 = vshrl.u32 %v1401, 7
    %v1403 = vsub.s32 %v1400, %v1402
    %v1404 = vrot.slane %v869, %v1403
    %v1406 = vunpack.c.l.s4 1983009808
    %v1407 = vunpack.c.0.s8 %v1406
    %v1408 = vlaneseq
    %v1409 = vshrl.u32 %v1408, 7
    %v1410 = vsub.s32 %v1407, %v1409
    %v1411 = vrot.slane %v1397, %v1410
    %v1412 = vcombine.high %v1404, %v1404
    %v1413 = vcombine.high %v1411, %v1411
    %v1414 = vcombine.high %v870, %v870
    %v1416 = vunpack.c.l.s4 1983009808
    %v1417 = vunpack.c.0.s8 %v1416
    %v1418 = vlaneseq
    %v1419 = vshrl.u32 %v1418, 7
    %v1420 = vsub.s32 %v1417, %v1419
    %v1421 = vrot.slane %v870, %v1420
    %v1423 = vunpack.c.l.s4 1983009808
    %v1424 = vunpack.c.0.s8 %v1423
    %v1425 = vlaneseq
    %v1426 = vshrl.u32 %v1425, 7
    %v1427 = vsub.s32 %v1424, %v1426
    %v1428 = vrot.slane %v1414, %v1427
    %v1429 = vcombine.high %v1421, %v1421
    %v1430 = vcombine.high %v1428, %v1428
    %v1431 = vcombine.high %v871, %v871
    %v1433 = vunpack.c.l.s4 1983009808
    %v1434 = vunpack.c.0.s8 %v1433
    %v1435 = vlaneseq
    %v1436 = vshrl.u32 %v1435, 7
    %v1437 = vsub.s32 %v1434, %v1436
    %v1438 = vrot.slane %v871, %v1437
    %v1440 = vunpack.c.l.s4 1983009808
    %v1441 = vunpack.c.0.s8 %v1440
    %v1442 = vlaneseq
    %v1443 = vshrl.u32 %v1442, 7
    %v1444 = vsub.s32 %v1441, %v1443
    %v1445 = vrot.slane %v1431, %v1444
    %v1446 = vcombine.high %v1438, %v1438
    %v1447 = vcombine.high %v1445, %v1445
    %v1576 = vrot.slane %v911, 7
    %v1577 = vrot.slane %v1576, 2
    %v1578 = vrot.slane %v919, 7
    %v1579 = vrot.slane %v1578, 2
    %v1580 = vrot.slane %v918, 7
    %v1581 = vrot.slane %v1580, 2
    %v1582 = vrot.slane %v920, 7
    %v1583 = vrot.slane %v1582, 2
    %v1584 = vrot.slane %v928, 7
    %v1585 = vrot.slane %v1584, 2
    %v1586 = vrot.slane %v936, 7
    %v1587 = vrot.slane %v1586, 2
    %v1588 = vrot.slane %v935, 7
    %v1589 = vrot.slane %v1588, 2
    %v1590 = vrot.slane %v937, 7
    %v1591 = vrot.slane %v1590, 2
    %v1592 = vrot.slane %v945, 7
    %v1593 = vrot.slane %v1592, 2
    %v1594 = vrot.slane %v953, 7
    %v1595 = vrot.slane %v1594, 2
    %v1596 = vrot.slane %v952, 7
    %v1597 = vrot.slane %v1596, 2
    %v1598 = vrot.slane %v954, 7
    %v1599 = vrot.slane %v1598, 2
    %v1600 = vrot.slane %v962, 7
    %v1601 = vrot.slane %v1600, 2
    %v1602 = vrot.slane %v970, 7
    %v1603 = vrot.slane %v1602, 2
    %v1604 = vrot.slane %v969, 7
    %v1605 = vrot.slane %v1604, 2
    %v1606 = vrot.slane %v971, 7
    %v1607 = vrot.slane %v1606, 2
    %v1608 = vrot.slane %v979, 7
    %v1609 = vrot.slane %v1608, 2
    %v1610 = vrot.slane %v987, 7
    %v1611 = vrot.slane %v1610, 2
    %v1612 = vrot.slane %v986, 7
    %v1613 = vrot.slane %v1612, 2
    %v1614 = vrot.slane %v988, 7
    %v1615 = vrot.slane %v1614, 2
    %v1616 = vrot.slane %v996, 7
    %v1617 = vrot.slane %v1616, 2
    %v1618 = vrot.slane %v1004, 7
    %v1619 = vrot.slane %v1618, 2
    %v1620 = vrot.slane %v1003, 7
    %v1621 = vrot.slane %v1620, 2
    %v1622 = vrot.slane %v1005, 7
    %v1623 = vrot.slane %v1622, 2
    %v1624 = vrot.slane %v1013, 7
    %v1625 = vrot.slane %v1624, 2
    %v1626 = vrot.slane %v1021, 7
    %v1627 = vrot.slane %v1626, 2
    %v1628 = vrot.slane %v1020, 7
    %v1629 = vrot.slane %v1628, 2
    %v1630 = vrot.slane %v1022, 7
    %v1631 = vrot.slane %v1630, 2
    %v1632 = vrot.slane %v1030, 7
    %v1633 = vrot.slane %v1632, 2
    %v1634 = vrot.slane %v1038, 7
    %v1635 = vrot.slane %v1634, 2
    %v1636 = vrot.slane %v1037, 7
    %v1637 = vrot.slane %v1636, 2
    %v1638 = vrot.slane %v1039, 7
    %v1639 = vrot.slane %v1638, 2
    %v1640 = vrot.slane %v1047, 7
    %v1641 = vrot.slane %v1640, 2
    %v1642 = vrot.slane %v1055, 7
    %v1643 = vrot.slane %v1642, 2
    %v1644 = vrot.slane %v1054, 7
    %v1645 = vrot.slane %v1644, 2
    %v1646 = vrot.slane %v1056, 7
    %v1647 = vrot.slane %v1646, 2
    %v1648 = vrot.slane %v1064, 7
    %v1649 = vrot.slane %v1648, 2
    %v1650 = vrot.slane %v1072, 7
    %v1651 = vrot.slane %v1650, 2
    %v1652 = vrot.slane %v1071, 7
    %v1653 = vrot.slane %v1652, 2
    %v1654 = vrot.slane %v1073, 7
    %v1655 = vrot.slane %v1654, 2
    %v1656 = vrot.slane %v1081, 7
    %v1657 = vrot.slane %v1656, 2
    %v1658 = vrot.slane %v1089, 7
    %v1659 = vrot.slane %v1658, 2
    %v1660 = vrot.slane %v1088, 7
    %v1661 = vrot.slane %v1660, 2
    %v1662 = vrot.slane %v1090, 7
    %v1663 = vrot.slane %v1662, 2
    %v1664 = vrot.slane %v1098, 7
    %v1665 = vrot.slane %v1664, 2
    %v1666 = vrot.slane %v1106, 7
    %v1667 = vrot.slane %v1666, 2
    %v1668 = vrot.slane %v1105, 7
    %v1669 = vrot.slane %v1668, 2
    %v1670 = vrot.slane %v1107, 7
    %v1671 = vrot.slane %v1670, 2
    %v1672 = vrot.slane %v1115, 7
    %v1673 = vrot.slane %v1672, 2
    %v1674 = vrot.slane %v1123, 7
    %v1675 = vrot.slane %v1674, 2
    %v1676 = vrot.slane %v1122, 7
    %v1677 = vrot.slane %v1676, 2
    %v1678 = vrot.slane %v1124, 7
    %v1679 = vrot.slane %v1678, 2
    %v1680 = vrot.slane %v1132, 7
    %v1681 = vrot.slane %v1680, 2
    %v1682 = vrot.slane %v1140, 7
    %v1683 = vrot.slane %v1682, 2
    %v1684 = vrot.slane %v1139, 7
    %v1685 = vrot.slane %v1684, 2
    %v1686 = vrot.slane %v1141, 7
    %v1687 = vrot.slane %v1686, 2
    %v1688 = vrot.slane %v1149, 7
    %v1689 = vrot.slane %v1688, 2
    %v1690 = vrot.slane %v1157, 7
    %v1691 = vrot.slane %v1690, 2
    %v1692 = vrot.slane %v1156, 7
    %v1693 = vrot.slane %v1692, 2
    %v1694 = vrot.slane %v1158, 7
    %v1695 = vrot.slane %v1694, 2
    %v1696 = vrot.slane %v1166, 7
    %v1697 = vrot.slane %v1696, 2
    %v1698 = vrot.slane %v1174, 7
    %v1699 = vrot.slane %v1698, 2
    %v1700 = vrot.slane %v1173, 7
    %v1701 = vrot.slane %v1700, 2
    %v1702 = vrot.slane %v1175, 7
    %v1703 = vrot.slane %v1702, 2
    %v1704 = vrot.slane %v1183, 7
    %v1705 = vrot.slane %v1704, 2
    %v1706 = vrot.slane %v1191, 7
    %v1707 = vrot.slane %v1706, 2
    %v1708 = vrot.slane %v1190, 7
    %v1709 = vrot.slane %v1708, 2
    %v1710 = vrot.slane %v1192, 7
    %v1711 = vrot.slane %v1710, 2
    %v1712 = vrot.slane %v1200, 7
    %v1713 = vrot.slane %v1712, 2
    %v1714 = vrot.slane %v1208, 7
    %v1715 = vrot.slane %v1714, 2
    %v1716 = vrot.slane %v1207, 7
    %v1717 = vrot.slane %v1716, 2
    %v1718 = vrot.slane %v1209, 7
    %v1719 = vrot.slane %v1718, 2
    %v1720 = vrot.slane %v1217, 7
    %v1721 = vrot.slane %v1720, 2
    %v1722 = vrot.slane %v1225, 7
    %v1723 = vrot.slane %v1722, 2
    %v1724 = vrot.slane %v1224, 7
    %v1725 = vrot.slane %v1724, 2
    %v1726 = vrot.slane %v1226, 7
    %v1727 = vrot.slane %v1726, 2
    %v1728 = vrot.slane %v1234, 7
    %v1729 = vrot.slane %v1728, 2
    %v1730 = vrot.slane %v1242, 7
    %v1731 = vrot.slane %v1730, 2
    %v1732 = vrot.slane %v1241, 7
    %v1733 = vrot.slane %v1732, 2
    %v1734 = vrot.slane %v1243, 7
    %v1735 = vrot.slane %v1734, 2
    %v1736 = vrot.slane %v1251, 7
    %v1737 = vrot.slane %v1736, 2
    %v1738 = vrot.slane %v1259, 7
    %v1739 = vrot.slane %v1738, 2
    %v1740 = vrot.slane %v1258, 7
    %v1741 = vrot.slane %v1740, 2
    %v1742 = vrot.slane %v1260, 7
    %v1743 = vrot.slane %v1742, 2
    %v1744 = vrot.slane %v1268, 7
    %v1745 = vrot.slane %v1744, 2
    %v1746 = vrot.slane %v1276, 7
    %v1747 = vrot.slane %v1746, 2
    %v1748 = vrot.slane %v1275, 7
    %v1749 = vrot.slane %v1748, 2
    %v1750 = vrot.slane %v1277, 7
    %v1751 = vrot.slane %v1750, 2
    %v1752 = vrot.slane %v1285, 7
    %v1753 = vrot.slane %v1752, 2
    %v1754 = vrot.slane %v1293, 7
    %v1755 = vrot.slane %v1754, 2
    %v1756 = vrot.slane %v1292, 7
    %v1757 = vrot.slane %v1756, 2
    %v1758 = vrot.slane %v1294, 7
    %v1759 = vrot.slane %v1758, 2
    %v1760 = vrot.slane %v1302, 7
    %v1761 = vrot.slane %v1760, 2
    %v1762 = vrot.slane %v1310, 7
    %v1763 = vrot.slane %v1762, 2
    %v1764 = vrot.slane %v1309, 7
    %v1765 = vrot.slane %v1764, 2
    %v1766 = vrot.slane %v1311, 7
    %v1767 = vrot.slane %v1766, 2
    %v1768 = vrot.slane %v1319, 7
    %v1769 = vrot.slane %v1768, 2
    %v1770 = vrot.slane %v1327, 7
    %v1771 = vrot.slane %v1770, 2
    %v1772 = vrot.slane %v1326, 7
    %v1773 = vrot.slane %v1772, 2
    %v1774 = vrot.slane %v1328, 7
    %v1775 = vrot.slane %v1774, 2
    %v1776 = vrot.slane %v1336, 7
    %v1777 = vrot.slane %v1776, 2
    %v1778 = vrot.slane %v1344, 7
    %v1779 = vrot.slane %v1778, 2
    %v1780 = vrot.slane %v1343, 7
    %v1781 = vrot.slane %v1780, 2
    %v1782 = vrot.slane %v1345, 7
    %v1783 = vrot.slane %v1782, 2
    %v1784 = vrot.slane %v1353, 7
    %v1785 = vrot.slane %v1784, 2
    %v1786 = vrot.slane %v1361, 7
    %v1787 = vrot.slane %v1786, 2
    %v1788 = vrot.slane %v1360, 7
    %v1789 = vrot.slane %v1788, 2
    %v1790 = vrot.slane %v1362, 7
    %v1791 = vrot.slane %v1790, 2
    %v1792 = vrot.slane %v1370, 7
    %v1793 = vrot.slane %v1792, 2
    %v1794 = vrot.slane %v1378, 7
    %v1795 = vrot.slane %v1794, 2
    %v1796 = vrot.slane %v1377, 7
    %v1797 = vrot.slane %v1796, 2
    %v1798 = vrot.slane %v1379, 7
    %v1799 = vrot.slane %v1798, 2
    %v1800 = vrot.slane %v1387, 7
    %v1801 = vrot.slane %v1800, 2
    %v1802 = vrot.slane %v1395, 7
    %v1803 = vrot.slane %v1802, 2
    %v1804 = vrot.slane %v1394, 7
    %v1805 = vrot.slane %v1804, 2
    %v1806 = vrot.slane %v1396, 7
    %v1807 = vrot.slane %v1806, 2
    %v1808 = vrot.slane %v1404, 7
    %v1809 = vrot.slane %v1808, 2
    %v1810 = vrot.slane %v1412, 7
    %v1811 = vrot.slane %v1810, 2
    %v1812 = vrot.slane %v1411, 7
    %v1813 = vrot.slane %v1812, 2
    %v1814 = vrot.slane %v1413, 7
    %v1815 = vrot.slane %v1814, 2
    %v1816 = vrot.slane %v1421, 7
    %v1817 = vrot.slane %v1816, 2
    %v1818 = vrot.slane %v1429, 7
    %v1819 = vrot.slane %v1818, 2
    %v1820 = vrot.slane %v1428, 7
    %v1821 = vrot.slane %v1820, 2
    %v1822 = vrot.slane %v1430, 7
    %v1823 = vrot.slane %v1822, 2
    %v1824 = vrot.slane %v1438, 7
    %v1825 = vrot.slane %v1824, 2
    %v1826 = vrot.slane %v1446, 7
    %v1827 = vrot.slane %v1826, 2
    %v1828 = vrot.slane %v1445, 7
    %v1829 = vrot.slane %v1828, 2
    %v1830 = vrot.slane %v1447, 7
    %v1831 = vrot.slane %v1830, 2
    %v1960 = vmax.f32 %v911, %v1577
    %v1961 = vmax.f32 %v919, %v1579
    %v1962 = vmax.f32 %v918, %v1581
    %v1963 = vmax.f32 %v920, %v1583
    %v1964 = vmax.f32 %v928, %v1585
    %v1965 = vmax.f32 %v936, %v1587
    %v1966 = vmax.f32 %v935, %v1589
    %v1967 = vmax.f32 %v937, %v1591
    %v1968 = vmax.f32 %v945, %v1593
    %v1969 = vmax.f32 %v953, %v1595
    %v1970 = vmax.f32 %v952, %v1597
    %v1971 = vmax.f32 %v954, %v1599
    %v1972 = vmax.f32 %v962, %v1601
    %v1973 = vmax.f32 %v970, %v1603
    %v1974 = vmax.f32 %v969, %v1605
    %v1975 = vmax.f32 %v971, %v1607
    %v1976 = vmax.f32 %v979, %v1609
    %v1977 = vmax.f32 %v987, %v1611
    %v1978 = vmax.f32 %v986, %v1613
    %v1979 = vmax.f32 %v988, %v1615
    %v1980 = vmax.f32 %v996, %v1617
    %v1981 = vmax.f32 %v1004, %v1619
    %v1982 = vmax.f32 %v1003, %v1621
    %v1983 = vmax.f32 %v1005, %v1623
    %v1984 = vmax.f32 %v1013, %v1625
    %v1985 = vmax.f32 %v1021, %v1627
    %v1986 = vmax.f32 %v1020, %v1629
    %v1987 = vmax.f32 %v1022, %v1631
    %v1988 = vmax.f32 %v1030, %v1633
    %v1989 = vmax.f32 %v1038, %v1635
    %v1990 = vmax.f32 %v1037, %v1637
    %v1991 = vmax.f32 %v1039, %v1639
    %v1992 = vmax.f32 %v1047, %v1641
    %v1993 = vmax.f32 %v1055, %v1643
    %v1994 = vmax.f32 %v1054, %v1645
    %v1995 = vmax.f32 %v1056, %v1647
    %v1996 = vmax.f32 %v1064, %v1649
    %v1997 = vmax.f32 %v1072, %v1651
    %v1998 = vmax.f32 %v1071, %v1653
    %v1999 = vmax.f32 %v1073, %v1655
    %v2000 = vmax.f32 %v1081, %v1657
    %v2001 = vmax.f32 %v1089, %v1659
    %v2002 = vmax.f32 %v1088, %v1661
    %v2003 = vmax.f32 %v1090, %v1663
    %v2004 = vmax.f32 %v1098, %v1665
    %v2005 = vmax.f32 %v1106, %v1667
    %v2006 = vmax.f32 %v1105, %v1669
    %v2007 = vmax.f32 %v1107, %v1671
    %v2008 = vmax.f32 %v1115, %v1673
    %v2009 = vmax.f32 %v1123, %v1675
    %v2010 = vmax.f32 %v1122, %v1677
    %v2011 = vmax.f32 %v1124, %v1679
    %v2012 = vmax.f32 %v1132, %v1681
    %v2013 = vmax.f32 %v1140, %v1683
    %v2014 = vmax.f32 %v1139, %v1685
    %v2015 = vmax.f32 %v1141, %v1687
    %v2016 = vmax.f32 %v1149, %v1689
    %v2017 = vmax.f32 %v1157, %v1691
    %v2018 = vmax.f32 %v1156, %v1693
    %v2019 = vmax.f32 %v1158, %v1695
    %v2020 = vmax.f32 %v1166, %v1697
    %v2021 = vmax.f32 %v1174, %v1699
    %v2022 = vmax.f32 %v1173, %v1701
    %v2023 = vmax.f32 %v1175, %v1703
    %v2024 = vmax.f32 %v1183, %v1705
    %v2025 = vmax.f32 %v1191, %v1707
    %v2026 = vmax.f32 %v1190, %v1709
    %v2027 = vmax.f32 %v1192, %v1711
    %v2028 = vmax.f32 %v1200, %v1713
    %v2029 = vmax.f32 %v1208, %v1715
    %v2030 = vmax.f32 %v1207, %v1717
    %v2031 = vmax.f32 %v1209, %v1719
    %v2032 = vmax.f32 %v1217, %v1721
    %v2033 = vmax.f32 %v1225, %v1723
    %v2034 = vmax.f32 %v1224, %v1725
    %v2035 = vmax.f32 %v1226, %v1727
    %v2036 = vmax.f32 %v1234, %v1729
    %v2037 = vmax.f32 %v1242, %v1731
    %v2038 = vmax.f32 %v1241, %v1733
    %v2039 = vmax.f32 %v1243, %v1735
    %v2040 = vmax.f32 %v1251, %v1737
    %v2041 = vmax.f32 %v1259, %v1739
    %v2042 = vmax.f32 %v1258, %v1741
    %v2043 = vmax.f32 %v1260, %v1743
    %v2044 = vmax.f32 %v1268, %v1745
    %v2045 = vmax.f32 %v1276, %v1747
    %v2046 = vmax.f32 %v1275, %v1749
    %v2047 = vmax.f32 %v1277, %v1751
    %v2048 = vmax.f32 %v1285, %v1753
    %v2049 = vmax.f32 %v1293, %v1755
    %v2050 = vmax.f32 %v1292, %v1757
    %v2051 = vmax.f32 %v1294, %v1759
    %v2052 = vmax.f32 %v1302, %v1761
    %v2053 = vmax.f32 %v1310, %v1763
    %v2054 = vmax.f32 %v1309, %v1765
    %v2055 = vmax.f32 %v1311, %v1767
    %v2056 = vmax.f32 %v1319, %v1769
    %v2057 = vmax.f32 %v1327, %v1771
    %v2058 = vmax.f32 %v1326, %v1773
    %v2059 = vmax.f32 %v1328, %v1775
    %v2060 = vmax.f32 %v1336, %v1777
    %v2061 = vmax.f32 %v1344, %v1779
    %v2062 = vmax.f32 %v1343, %v1781
    %v2063 = vmax.f32 %v1345, %v1783
    %v2064 = vmax.f32 %v1353, %v1785
    %v2065 = vmax.f32 %v1361, %v1787
    %v2066 = vmax.f32 %v1360, %v1789
    %v2067 = vmax.f32 %v1362, %v1791
    %v2068 = vmax.f32 %v1370, %v1793
    %v2069 = vmax.f32 %v1378, %v1795
    %v2070 = vmax.f32 %v1377, %v1797
    %v2071 = vmax.f32 %v1379, %v1799
    %v2072 = vmax.f32 %v1387, %v1801
    %v2073 = vmax.f32 %v1395, %v1803
    %v2074 = vmax.f32 %v1394, %v1805
    %v2075 = vmax.f32 %v1396, %v1807
    %v2076 = vmax.f32 %v1404, %v1809
    %v2077 = vmax.f32 %v1412, %v1811
    %v2078 = vmax.f32 %v1411, %v1813
    %v2079 = vmax.f32 %v1413, %v1815
    %v2080 = vmax.f32 %v1421, %v1817
    %v2081 = vmax.f32 %v1429, %v1819
    %v2082 = vmax.f32 %v1428, %v1821
    %v2083 = vmax.f32 %v1430, %v1823
    %v2084 = vmax.f32 %v1438, %v1825
    %v2085 = vmax.f32 %v1446, %v1827
    %v2086 = vmax.f32 %v1445, %v1829
    %v2087 = vmax.f32 %v1447, %v1831
    %v2216 = vlaneseq
    %v2217 = vshrl.u32 %v2216, 7
    %v2218 = vsub.s32 0, %v2217
    %v2219 = vrot.slane %v1960, %v2218
    %v2220 = vlaneseq
    %v2221 = vshrl.u32 %v2220, 7
    %v2222 = vsub.s32 0, %v2221
    %v2223 = vrot.slane %v1961, %v2222
    %v2224 = vlaneseq
    %v2225 = vshrl.u32 %v2224, 7
    %v2226 = vsub.s32 0, %v2225
    %v2227 = vrot.slane %v1962, %v2226
    %v2228 = vlaneseq
    %v2229 = vshrl.u32 %v2228, 7
    %v2230 = vsub.s32 0, %v2229
    %v2231 = vrot.slane %v1963, %v2230
    %v2232 = vlaneseq
    %v2233 = vshrl.u32 %v2232, 7
    %v2234 = vsub.s32 0, %v2233
    %v2235 = vrot.slane %v1964, %v2234
    %v2236 = vlaneseq
    %v2237 = vshrl.u32 %v2236, 7
    %v2238 = vsub.s32 0, %v2237
    %v2239 = vrot.slane %v1965, %v2238
    %v2240 = vlaneseq
    %v2241 = vshrl.u32 %v2240, 7
    %v2242 = vsub.s32 0, %v2241
    %v2243 = vrot.slane %v1966, %v2242
    %v2244 = vlaneseq
    %v2245 = vshrl.u32 %v2244, 7
    %v2246 = vsub.s32 0, %v2245
    %v2247 = vrot.slane %v1967, %v2246
    %v2248 = vlaneseq
    %v2249 = vshrl.u32 %v2248, 7
    %v2250 = vsub.s32 0, %v2249
    %v2251 = vrot.slane %v1968, %v2250
    %v2252 = vlaneseq
    %v2253 = vshrl.u32 %v2252, 7
    %v2254 = vsub.s32 0, %v2253
    %v2255 = vrot.slane %v1969, %v2254
    %v2256 = vlaneseq
    %v2257 = vshrl.u32 %v2256, 7
    %v2258 = vsub.s32 0, %v2257
    %v2259 = vrot.slane %v1970, %v2258
    %v2260 = vlaneseq
    %v2261 = vshrl.u32 %v2260, 7
    %v2262 = vsub.s32 0, %v2261
    %v2263 = vrot.slane %v1971, %v2262
    %v2264 = vlaneseq
    %v2265 = vshrl.u32 %v2264, 7
    %v2266 = vsub.s32 0, %v2265
    %v2267 = vrot.slane %v1972, %v2266
    %v2268 = vlaneseq
    %v2269 = vshrl.u32 %v2268, 7
    %v2270 = vsub.s32 0, %v2269
    %v2271 = vrot.slane %v1973, %v2270
    %v2272 = vlaneseq
    %v2273 = vshrl.u32 %v2272, 7
    %v2274 = vsub.s32 0, %v2273
    %v2275 = vrot.slane %v1974, %v2274
    %v2276 = vlaneseq
    %v2277 = vshrl.u32 %v2276, 7
    %v2278 = vsub.s32 0, %v2277
    %v2279 = vrot.slane %v1975, %v2278
    %v2280 = vlaneseq
    %v2281 = vshrl.u32 %v2280, 7
    %v2282 = vsub.s32 0, %v2281
    %v2283 = vrot.slane %v1976, %v2282
    %v2284 = vlaneseq
    %v2285 = vshrl.u32 %v2284, 7
    %v2286 = vsub.s32 0, %v2285
    %v2287 = vrot.slane %v1977, %v2286
    %v2288 = vlaneseq
    %v2289 = vshrl.u32 %v2288, 7
    %v2290 = vsub.s32 0, %v2289
    %v2291 = vrot.slane %v1978, %v2290
    %v2292 = vlaneseq
    %v2293 = vshrl.u32 %v2292, 7
    %v2294 = vsub.s32 0, %v2293
    %v2295 = vrot.slane %v1979, %v2294
    %v2296 = vlaneseq
    %v2297 = vshrl.u32 %v2296, 7
    %v2298 = vsub.s32 0, %v2297
    %v2299 = vrot.slane %v1980, %v2298
    %v2300 = vlaneseq
    %v2301 = vshrl.u32 %v2300, 7
    %v2302 = vsub.s32 0, %v2301
    %v2303 = vrot.slane %v1981, %v2302
    %v2304 = vlaneseq
    %v2305 = vshrl.u32 %v2304, 7
    %v2306 = vsub.s32 0, %v2305
    %v2307 = vrot.slane %v1982, %v2306
    %v2308 = vlaneseq
    %v2309 = vshrl.u32 %v2308, 7
    %v2310 = vsub.s32 0, %v2309
    %v2311 = vrot.slane %v1983, %v2310
    %v2312 = vlaneseq
    %v2313 = vshrl.u32 %v2312, 7
    %v2314 = vsub.s32 0, %v2313
    %v2315 = vrot.slane %v1984, %v2314
    %v2316 = vlaneseq
    %v2317 = vshrl.u32 %v2316, 7
    %v2318 = vsub.s32 0, %v2317
    %v2319 = vrot.slane %v1985, %v2318
    %v2320 = vlaneseq
    %v2321 = vshrl.u32 %v2320, 7
    %v2322 = vsub.s32 0, %v2321
    %v2323 = vrot.slane %v1986, %v2322
    %v2324 = vlaneseq
    %v2325 = vshrl.u32 %v2324, 7
    %v2326 = vsub.s32 0, %v2325
    %v2327 = vrot.slane %v1987, %v2326
    %v2328 = vlaneseq
    %v2329 = vshrl.u32 %v2328, 7
    %v2330 = vsub.s32 0, %v2329
    %v2331 = vrot.slane %v1988, %v2330
    %v2332 = vlaneseq
    %v2333 = vshrl.u32 %v2332, 7
    %v2334 = vsub.s32 0, %v2333
    %v2335 = vrot.slane %v1989, %v2334
    %v2336 = vlaneseq
    %v2337 = vshrl.u32 %v2336, 7
    %v2338 = vsub.s32 0, %v2337
    %v2339 = vrot.slane %v1990, %v2338
    %v2340 = vlaneseq
    %v2341 = vshrl.u32 %v2340, 7
    %v2342 = vsub.s32 0, %v2341
    %v2343 = vrot.slane %v1991, %v2342
    %v2344 = vlaneseq
    %v2345 = vshrl.u32 %v2344, 7
    %v2346 = vsub.s32 0, %v2345
    %v2347 = vrot.slane %v1992, %v2346
    %v2348 = vlaneseq
    %v2349 = vshrl.u32 %v2348, 7
    %v2350 = vsub.s32 0, %v2349
    %v2351 = vrot.slane %v1993, %v2350
    %v2352 = vlaneseq
    %v2353 = vshrl.u32 %v2352, 7
    %v2354 = vsub.s32 0, %v2353
    %v2355 = vrot.slane %v1994, %v2354
    %v2356 = vlaneseq
    %v2357 = vshrl.u32 %v2356, 7
    %v2358 = vsub.s32 0, %v2357
    %v2359 = vrot.slane %v1995, %v2358
    %v2360 = vlaneseq
    %v2361 = vshrl.u32 %v2360, 7
    %v2362 = vsub.s32 0, %v2361
    %v2363 = vrot.slane %v1996, %v2362
    %v2364 = vlaneseq
    %v2365 = vshrl.u32 %v2364, 7
    %v2366 = vsub.s32 0, %v2365
    %v2367 = vrot.slane %v1997, %v2366
    %v2368 = vlaneseq
    %v2369 = vshrl.u32 %v2368, 7
    %v2370 = vsub.s32 0, %v2369
    %v2371 = vrot.slane %v1998, %v2370
    %v2372 = vlaneseq
    %v2373 = vshrl.u32 %v2372, 7
    %v2374 = vsub.s32 0, %v2373
    %v2375 = vrot.slane %v1999, %v2374
    %v2376 = vlaneseq
    %v2377 = vshrl.u32 %v2376, 7
    %v2378 = vsub.s32 0, %v2377
    %v2379 = vrot.slane %v2000, %v2378
    %v2380 = vlaneseq
    %v2381 = vshrl.u32 %v2380, 7
    %v2382 = vsub.s32 0, %v2381
    %v2383 = vrot.slane %v2001, %v2382
    %v2384 = vlaneseq
    %v2385 = vshrl.u32 %v2384, 7
    %v2386 = vsub.s32 0, %v2385
    %v2387 = vrot.slane %v2002, %v2386
    %v2388 = vlaneseq
    %v2389 = vshrl.u32 %v2388, 7
    %v2390 = vsub.s32 0, %v2389
    %v2391 = vrot.slane %v2003, %v2390
    %v2392 = vlaneseq
    %v2393 = vshrl.u32 %v2392, 7
    %v2394 = vsub.s32 0, %v2393
    %v2395 = vrot.slane %v2004, %v2394
    %v2396 = vlaneseq
    %v2397 = vshrl.u32 %v2396, 7
    %v2398 = vsub.s32 0, %v2397
    %v2399 = vrot.slane %v2005, %v2398
    %v2400 = vlaneseq
    %v2401 = vshrl.u32 %v2400, 7
    %v2402 = vsub.s32 0, %v2401
    %v2403 = vrot.slane %v2006, %v2402
    %v2404 = vlaneseq
    %v2405 = vshrl.u32 %v2404, 7
    %v2406 = vsub.s32 0, %v2405
    %v2407 = vrot.slane %v2007, %v2406
    %v2408 = vlaneseq
    %v2409 = vshrl.u32 %v2408, 7
    %v2410 = vsub.s32 0, %v2409
    %v2411 = vrot.slane %v2008, %v2410
    %v2412 = vlaneseq
    %v2413 = vshrl.u32 %v2412, 7
    %v2414 = vsub.s32 0, %v2413
    %v2415 = vrot.slane %v2009, %v2414
    %v2416 = vlaneseq
    %v2417 = vshrl.u32 %v2416, 7
    %v2418 = vsub.s32 0, %v2417
    %v2419 = vrot.slane %v2010, %v2418
    %v2420 = vlaneseq
    %v2421 = vshrl.u32 %v2420, 7
    %v2422 = vsub.s32 0, %v2421
    %v2423 = vrot.slane %v2011, %v2422
    %v2424 = vlaneseq
    %v2425 = vshrl.u32 %v2424, 7
    %v2426 = vsub.s32 0, %v2425
    %v2427 = vrot.slane %v2012, %v2426
    %v2428 = vlaneseq
    %v2429 = vshrl.u32 %v2428, 7
    %v2430 = vsub.s32 0, %v2429
    %v2431 = vrot.slane %v2013, %v2430
    %v2432 = vlaneseq
    %v2433 = vshrl.u32 %v2432, 7
    %v2434 = vsub.s32 0, %v2433
    %v2435 = vrot.slane %v2014, %v2434
    %v2436 = vlaneseq
    %v2437 = vshrl.u32 %v2436, 7
    %v2438 = vsub.s32 0, %v2437
    %v2439 = vrot.slane %v2015, %v2438
    %v2440 = vlaneseq
    %v2441 = vshrl.u32 %v2440, 7
    %v2442 = vsub.s32 0, %v2441
    %v2443 = vrot.slane %v2016, %v2442
    %v2444 = vlaneseq
    %v2445 = vshrl.u32 %v2444, 7
    %v2446 = vsub.s32 0, %v2445
    %v2447 = vrot.slane %v2017, %v2446
    %v2448 = vlaneseq
    %v2449 = vshrl.u32 %v2448, 7
    %v2450 = vsub.s32 0, %v2449
    %v2451 = vrot.slane %v2018, %v2450
    %v2452 = vlaneseq
    %v2453 = vshrl.u32 %v2452, 7
    %v2454 = vsub.s32 0, %v2453
    %v2455 = vrot.slane %v2019, %v2454
    %v2456 = vlaneseq
    %v2457 = vshrl.u32 %v2456, 7
    %v2458 = vsub.s32 0, %v2457
    %v2459 = vrot.slane %v2020, %v2458
    %v2460 = vlaneseq
    %v2461 = vshrl.u32 %v2460, 7
    %v2462 = vsub.s32 0, %v2461
    %v2463 = vrot.slane %v2021, %v2462
    %v2464 = vlaneseq
    %v2465 = vshrl.u32 %v2464, 7
    %v2466 = vsub.s32 0, %v2465
    %v2467 = vrot.slane %v2022, %v2466
    %v2468 = vlaneseq
    %v2469 = vshrl.u32 %v2468, 7
    %v2470 = vsub.s32 0, %v2469
    %v2471 = vrot.slane %v2023, %v2470
    %v2472 = vlaneseq
    %v2473 = vshrl.u32 %v2472, 7
    %v2474 = vsub.s32 0, %v2473
    %v2475 = vrot.slane %v2024, %v2474
    %v2476 = vlaneseq
    %v2477 = vshrl.u32 %v2476, 7
    %v2478 = vsub.s32 0, %v2477
    %v2479 = vrot.slane %v2025, %v2478
    %v2480 = vlaneseq
    %v2481 = vshrl.u32 %v2480, 7
    %v2482 = vsub.s32 0, %v2481
    %v2483 = vrot.slane %v2026, %v2482
    %v2484 = vlaneseq
    %v2485 = vshrl.u32 %v2484, 7
    %v2486 = vsub.s32 0, %v2485
    %v2487 = vrot.slane %v2027, %v2486
    %v2488 = vlaneseq
    %v2489 = vshrl.u32 %v2488, 7
    %v2490 = vsub.s32 0, %v2489
    %v2491 = vrot.slane %v2028, %v2490
    %v2492 = vlaneseq
    %v2493 = vshrl.u32 %v2492, 7
    %v2494 = vsub.s32 0, %v2493
    %v2495 = vrot.slane %v2029, %v2494
    %v2496 = vlaneseq
    %v2497 = vshrl.u32 %v2496, 7
    %v2498 = vsub.s32 0, %v2497
    %v2499 = vrot.slane %v2030, %v2498
    %v2500 = vlaneseq
    %v2501 = vshrl.u32 %v2500, 7
    %v2502 = vsub.s32 0, %v2501
    %v2503 = vrot.slane %v2031, %v2502
    %v2504 = vlaneseq
    %v2505 = vshrl.u32 %v2504, 7
    %v2506 = vsub.s32 0, %v2505
    %v2507 = vrot.slane %v2032, %v2506
    %v2508 = vlaneseq
    %v2509 = vshrl.u32 %v2508, 7
    %v2510 = vsub.s32 0, %v2509
    %v2511 = vrot.slane %v2033, %v2510
    %v2512 = vlaneseq
    %v2513 = vshrl.u32 %v2512, 7
    %v2514 = vsub.s32 0, %v2513
    %v2515 = vrot.slane %v2034, %v2514
    %v2516 = vlaneseq
    %v2517 = vshrl.u32 %v2516, 7
    %v2518 = vsub.s32 0, %v2517
    %v2519 = vrot.slane %v2035, %v2518
    %v2520 = vlaneseq
    %v2521 = vshrl.u32 %v2520, 7
    %v2522 = vsub.s32 0, %v2521
    %v2523 = vrot.slane %v2036, %v2522
    %v2524 = vlaneseq
    %v2525 = vshrl.u32 %v2524, 7
    %v2526 = vsub.s32 0, %v2525
    %v2527 = vrot.slane %v2037, %v2526
    %v2528 = vlaneseq
    %v2529 = vshrl.u32 %v2528, 7
    %v2530 = vsub.s32 0, %v2529
    %v2531 = vrot.slane %v2038, %v2530
    %v2532 = vlaneseq
    %v2533 = vshrl.u32 %v2532, 7
    %v2534 = vsub.s32 0, %v2533
    %v2535 = vrot.slane %v2039, %v2534
    %v2536 = vlaneseq
    %v2537 = vshrl.u32 %v2536, 7
    %v2538 = vsub.s32 0, %v2537
    %v2539 = vrot.slane %v2040, %v2538
    %v2540 = vlaneseq
    %v2541 = vshrl.u32 %v2540, 7
    %v2542 = vsub.s32 0, %v2541
    %v2543 = vrot.slane %v2041, %v2542
    %v2544 = vlaneseq
    %v2545 = vshrl.u32 %v2544, 7
    %v2546 = vsub.s32 0, %v2545
    %v2547 = vrot.slane %v2042, %v2546
    %v2548 = vlaneseq
    %v2549 = vshrl.u32 %v2548, 7
    %v2550 = vsub.s32 0, %v2549
    %v2551 = vrot.slane %v2043, %v2550
    %v2552 = vlaneseq
    %v2553 = vshrl.u32 %v2552, 7
    %v2554 = vsub.s32 0, %v2553
    %v2555 = vrot.slane %v2044, %v2554
    %v2556 = vlaneseq
    %v2557 = vshrl.u32 %v2556, 7
    %v2558 = vsub.s32 0, %v2557
    %v2559 = vrot.slane %v2045, %v2558
    %v2560 = vlaneseq
    %v2561 = vshrl.u32 %v2560, 7
    %v2562 = vsub.s32 0, %v2561
    %v2563 = vrot.slane %v2046, %v2562
    %v2564 = vlaneseq
    %v2565 = vshrl.u32 %v2564, 7
    %v2566 = vsub.s32 0, %v2565
    %v2567 = vrot.slane %v2047, %v2566
    %v2568 = vlaneseq
    %v2569 = vshrl.u32 %v2568, 7
    %v2570 = vsub.s32 0, %v2569
    %v2571 = vrot.slane %v2048, %v2570
    %v2572 = vlaneseq
    %v2573 = vshrl.u32 %v2572, 7
    %v2574 = vsub.s32 0, %v2573
    %v2575 = vrot.slane %v2049, %v2574
    %v2576 = vlaneseq
    %v2577 = vshrl.u32 %v2576, 7
    %v2578 = vsub.s32 0, %v2577
    %v2579 = vrot.slane %v2050, %v2578
    %v2580 = vlaneseq
    %v2581 = vshrl.u32 %v2580, 7
    %v2582 = vsub.s32 0, %v2581
    %v2583 = vrot.slane %v2051, %v2582
    %v2584 = vlaneseq
    %v2585 = vshrl.u32 %v2584, 7
    %v2586 = vsub.s32 0, %v2585
    %v2587 = vrot.slane %v2052, %v2586
    %v2588 = vlaneseq
    %v2589 = vshrl.u32 %v2588, 7
    %v2590 = vsub.s32 0, %v2589
    %v2591 = vrot.slane %v2053, %v2590
    %v2592 = vlaneseq
    %v2593 = vshrl.u32 %v2592, 7
    %v2594 = vsub.s32 0, %v2593
    %v2595 = vrot.slane %v2054, %v2594
    %v2596 = vlaneseq
    %v2597 = vshrl.u32 %v2596, 7
    %v2598 = vsub.s32 0, %v2597
    %v2599 = vrot.slane %v2055, %v2598
    %v2600 = vlaneseq
    %v2601 = vshrl.u32 %v2600, 7
    %v2602 = vsub.s32 0, %v2601
    %v2603 = vrot.slane %v2056, %v2602
    %v2604 = vlaneseq
    %v2605 = vshrl.u32 %v2604, 7
    %v2606 = vsub.s32 0, %v2605
    %v2607 = vrot.slane %v2057, %v2606
    %v2608 = vlaneseq
    %v2609 = vshrl.u32 %v2608, 7
    %v2610 = vsub.s32 0, %v2609
    %v2611 = vrot.slane %v2058, %v2610
    %v2612 = vlaneseq
    %v2613 = vshrl.u32 %v2612, 7
    %v2614 = vsub.s32 0, %v2613
    %v2615 = vrot.slane %v2059, %v2614
    %v2616 = vlaneseq
    %v2617 = vshrl.u32 %v2616, 7
    %v2618 = vsub.s32 0, %v2617
    %v2619 = vrot.slane %v2060, %v2618
    %v2620 = vlaneseq
    %v2621 = vshrl.u32 %v2620, 7
    %v2622 = vsub.s32 0, %v2621
    %v2623 = vrot.slane %v2061, %v2622
    %v2624 = vlaneseq
    %v2625 = vshrl.u32 %v2624, 7
    %v2626 = vsub.s32 0, %v2625
    %v2627 = vrot.slane %v2062, %v2626
    %v2628 = vlaneseq
    %v2629 = vshrl.u32 %v2628, 7
    %v2630 = vsub.s32 0, %v2629
    %v2631 = vrot.slane %v2063, %v2630
    %v2632 = vlaneseq
    %v2633 = vshrl.u32 %v2632, 7
    %v2634 = vsub.s32 0, %v2633
    %v2635 = vrot.slane %v2064, %v2634
    %v2636 = vlaneseq
    %v2637 = vshrl.u32 %v2636, 7
    %v2638 = vsub.s32 0, %v2637
    %v2639 = vrot.slane %v2065, %v2638
    %v2640 = vlaneseq
    %v2641 = vshrl.u32 %v2640, 7
    %v2642 = vsub.s32 0, %v2641
    %v2643 = vrot.slane %v2066, %v2642
    %v2644 = vlaneseq
    %v2645 = vshrl.u32 %v2644, 7
    %v2646 = vsub.s32 0, %v2645
    %v2647 = vrot.slane %v2067, %v2646
    %v2648 = vlaneseq
    %v2649 = vshrl.u32 %v2648, 7
    %v2650 = vsub.s32 0, %v2649
    %v2651 = vrot.slane %v2068, %v2650
    %v2652 = vlaneseq
    %v2653 = vshrl.u32 %v2652, 7
    %v2654 = vsub.s32 0, %v2653
    %v2655 = vrot.slane %v2069, %v2654
    %v2656 = vlaneseq
    %v2657 = vshrl.u32 %v2656, 7
    %v2658 = vsub.s32 0, %v2657
    %v2659 = vrot.slane %v2070, %v2658
    %v2660 = vlaneseq
    %v2661 = vshrl.u32 %v2660, 7
    %v2662 = vsub.s32 0, %v2661
    %v2663 = vrot.slane %v2071, %v2662
    %v2664 = vlaneseq
    %v2665 = vshrl.u32 %v2664, 7
    %v2666 = vsub.s32 0, %v2665
    %v2667 = vrot.slane %v2072, %v2666
    %v2668 = vlaneseq
    %v2669 = vshrl.u32 %v2668, 7
    %v2670 = vsub.s32 0, %v2669
    %v2671 = vrot.slane %v2073, %v2670
    %v2672 = vlaneseq
    %v2673 = vshrl.u32 %v2672, 7
    %v2674 = vsub.s32 0, %v2673
    %v2675 = vrot.slane %v2074, %v2674
    %v2676 = vlaneseq
    %v2677 = vshrl.u32 %v2676, 7
    %v2678 = vsub.s32 0, %v2677
    %v2679 = vrot.slane %v2075, %v2678
    %v2680 = vlaneseq
    %v2681 = vshrl.u32 %v2680, 7
    %v2682 = vsub.s32 0, %v2681
    %v2683 = vrot.slane %v2076, %v2682
    %v2684 = vlaneseq
    %v2685 = vshrl.u32 %v2684, 7
    %v2686 = vsub.s32 0, %v2685
    %v2687 = vrot.slane %v2077, %v2686
    %v2688 = vlaneseq
    %v2689 = vshrl.u32 %v2688, 7
    %v2690 = vsub.s32 0, %v2689
    %v2691 = vrot.slane %v2078, %v2690
    %v2692 = vlaneseq
    %v2693 = vshrl.u32 %v2692, 7
    %v2694 = vsub.s32 0, %v2693
    %v2695 = vrot.slane %v2079, %v2694
    %v2696 = vlaneseq
    %v2697 = vshrl.u32 %v2696, 7
    %v2698 = vsub.s32 0, %v2697
    %v2699 = vrot.slane %v2080, %v2698
    %v2700 = vlaneseq
    %v2701 = vshrl.u32 %v2700, 7
    %v2702 = vsub.s32 0, %v2701
    %v2703 = vrot.slane %v2081, %v2702
    %v2704 = vlaneseq
    %v2705 = vshrl.u32 %v2704, 7
    %v2706 = vsub.s32 0, %v2705
    %v2707 = vrot.slane %v2082, %v2706
    %v2708 = vlaneseq
    %v2709 = vshrl.u32 %v2708, 7
    %v2710 = vsub.s32 0, %v2709
    %v2711 = vrot.slane %v2083, %v2710
    %v2712 = vlaneseq
    %v2713 = vshrl.u32 %v2712, 7
    %v2714 = vsub.s32 0, %v2713
    %v2715 = vrot.slane %v2084, %v2714
    %v2716 = vlaneseq
    %v2717 = vshrl.u32 %v2716, 7
    %v2718 = vsub.s32 0, %v2717
    %v2719 = vrot.slane %v2085, %v2718
    %v2720 = vlaneseq
    %v2721 = vshrl.u32 %v2720, 7
    %v2722 = vsub.s32 0, %v2721
    %v2723 = vrot.slane %v2086, %v2722
    %v2724 = vlaneseq
    %v2725 = vshrl.u32 %v2724, 7
    %v2726 = vsub.s32 0, %v2725
    %v2727 = vrot.slane %v2087, %v2726
    %vm2728 = vcmask 1041409
    %v2729 = vsel %vm2728, %v2223, %v2219
    %vm2730 = vcmask 1042434
    %v2731 = vsel %vm2730, %v2227, %v2729
    %vm2732 = vcmask 1043459
    %v2733 = vsel %vm2732, %v2231, %v2731
    %vm2734 = vcmask 1044484
    %v2735 = vsel %vm2734, %v2235, %v2733
    %vm2736 = vcmask 1045509
    %v2737 = vsel %vm2736, %v2239, %v2735
    %vm2738 = vcmask 1046534
    %v2739 = vsel %vm2738, %v2243, %v2737
    %vm2740 = vcmask 1047559
    %v2741 = vsel %vm2740, %v2247, %v2739
    %v2742 = vsel %vm2728, %v2255, %v2251
    %v2743 = vsel %vm2730, %v2259, %v2742
    %v2744 = vsel %vm2732, %v2263, %v2743
    %v2745 = vsel %vm2734, %v2267, %v2744
    %v2746 = vsel %vm2736, %v2271, %v2745
    %v2747 = vsel %vm2738, %v2275, %v2746
    %v2748 = vsel %vm2740, %v2279, %v2747
    %v2749 = vsel %vm2728, %v2287, %v2283
    %v2750 = vsel %vm2730, %v2291, %v2749
    %v2751 = vsel %vm2732, %v2295, %v2750
    %v2752 = vsel %vm2734, %v2299, %v2751
    %v2753 = vsel %vm2736, %v2303, %v2752
    %v2754 = vsel %vm2738, %v2307, %v2753
    %v2755 = vsel %vm2740, %v2311, %v2754
    %v2756 = vsel %vm2728, %v2319, %v2315
    %v2757 = vsel %vm2730, %v2323, %v2756
    %v2758 = vsel %vm2732, %v2327, %v2757
    %v2759 = vsel %vm2734, %v2331, %v2758
    %v2760 = vsel %vm2736, %v2335, %v2759
    %v2761 = vsel %vm2738, %v2339, %v2760
    %v2762 = vsel %vm2740, %v2343, %v2761
    %v2763 = vsel %vm2728, %v2351, %v2347
    %v2764 = vsel %vm2730, %v2355, %v2763
    %v2765 = vsel %vm2732, %v2359, %v2764
    %v2766 = vsel %vm2734, %v2363, %v2765
    %v2767 = vsel %vm2736, %v2367, %v2766
    %v2768 = vsel %vm2738, %v2371, %v2767
    %v2769 = vsel %vm2740, %v2375, %v2768
    %v2770 = vsel %vm2728, %v2383, %v2379
    %v2771 = vsel %vm2730, %v2387, %v2770
    %v2772 = vsel %vm2732, %v2391, %v2771
    %v2773 = vsel %vm2734, %v2395, %v2772
    %v2774 = vsel %vm2736, %v2399, %v2773
    %v2775 = vsel %vm2738, %v2403, %v2774
    %v2776 = vsel %vm2740, %v2407, %v2775
    %v2777 = vsel %vm2728, %v2415, %v2411
    %v2778 = vsel %vm2730, %v2419, %v2777
    %v2779 = vsel %vm2732, %v2423, %v2778
    %v2780 = vsel %vm2734, %v2427, %v2779
    %v2781 = vsel %vm2736, %v2431, %v2780
    %v2782 = vsel %vm2738, %v2435, %v2781
    %v2783 = vsel %vm2740, %v2439, %v2782
    %v2784 = vsel %vm2728, %v2447, %v2443
    %v2785 = vsel %vm2730, %v2451, %v2784
    %v2786 = vsel %vm2732, %v2455, %v2785
    %v2787 = vsel %vm2734, %v2459, %v2786
    %v2788 = vsel %vm2736, %v2463, %v2787
    %v2789 = vsel %vm2738, %v2467, %v2788
    %v2790 = vsel %vm2740, %v2471, %v2789
    %v2791 = vsel %vm2728, %v2479, %v2475
    %v2792 = vsel %vm2730, %v2483, %v2791
    %v2793 = vsel %vm2732, %v2487, %v2792
    %v2794 = vsel %vm2734, %v2491, %v2793
    %v2795 = vsel %vm2736, %v2495, %v2794
    %v2796 = vsel %vm2738, %v2499, %v2795
    %v2797 = vsel %vm2740, %v2503, %v2796
    %v2798 = vsel %vm2728, %v2511, %v2507
    %v2799 = vsel %vm2730, %v2515, %v2798
    %v2800 = vsel %vm2732, %v2519, %v2799
    %v2801 = vsel %vm2734, %v2523, %v2800
    %v2802 = vsel %vm2736, %v2527, %v2801
    %v2803 = vsel %vm2738, %v2531, %v2802
    %v2804 = vsel %vm2740, %v2535, %v2803
    %v2805 = vsel %vm2728, %v2543, %v2539
    %v2806 = vsel %vm2730, %v2547, %v2805
    %v2807 = vsel %vm2732, %v2551, %v2806
    %v2808 = vsel %vm2734, %v2555, %v2807
    %v2809 = vsel %vm2736, %v2559, %v2808
    %v2810 = vsel %vm2738, %v2563, %v2809
    %v2811 = vsel %vm2740, %v2567, %v2810
    %v2812 = vsel %vm2728, %v2575, %v2571
    %v2813 = vsel %vm2730, %v2579, %v2812
    %v2814 = vsel %vm2732, %v2583, %v2813
    %v2815 = vsel %vm2734, %v2587, %v2814
    %v2816 = vsel %vm2736, %v2591, %v2815
    %v2817 = vsel %vm2738, %v2595, %v2816
    %v2818 = vsel %vm2740, %v2599, %v2817
    %v2819 = vsel %vm2728, %v2607, %v2603
    %v2820 = vsel %vm2730, %v2611, %v2819
    %v2821 = vsel %vm2732, %v2615, %v2820
    %v2822 = vsel %vm2734, %v2619, %v2821
    %v2823 = vsel %vm2736, %v2623, %v2822
    %v2824 = vsel %vm2738, %v2627, %v2823
    %v2825 = vsel %vm2740, %v2631, %v2824
    %v2826 = vsel %vm2728, %v2639, %v2635
    %v2827 = vsel %vm2730, %v2643, %v2826
    %v2828 = vsel %vm2732, %v2647, %v2827
    %v2829 = vsel %vm2734, %v2651, %v2828
    %v2830 = vsel %vm2736, %v2655, %v2829
    %v2831 = vsel %vm2738, %v2659, %v2830
    %v2832 = vsel %vm2740, %v2663, %v2831
    %v2833 = vsel %vm2728, %v2671, %v2667
    %v2834 = vsel %vm2730, %v2675, %v2833
    %v2835 = vsel %vm2732, %v2679, %v2834
    %v2836 = vsel %vm2734, %v2683, %v2835
    %v2837 = vsel %vm2736, %v2687, %v2836
    %v2838 = vsel %vm2738, %v2691, %v2837
    %v2839 = vsel %vm2740, %v2695, %v2838
    %v2840 = vsel %vm2728, %v2703, %v2699
    %v2841 = vsel %vm2730, %v2707, %v2840
    %v2842 = vsel %vm2732, %v2711, %v2841
    %v2843 = vsel %vm2734, %v2715, %v2842
    %v2844 = vsel %vm2736, %v2719, %v2843
    %v2845 = vsel %vm2738, %v2723, %v2844
    %v2846 = vsel %vm2740, %v2727, %v2845
    %s2863 = scalar_lea.vmem [#allocation2], 16
    %vm2864 = vcmask 261120
    %2865 = vst.msk [vmem:[%s2863 + $0x1] sm:$0xff] %vm2864, %v2741
    %2866 = vst.msk [vmem:[%s2863 + $0x11] sm:$0xff] %vm2864, %v2748
    %2867 = vst.msk [vmem:[%s2863 + $0x21] sm:$0xff] %vm2864, %v2755
    %2868 = vst.msk [vmem:[%s2863 + $0x31] sm:$0xff] %vm2864, %v2762
    %2869 = vst.msk [vmem:[%s2863 + $0x41] sm:$0xff] %vm2864, %v2769
    %2870 = vst.msk [vmem:[%s2863 + $0x51] sm:$0xff] %vm2864, %v2776
    %2871 = vst.msk [vmem:[%s2863 + $0x61] sm:$0xff] %vm2864, %v2783
    %2872 = vst.msk [vmem:[%s2863 + $0x71] sm:$0xff] %vm2864, %v2790
    %2873 = vst.msk [vmem:[%s2863 + $0xa1] sm:$0xff] %vm2864, %v2797
    %2874 = vst.msk [vmem:[%s2863 + $0xb1] sm:$0xff] %vm2864, %v2804
    %2875 = vst.msk [vmem:[%s2863 + $0xc1] sm:$0xff] %vm2864, %v2811
    %2876 = vst.msk [vmem:[%s2863 + $0xd1] sm:$0xff] %vm2864, %v2818
    %2877 = vst.msk [vmem:[%s2863 + $0xe1] sm:$0xff] %vm2864, %v2825
    %2878 = vst.msk [vmem:[%s2863 + $0xf1] sm:$0xff] %vm2864, %v2832
    %2879 = vst.msk [vmem:[%s2863 + $0x101] sm:$0xff] %vm2864, %v2839
    %2880 = vst.msk [vmem:[%s2863 + $0x111] sm:$0xff] %vm2864, %v2846
    %v2881 = vld [vmem:[#allocation2] sm:$0xff]
    %v2882 = vld [vmem:[#allocation2 + $0x10] sm:$0xff]
    %v2883 = vld [vmem:[#allocation2 + $0x20] sm:$0xff]
    %v2884 = vld [vmem:[#allocation2 + $0x30] sm:$0xff]
    %v2885 = vld [vmem:[#allocation2 + $0x40] sm:$0xff]
    %v2886 = vld [vmem:[#allocation2 + $0x50] sm:$0xff]
    %v2887 = vld [vmem:[#allocation2 + $0x60] sm:$0xff]
    %v2888 = vld [vmem:[#allocation2 + $0x70] sm:$0xff]
    %v2889 = vld [vmem:[#allocation2 + $0xa0] sm:$0xff]
    %v2890 = vld [vmem:[#allocation2 + $0xb0] sm:$0xff]
    %v2891 = vld [vmem:[#allocation2 + $0xc0] sm:$0xff]
    %v2892 = vld [vmem:[#allocation2 + $0xd0] sm:$0xff]
    %v2893 = vld [vmem:[#allocation2 + $0xe0] sm:$0xff]
    %v2894 = vld [vmem:[#allocation2 + $0xf0] sm:$0xff]
    %v2895 = vld [vmem:[#allocation2 + $0x100] sm:$0xff]
    %v2896 = vld [vmem:[#allocation2 + $0x110] sm:$0xff]
    %v2897 = vpack.c.bf16 %v2882, %v2881
    %v2898 = vpack.c.bf16 %v2884, %v2883
    %v2899 = vpack.c.bf16 %v2886, %v2885
    %v2900 = vpack.c.bf16 %v2888, %v2887
    %v2901 = vpack.c.bf16 %v2890, %v2889
    %v2902 = vpack.c.bf16 %v2892, %v2891
    %v2903 = vpack.c.bf16 %v2894, %v2893
    %v2904 = vpack.c.bf16 %v2896, %v2895
    %v2905 = vld [vmem:[#allocation6] sm:$0xf]
    %v2906 = vld [vmem:[#allocation6 + $0x4] sm:$0xf]
    %v2907 = vld [vmem:[#allocation6 + $0x8] sm:$0xf]
    %v2908 = vld [vmem:[#allocation6 + $0xc] sm:$0xf]
    %v2909 = vld [vmem:[#allocation2 + $0x1] sm:$0xff]
    %v2910 = vld [vmem:[#allocation2 + $0x11] sm:$0xff]
    %v2911 = vld [vmem:[#allocation2 + $0x21] sm:$0xff]
    %v2912 = vld [vmem:[#allocation2 + $0x31] sm:$0xff]
    %v2913 = vld [vmem:[#allocation2 + $0x41] sm:$0xff]
    %v2914 = vld [vmem:[#allocation2 + $0x51] sm:$0xff]
    %v2915 = vld [vmem:[#allocation2 + $0x61] sm:$0xff]
    %v2916 = vld [vmem:[#allocation2 + $0x71] sm:$0xff]
    %v2917 = vld [vmem:[#allocation2 + $0xa1] sm:$0xff]
    %v2918 = vld [vmem:[#allocation2 + $0xb1] sm:$0xff]
    %v2919 = vld [vmem:[#allocation2 + $0xc1] sm:$0xff]
    %v2920 = vld [vmem:[#allocation2 + $0xd1] sm:$0xff]
    %v2921 = vld [vmem:[#allocation2 + $0xe1] sm:$0xff]
    %v2922 = vld [vmem:[#allocation2 + $0xf1] sm:$0xff]
    %v2923 = vld [vmem:[#allocation2 + $0x101] sm:$0xff]
    %v2924 = vld [vmem:[#allocation2 + $0x111] sm:$0xff]
    %v2925 = vpack.c.bf16 %v2910, %v2909
    %v2926 = vpack.c.bf16 %v2912, %v2911
    %v2927 = vpack.c.bf16 %v2914, %v2913
    %v2928 = vpack.c.bf16 %v2916, %v2915
    %v2929 = vpack.c.bf16 %v2918, %v2917
    %v2930 = vpack.c.bf16 %v2920, %v2919
    %v2931 = vpack.c.bf16 %v2922, %v2921
    %v2932 = vpack.c.bf16 %v2924, %v2923
    %s2933 = scalar_lea.vmem [#allocation6], 16
    %v2934 = vld [vmem:[%s2933] sm:$0xf]
    %v2935 = vld [vmem:[%s2933 + $0x4] sm:$0xf]
    %v2936 = vld [vmem:[%s2933 + $0x8] sm:$0xf]
    %v2937 = vld [vmem:[%s2933 + $0xc] sm:$0xf]
    %v2942 = vunpack.c.l.b16 %v2934
    %v2943 = vunpack.c.l.b16 %v2935
    %v2944 = vunpack.c.l.b16 %v2936
    %v2945 = vunpack.c.l.b16 %v2937
    %v2946 = vpack.c.b16 %v2943, %v2942
    %v2947 = vpack.c.b16 %v2945, %v2944
    %v2951 = vsel %vm2864, %v2925, 0
    %v2954 = vsel %vm2864, %v2926, 0
    %v2957 = vsel %vm2864, %v2927, 0
    %v2960 = vsel %vm2864, %v2928, 0
    %v2963 = vsel %vm2864, %v2929, 0
    %v2966 = vsel %vm2864, %v2930, 0
    %v2969 = vsel %vm2864, %v2931, 0
    %v2972 = vsel %vm2864, %v2932, 0
    %2974 = vmatprep.subr.bf16.mxu0 0
    %2975 = vmatpush1.bf16.msra.mxu0 %v2946
    %2976 = vmatprep.subr.bf16.mxu0 0
    %2977 = vmatpush1.bf16.msra.mxu0 %v2947
    %2978 = vmatprep.subr.bf16.mxu0 0
    %2979 = vmatpush1.bf16.msra.mxu0 0
    %2980 = vmatprep.subr.bf16.mxu0 0
    %2981 = vmatpush1.bf16.msra.mxu0 0
    %2982 = vmatprep.subr.bf16.mxu0 0
    %2983 = vmatpush1.bf16.msra.mxu0 0
    %2984 = vmatprep.subr.bf16.mxu0 0
    %2985 = vmatpush1.bf16.msra.mxu0 0
    %2986 = vmatprep.subr.bf16.mxu0 0
    %2987 = vmatpush1.bf16.msra.mxu0 0
    %2988 = vmatprep.subr.bf16.mxu0 0
    %2989 = vmatpush1.bf16.msra.mxu0 0
    %2990 = vmatprep.subr.bf16.mxu0 0
    %2991 = vmatpush1.bf16.msra.mxu0 0
    %2992 = vmatprep.subr.bf16.mxu0 0
    %2993 = vmatpush1.bf16.msra.mxu0 0
    %2994 = vmatprep.subr.bf16.mxu0 0
    %2995 = vmatpush1.bf16.msra.mxu0 0
    %2996 = vmatprep.subr.bf16.mxu0 0
    %2997 = vmatpush1.bf16.msra.mxu0 0
    %2998 = vmatprep.subr.bf16.mxu0 0
    %2999 = vmatpush1.bf16.msra.mxu0 0
    %3000 = vmatprep.subr.bf16.mxu0 0
    %3001 = vmatpush1.bf16.msra.mxu0 0
    %3002 = vmatprep.subr.bf16.mxu0 0
    %3003 = vmatpush1.bf16.msra.mxu0 0
    %3004 = vmatprep.subr.bf16.mxu0 0
    %3005 = vmatpush1.bf16.msra.mxu0 0
    %3006 = vmatprep.mubr.bf16.mxu0 0
    %3007 = vmatmul.mubr.bf16.gmra.mrb[0].mxu0 %v2951
    %v3008 = vpop.f32.mrb[0].mxu0
    %v3009 = vadd.f32 0.0, %v3008
    %v3010 = vpop.f32.mrb[0].mxu0
    %v3011 = vpop.f32.mrb[0].mxu0
    %v3012 = vadd.f32 0.0, %v3011
    %v3013 = vpop.f32.mrb[0].mxu0
    %3014 = vmatprep.mubr.bf16.mxu0 0
    %3015 = vmatmul.mubr.bf16.gmra.mrb[0].mxu0 %v2954
    %v3016 = vpop.f32.mrb[0].mxu0
    %v3017 = vadd.f32 0.0, %v3016
    %v3018 = vpop.f32.mrb[0].mxu0
    %v3019 = vpop.f32.mrb[0].mxu0
    %v3020 = vadd.f32 0.0, %v3019
    %v3021 = vpop.f32.mrb[0].mxu0
    %3022 = vmatprep.mubr.bf16.mxu0 0
    %3023 = vmatmul.mubr.bf16.gmra.mrb[0].mxu0 %v2957
    %v3024 = vpop.f32.mrb[0].mxu0
    %v3025 = vadd.f32 0.0, %v3024
    %v3026 = vpop.f32.mrb[0].mxu0
    %v3027 = vpop.f32.mrb[0].mxu0
    %v3028 = vadd.f32 0.0, %v3027
    %v3029 = vpop.f32.mrb[0].mxu0
    %3030 = vmatprep.mubr.bf16.mxu0 0
    %3031 = vmatmul.mubr.bf16.gmra.mrb[0].mxu0 %v2960
    %v3032 = vpop.f32.mrb[0].mxu0
    %v3033 = vadd.f32 0.0, %v3032
    %v3034 = vpop.f32.mrb[0].mxu0
    %v3035 = vpop.f32.mrb[0].mxu0
    %v3036 = vadd.f32 0.0, %v3035
    %v3037 = vpop.f32.mrb[0].mxu0
    %3038 = vmatprep.mubr.bf16.mxu0 0
    %3039 = vmatmul.mubr.bf16.gmra.mrb[0].mxu0 %v2963
    %v3040 = vpop.f32.mrb[0].mxu0
    %v3041 = vadd.f32 0.0, %v3040
    %v3042 = vpop.f32.mrb[0].mxu0
    %v3043 = vpop.f32.mrb[0].mxu0
    %v3044 = vadd.f32 0.0, %v3043
    %v3045 = vpop.f32.mrb[0].mxu0
    %3046 = vmatprep.mubr.bf16.mxu0 0
    %3047 = vmatmul.mubr.bf16.gmra.mrb[0].mxu0 %v2966
    %v3048 = vpop.f32.mrb[0].mxu0
    %v3049 = vadd.f32 0.0, %v3048
    %v3050 = vpop.f32.mrb[0].mxu0
    %v3051 = vpop.f32.mrb[0].mxu0
    %v3052 = vadd.f32 0.0, %v3051
    %v3053 = vpop.f32.mrb[0].mxu0
    %3054 = vmatprep.mubr.bf16.mxu0 0
    %3055 = vmatmul.mubr.bf16.gmra.mrb[0].mxu0 %v2969
    %v3056 = vpop.f32.mrb[0].mxu0
    %v3057 = vadd.f32 0.0, %v3056
    %v3058 = vpop.f32.mrb[0].mxu0
    %v3059 = vpop.f32.mrb[0].mxu0
    %v3060 = vadd.f32 0.0, %v3059
    %v3061 = vpop.f32.mrb[0].mxu0
    %3062 = vmatprep.mubr.bf16.mxu0 0
    %3063 = vmatmul.mubr.bf16.gmra.mrb[0].mxu0 %v2972
    %v3064 = vpop.f32.mrb[0].mxu0
    %v3065 = vadd.f32 0.0, %v3064
    %v3066 = vpop.f32.mrb[0].mxu0
    %v3067 = vpop.f32.mrb[0].mxu0
    %v3068 = vadd.f32 0.0, %v3067
    %v3069 = vpop.f32.mrb[0].mxu0
    %3070 = vdwg.mxu0
    %v3075 = vunpack.c.l.b16 %v2905
    %v3076 = vunpack.c.l.b16 %v2906
    %v3077 = vunpack.c.l.b16 %v2907
    %v3078 = vunpack.c.l.b16 %v2908
    %v3079 = vpack.c.b16 %v3076, %v3075
    %v3080 = vpack.c.b16 %v3078, %v3077
    %v3084 = vsel %vm2864, %v2897, 0
    %v3087 = vsel %vm2864, %v2898, 0
    %v3090 = vsel %vm2864, %v2899, 0
    %v3093 = vsel %vm2864, %v2900, 0
    %v3096 = vsel %vm2864, %v2901, 0
    %v3099 = vsel %vm2864, %v2902, 0
    %v3102 = vsel %vm2864, %v2903, 0
    %v3105 = vsel %vm2864, %v2904, 0
    %3107 = vmatprep.subr.bf16.mxu0 0
    %3108 = vmatpush1.bf16.msra.mxu0 %v3079
    %3109 = vmatprep.subr.bf16.mxu0 0
    %3110 = vmatpush1.bf16.msra.mxu0 %v3080
    %3111 = vmatprep.subr.bf16.mxu0 0
    %3112 = vmatpush1.bf16.msra.mxu0 0
    %3113 = vmatprep.subr.bf16.mxu0 0
    %3114 = vmatpush1.bf16.msra.mxu0 0
    %3115 = vmatprep.subr.bf16.mxu0 0
    %3116 = vmatpush1.bf16.msra.mxu0 0
    %3117 = vmatprep.subr.bf16.mxu0 0
    %3118 = vmatpush1.bf16.msra.mxu0 0
    %3119 = vmatprep.subr.bf16.mxu0 0
    %3120 = vmatpush1.bf16.msra.mxu0 0
    %3121 = vmatprep.subr.bf16.mxu0 0
    %3122 = vmatpush1.bf16.msra.mxu0 0
    %3123 = vmatprep.subr.bf16.mxu0 0
    %3124 = vmatpush1.bf16.msra.mxu0 0
    %3125 = vmatprep.subr.bf16.mxu0 0
    %3126 = vmatpush1.bf16.msra.mxu0 0
    %3127 = vmatprep.subr.bf16.mxu0 0
    %3128 = vmatpush1.bf16.msra.mxu0 0
    %3129 = vmatprep.subr.bf16.mxu0 0
    %3130 = vmatpush1.bf16.msra.mxu0 0
    %3131 = vmatprep.subr.bf16.mxu0 0
    %3132 = vmatpush1.bf16.msra.mxu0 0
    %3133 = vmatprep.subr.bf16.mxu0 0
    %3134 = vmatpush1.bf16.msra.mxu0 0
    %3135 = vmatprep.subr.bf16.mxu0 0
    %3136 = vmatpush1.bf16.msra.mxu0 0
    %3137 = vmatprep.subr.bf16.mxu0 0
    %3138 = vmatpush1.bf16.msra.mxu0 0
    %3139 = vmatprep.mubr.bf16.mxu0 0
    %3140 = vmatmul.mubr.bf16.gmra.mrb[0].mxu0 %v3084
    %v3141 = vpop.f32.mrb[0].mxu0
    %v3142 = vadd.f32 %v3009, %v3141
    %v3143 = vpop.f32.mrb[0].mxu0
    %v3144 = vpop.f32.mrb[0].mxu0
    %v3145 = vadd.f32 %v3012, %v3144
    %v3146 = vpop.f32.mrb[0].mxu0
    %3147 = vmatprep.mubr.bf16.mxu0 0
    %3148 = vmatmul.mubr.bf16.gmra.mrb[0].mxu0 %v3087
    %v3149 = vpop.f32.mrb[0].mxu0
    %v3150 = vadd.f32 %v3017, %v3149
    %v3151 = vpop.f32.mrb[0].mxu0
    %v3152 = vpop.f32.mrb[0].mxu0
    %v3153 = vadd.f32 %v3020, %v3152
    %v3154 = vpop.f32.mrb[0].mxu0
    %3155 = vmatprep.mubr.bf16.mxu0 0
    %3156 = vmatmul.mubr.bf16.gmra.mrb[0].mxu0 %v3090
    %v3157 = vpop.f32.mrb[0].mxu0
    %v3158 = vadd.f32 %v3025, %v3157
    %v3159 = vpop.f32.mrb[0].mxu0
    %v3160 = vpop.f32.mrb[0].mxu0
    %v3161 = vadd.f32 %v3028, %v3160
    %v3162 = vpop.f32.mrb[0].mxu0
    %3163 = vmatprep.mubr.bf16.mxu0 0
    %3164 = vmatmul.mubr.bf16.gmra.mrb[0].mxu0 %v3093
    %v3165 = vpop.f32.mrb[0].mxu0
    %v3166 = vadd.f32 %v3033, %v3165
    %v3167 = vpop.f32.mrb[0].mxu0
    %v3168 = vpop.f32.mrb[0].mxu0
    %v3169 = vadd.f32 %v3036, %v3168
    %v3170 = vpop.f32.mrb[0].mxu0
    %3171 = vmatprep.mubr.bf16.mxu0 0
    %3172 = vmatmul.mubr.bf16.gmra.mrb[0].mxu0 %v3096
    %v3173 = vpop.f32.mrb[0].mxu0
    %v3174 = vadd.f32 %v3041, %v3173
    %v3175 = vpop.f32.mrb[0].mxu0
    %v3176 = vpop.f32.mrb[0].mxu0
    %v3177 = vadd.f32 %v3044, %v3176
    %v3178 = vpop.f32.mrb[0].mxu0
    %3179 = vmatprep.mubr.bf16.mxu0 0
    %3180 = vmatmul.mubr.bf16.gmra.mrb[0].mxu0 %v3099
    %v3181 = vpop.f32.mrb[0].mxu0
    %v3182 = vadd.f32 %v3049, %v3181
    %v3183 = vpop.f32.mrb[0].mxu0
    %v3184 = vpop.f32.mrb[0].mxu0
    %v3185 = vadd.f32 %v3052, %v3184
    %v3186 = vpop.f32.mrb[0].mxu0
    %3187 = vmatprep.mubr.bf16.mxu0 0
    %3188 = vmatmul.mubr.bf16.gmra.mrb[0].mxu0 %v3102
    %v3189 = vpop.f32.mrb[0].mxu0
    %v3190 = vadd.f32 %v3057, %v3189
    %v3191 = vpop.f32.mrb[0].mxu0
    %v3192 = vpop.f32.mrb[0].mxu0
    %v3193 = vadd.f32 %v3060, %v3192
    %v3194 = vpop.f32.mrb[0].mxu0
    %3195 = vmatprep.mubr.bf16.mxu0 0
    %3196 = vmatmul.mubr.bf16.gmra.mrb[0].mxu0 %v3105
    %v3197 = vpop.f32.mrb[0].mxu0
    %v3198 = vadd.f32 %v3065, %v3197
    %v3199 = vpop.f32.mrb[0].mxu0
    %v3200 = vpop.f32.mrb[0].mxu0
    %v3201 = vadd.f32 %v3068, %v3200
    %v3202 = vpop.f32.mrb[0].mxu0
    %3203 = vdwg.mxu0
    %v3204 = vld [vmem:[#allocation2 + $0x2] sm:$0xff]
    %v3205 = vld [vmem:[#allocation2 + $0x12] sm:$0xff]
    %v3206 = vld [vmem:[#allocation2 + $0x22] sm:$0xff]
    %v3207 = vld [vmem:[#allocation2 + $0x32] sm:$0xff]
    %v3208 = vld [vmem:[#allocation2 + $0x42] sm:$0xff]
    %v3209 = vld [vmem:[#allocation2 + $0x52] sm:$0xff]
    %v3210 = vld [vmem:[#allocation2 + $0x62] sm:$0xff]
    %v3211 = vld [vmem:[#allocation2 + $0x72] sm:$0xff]
    %v3212 = vld [vmem:[#allocation2 + $0xa2] sm:$0xff]
    %v3213 = vld [vmem:[#allocation2 + $0xb2] sm:$0xff]
    %v3214 = vld [vmem:[#allocation2 + $0xc2] sm:$0xff]
    %v3215 = vld [vmem:[#allocation2 + $0xd2] sm:$0xff]
    %v3216 = vld [vmem:[#allocation2 + $0xe2] sm:$0xff]
    %v3217 = vld [vmem:[#allocation2 + $0xf2] sm:$0xff]
    %v3218 = vld [vmem:[#allocation2 + $0x102] sm:$0xff]
    %v3219 = vld [vmem:[#allocation2 + $0x112] sm:$0xff]
    %v3220 = vpack.c.bf16 %v3205, %v3204
    %v3221 = vpack.c.bf16 %v3207, %v3206
    %v3222 = vpack.c.bf16 %v3209, %v3208
    %v3223 = vpack.c.bf16 %v3211, %v3210
    %v3224 = vpack.c.bf16 %v3213, %v3212
    %v3225 = vpack.c.bf16 %v3215, %v3214
    %v3226 = vpack.c.bf16 %v3217, %v3216
    %v3227 = vpack.c.bf16 %v3219, %v3218
    %s3228 = scalar_lea.vmem [#allocation6], 32
    %v3229 = vld [vmem:[%s3228] sm:$0xf]
    %v3230 = vld [vmem:[%s3228 + $0x4] sm:$0xf]
    %v3231 = vld [vmem:[%s3228 + $0x8] sm:$0xf]
    %v3232 = vld [vmem:[%s3228 + $0xc] sm:$0xf]
    %v3237 = vunpack.c.l.b16 %v3229
    %v3238 = vunpack.c.l.b16 %v3230
    %v3239 = vunpack.c.l.b16 %v3231
    %v3240 = vunpack.c.l.b16 %v3232
    %v3241 = vpack.c.b16 %v3238, %v3237
    %v3242 = vpack.c.b16 %v3240, %v3239
    %v3246 = vsel %vm2864, %v3220, 0
    %v3249 = vsel %vm2864, %v3221, 0
    %v3252 = vsel %vm2864, %v3222, 0
    %v3255 = vsel %vm2864, %v3223, 0
    %v3258 = vsel %vm2864, %v3224, 0
    %v3261 = vsel %vm2864, %v3225, 0
    %v3264 = vsel %vm2864, %v3226, 0
    %v3267 = vsel %vm2864, %v3227, 0
    %3269 = vmatprep.subr.bf16.mxu0 0
    %3270 = vmatpush1.bf16.msra.mxu0 %v3241
    %3271 = vmatprep.subr.bf16.mxu0 0
    %3272 = vmatpush1.bf16.msra.mxu0 %v3242
    %3273 = vmatprep.subr.bf16.mxu0 0
    %3274 = vmatpush1.bf16.msra.mxu0 0
    %3275 = vmatprep.subr.bf16.mxu0 0
    %3276 = vmatpush1.bf16.msra.mxu0 0
    %3277 = vmatprep.subr.bf16.mxu0 0
    %3278 = vmatpush1.bf16.msra.mxu0 0
    %3279 = vmatprep.subr.bf16.mxu0 0
    %3280 = vmatpush1.bf16.msra.mxu0 0
    %3281 = vmatprep.subr.bf16.mxu0 0
    %3282 = vmatpush1.bf16.msra.mxu0 0
    %3283 = vmatprep.subr.bf16.mxu0 0
    %3284 = vmatpush1.bf16.msra.mxu0 0
    %3285 = vmatprep.subr.bf16.mxu0 0
    %3286 = vmatpush1.bf16.msra.mxu0 0
    %3287 = vmatprep.subr.bf16.mxu0 0
    %3288 = vmatpush1.bf16.msra.mxu0 0
    %3289 = vmatprep.subr.bf16.mxu0 0
    %3290 = vmatpush1.bf16.msra.mxu0 0
    %3291 = vmatprep.subr.bf16.mxu0 0
    %3292 = vmatpush1.bf16.msra.mxu0 0
    %3293 = vmatprep.subr.bf16.mxu0 0
    %3294 = vmatpush1.bf16.msra.mxu0 0
    %3295 = vmatprep.subr.bf16.mxu0 0
    %3296 = vmatpush1.bf16.msra.mxu0 0
    %3297 = vmatprep.subr.bf16.mxu0 0
    %3298 = vmatpush1.bf16.msra.mxu0 0
    %3299 = vmatprep.subr.bf16.mxu0 0
    %3300 = vmatpush1.bf16.msra.mxu0 0
    %3301 = vmatprep.mubr.bf16.mxu0 0
    %3302 = vmatmul.mubr.bf16.gmra.mrb[0].mxu0 %v3246
    %v3303 = vpop.f32.mrb[0].mxu0
    %v3304 = vadd.f32 0.0, %v3303
    %v3305 = vpop.f32.mrb[0].mxu0
    %v3306 = vpop.f32.mrb[0].mxu0
    %v3307 = vadd.f32 0.0, %v3306
    %v3308 = vpop.f32.mrb[0].mxu0
    %3309 = vmatprep.mubr.bf16.mxu0 0
    %3310 = vmatmul.mubr.bf16.gmra.mrb[0].mxu0 %v3249
    %v3311 = vpop.f32.mrb[0].mxu0
    %v3312 = vadd.f32 0.0, %v3311
    %v3313 = vpop.f32.mrb[0].mxu0
    %v3314 = vpop.f32.mrb[0].mxu0
    %v3315 = vadd.f32 0.0, %v3314
    %v3316 = vpop.f32.mrb[0].mxu0
    %3317 = vmatprep.mubr.bf16.mxu0 0
    %3318 = vmatmul.mubr.bf16.gmra.mrb[0].mxu0 %v3252
    %v3319 = vpop.f32.mrb[0].mxu0
    %v3320 = vadd.f32 0.0, %v3319
    %v3321 = vpop.f32.mrb[0].mxu0
    %v3322 = vpop.f32.mrb[0].mxu0
    %v3323 = vadd.f32 0.0, %v3322
    %v3324 = vpop.f32.mrb[0].mxu0
    %3325 = vmatprep.mubr.bf16.mxu0 0
    %3326 = vmatmul.mubr.bf16.gmra.mrb[0].mxu0 %v3255
    %v3327 = vpop.f32.mrb[0].mxu0
    %v3328 = vadd.f32 0.0, %v3327
    %v3329 = vpop.f32.mrb[0].mxu0
    %v3330 = vpop.f32.mrb[0].mxu0
    %v3331 = vadd.f32 0.0, %v3330
    %v3332 = vpop.f32.mrb[0].mxu0
    %3333 = vmatprep.mubr.bf16.mxu0 0
    %3334 = vmatmul.mubr.bf16.gmra.mrb[0].mxu0 %v3258
    %v3335 = vpop.f32.mrb[0].mxu0
    %v3336 = vadd.f32 0.0, %v3335
    %v3337 = vpop.f32.mrb[0].mxu0
    %v3338 = vpop.f32.mrb[0].mxu0
    %v3339 = vadd.f32 0.0, %v3338
    %v3340 = vpop.f32.mrb[0].mxu0
    %3341 = vmatprep.mubr.bf16.mxu0 0
    %3342 = vmatmul.mubr.bf16.gmra.mrb[0].mxu0 %v3261
    %v3343 = vpop.f32.mrb[0].mxu0
    %v3344 = vadd.f32 0.0, %v3343
    %v3345 = vpop.f32.mrb[0].mxu0
    %v3346 = vpop.f32.mrb[0].mxu0
    %v3347 = vadd.f32 0.0, %v3346
    %v3348 = vpop.f32.mrb[0].mxu0
    %3349 = vmatprep.mubr.bf16.mxu0 0
    %3350 = vmatmul.mubr.bf16.gmra.mrb[0].mxu0 %v3264
    %v3351 = vpop.f32.mrb[0].mxu0
    %v3352 = vadd.f32 0.0, %v3351
    %v3353 = vpop.f32.mrb[0].mxu0
    %v3354 = vpop.f32.mrb[0].mxu0
    %v3355 = vadd.f32 0.0, %v3354
    %v3356 = vpop.f32.mrb[0].mxu0
    %3357 = vmatprep.mubr.bf16.mxu0 0
    %3358 = vmatmul.mubr.bf16.gmra.mrb[0].mxu0 %v3267
    %v3359 = vpop.f32.mrb[0].mxu0
    %v3360 = vadd.f32 0.0, %v3359
    %v3361 = vpop.f32.mrb[0].mxu0
    %v3362 = vpop.f32.mrb[0].mxu0
    %v3363 = vadd.f32 0.0, %v3362
    %v3364 = vpop.f32.mrb[0].mxu0
    %3365 = vdwg.mxu0
    %v3366 = vadd.f32 %v3142, %v3304
    %v3367 = vadd.f32 %v3145, %v3307
    %v3368 = vadd.f32 %v3150, %v3312
    %v3369 = vadd.f32 %v3153, %v3315
    %v3370 = vadd.f32 %v3158, %v3320
    %v3371 = vadd.f32 %v3161, %v3323
    %v3372 = vadd.f32 %v3166, %v3328
    %v3373 = vadd.f32 %v3169, %v3331
    %v3374 = vadd.f32 %v3174, %v3336
    %v3375 = vadd.f32 %v3177, %v3339
    %v3376 = vadd.f32 %v3182, %v3344
    %v3377 = vadd.f32 %v3185, %v3347
    %v3378 = vadd.f32 %v3190, %v3352
    %v3379 = vadd.f32 %v3193, %v3355
    %v3380 = vadd.f32 %v3198, %v3360
    %v3381 = vadd.f32 %v3201, %v3363
    %v3382 = vld [vmem:[%s2863] sm:$0xff]
    %v3383 = vld [vmem:[%s2863 + $0x10] sm:$0xff]
    %v3384 = vld [vmem:[%s2863 + $0x20] sm:$0xff]
    %v3385 = vld [vmem:[%s2863 + $0x30] sm:$0xff]
    %v3386 = vld [vmem:[%s2863 + $0x40] sm:$0xff]
    %v3387 = vld [vmem:[%s2863 + $0x50] sm:$0xff]
    %v3388 = vld [vmem:[%s2863 + $0x60] sm:$0xff]
    %v3389 = vld [vmem:[%s2863 + $0x70] sm:$0xff]
    %v3390 = vld [vmem:[%s2863 + $0xa0] sm:$0xff]
    %v3391 = vld [vmem:[%s2863 + $0xb0] sm:$0xff]
    %v3392 = vld [vmem:[%s2863 + $0xc0] sm:$0xff]
    %v3393 = vld [vmem:[%s2863 + $0xd0] sm:$0xff]
    %v3394 = vld [vmem:[%s2863 + $0xe0] sm:$0xff]
    %v3395 = vld [vmem:[%s2863 + $0xf0] sm:$0xff]
    %v3396 = vld [vmem:[%s2863 + $0x100] sm:$0xff]
    %v3397 = vld [vmem:[%s2863 + $0x110] sm:$0xff]
    %v3398 = vpack.c.bf16 %v3383, %v3382
    %v3399 = vpack.c.bf16 %v3385, %v3384
    %v3400 = vpack.c.bf16 %v3387, %v3386
    %v3401 = vpack.c.bf16 %v3389, %v3388
    %v3402 = vpack.c.bf16 %v3391, %v3390
    %v3403 = vpack.c.bf16 %v3393, %v3392
    %v3404 = vpack.c.bf16 %v3395, %v3394
    %v3405 = vpack.c.bf16 %v3397, %v3396
    %s3406 = scalar_lea.vmem [#allocation6], 48
    %v3407 = vld [vmem:[%s3406] sm:$0xf]
    %v3408 = vld [vmem:[%s3406 + $0x4] sm:$0xf]
    %v3409 = vld [vmem:[%s3406 + $0x8] sm:$0xf]
    %v3410 = vld [vmem:[%s3406 + $0xc] sm:$0xf]
    %v3415 = vunpack.c.l.b16 %v3407
    %v3416 = vunpack.c.l.b16 %v3408
    %v3417 = vunpack.c.l.b16 %v3409
    %v3418 = vunpack.c.l.b16 %v3410
    %v3419 = vpack.c.b16 %v3416, %v3415
    %v3420 = vpack.c.b16 %v3418, %v3417
    %v3424 = vsel %vm2864, %v3398, 0
    %v3427 = vsel %vm2864, %v3399, 0
    %v3430 = vsel %vm2864, %v3400, 0
    %v3433 = vsel %vm2864, %v3401, 0
    %v3436 = vsel %vm2864, %v3402, 0
    %v3439 = vsel %vm2864, %v3403, 0
    %v3442 = vsel %vm2864, %v3404, 0
    %v3445 = vsel %vm2864, %v3405, 0
    %3447 = vmatprep.subr.bf16.mxu0 0
    %3448 = vmatpush1.bf16.msra.mxu0 %v3419
    %3449 = vmatprep.subr.bf16.mxu0 0
    %3450 = vmatpush1.bf16.msra.mxu0 %v3420
    %3451 = vmatprep.subr.bf16.mxu0 0
    %3452 = vmatpush1.bf16.msra.mxu0 0
    %3453 = vmatprep.subr.bf16.mxu0 0
    %3454 = vmatpush1.bf16.msra.mxu0 0
    %3455 = vmatprep.subr.bf16.mxu0 0
    %3456 = vmatpush1.bf16.msra.mxu0 0
    %3457 = vmatprep.subr.bf16.mxu0 0
    %3458 = vmatpush1.bf16.msra.mxu0 0
    %3459 = vmatprep.subr.bf16.mxu0 0
    %3460 = vmatpush1.bf16.msra.mxu0 0
    %3461 = vmatprep.subr.bf16.mxu0 0
    %3462 = vmatpush1.bf16.msra.mxu0 0
    %3463 = vmatprep.subr.bf16.mxu0 0
    %3464 = vmatpush1.bf16.msra.mxu0 0
    %3465 = vmatprep.subr.bf16.mxu0 0
    %3466 = vmatpush1.bf16.msra.mxu0 0
    %3467 = vmatprep.subr.bf16.mxu0 0
    %3468 = vmatpush1.bf16.msra.mxu0 0
    %3469 = vmatprep.subr.bf16.mxu0 0
    %3470 = vmatpush1.bf16.msra.mxu0 0
    %3471 = vmatprep.subr.bf16.mxu0 0
    %3472 = vmatpush1.bf16.msra.mxu0 0
    %3473 = vmatprep.subr.bf16.mxu0 0
    %3474 = vmatpush1.bf16.msra.mxu0 0
    %3475 = vmatprep.subr.bf16.mxu0 0
    %3476 = vmatpush1.bf16.msra.mxu0 0
    %3477 = vmatprep.subr.bf16.mxu0 0
    %3478 = vmatpush1.bf16.msra.mxu0 0
    %3479 = vmatprep.mubr.bf16.mxu0 0
    %3480 = vmatmul.mubr.bf16.gmra.mrb[0].mxu0 %v3424
    %v3481 = vpop.f32.mrb[0].mxu0
    %v3482 = vadd.f32 0.0, %v3481
    %v3483 = vpop.f32.mrb[0].mxu0
    %v3484 = vpop.f32.mrb[0].mxu0
    %v3485 = vadd.f32 0.0, %v3484
    %v3486 = vpop.f32.mrb[0].mxu0
    %3487 = vmatprep.mubr.bf16.mxu0 0
    %3488 = vmatmul.mubr.bf16.gmra.mrb[0].mxu0 %v3427
    %v3489 = vpop.f32.mrb[0].mxu0
    %v3490 = vadd.f32 0.0, %v3489
    %v3491 = vpop.f32.mrb[0].mxu0
    %v3492 = vpop.f32.mrb[0].mxu0
    %v3493 = vadd.f32 0.0, %v3492
    %v3494 = vpop.f32.mrb[0].mxu0
    %3495 = vmatprep.mubr.bf16.mxu0 0
    %3496 = vmatmul.mubr.bf16.gmra.mrb[0].mxu0 %v3430
    %v3497 = vpop.f32.mrb[0].mxu0
    %v3498 = vadd.f32 0.0, %v3497
    %v3499 = vpop.f32.mrb[0].mxu0
    %v3500 = vpop.f32.mrb[0].mxu0
    %v3501 = vadd.f32 0.0, %v3500
    %v3502 = vpop.f32.mrb[0].mxu0
    %3503 = vmatprep.mubr.bf16.mxu0 0
    %3504 = vmatmul.mubr.bf16.gmra.mrb[0].mxu0 %v3433
    %v3505 = vpop.f32.mrb[0].mxu0
    %v3506 = vadd.f32 0.0, %v3505
    %v3507 = vpop.f32.mrb[0].mxu0
    %v3508 = vpop.f32.mrb[0].mxu0
    %v3509 = vadd.f32 0.0, %v3508
    %v3510 = vpop.f32.mrb[0].mxu0
    %3511 = vmatprep.mubr.bf16.mxu0 0
    %3512 = vmatmul.mubr.bf16.gmra.mrb[0].mxu0 %v3436
    %v3513 = vpop.f32.mrb[0].mxu0
    %v3514 = vadd.f32 0.0, %v3513
    %v3515 = vpop.f32.mrb[0].mxu0
    %v3516 = vpop.f32.mrb[0].mxu0
    %v3517 = vadd.f32 0.0, %v3516
    %v3518 = vpop.f32.mrb[0].mxu0
    %3519 = vmatprep.mubr.bf16.mxu0 0
    %3520 = vmatmul.mubr.bf16.gmra.mrb[0].mxu0 %v3439
    %v3521 = vpop.f32.mrb[0].mxu0
    %v3522 = vadd.f32 0.0, %v3521
    %v3523 = vpop.f32.mrb[0].mxu0
    %v3524 = vpop.f32.mrb[0].mxu0
    %v3525 = vadd.f32 0.0, %v3524
    %v3526 = vpop.f32.mrb[0].mxu0
    %3527 = vmatprep.mubr.bf16.mxu0 0
    %3528 = vmatmul.mubr.bf16.gmra.mrb[0].mxu0 %v3442
    %v3529 = vpop.f32.mrb[0].mxu0
    %v3530 = vadd.f32 0.0, %v3529
    %v3531 = vpop.f32.mrb[0].mxu0
    %v3532 = vpop.f32.mrb[0].mxu0
    %v3533 = vadd.f32 0.0, %v3532
    %v3534 = vpop.f32.mrb[0].mxu0
    %3535 = vmatprep.mubr.bf16.mxu0 0
    %3536 = vmatmul.mubr.bf16.gmra.mrb[0].mxu0 %v3445
    %v3537 = vpop.f32.mrb[0].mxu0
    %v3538 = vadd.f32 0.0, %v3537
    %v3539 = vpop.f32.mrb[0].mxu0
    %v3540 = vpop.f32.mrb[0].mxu0
    %v3541 = vadd.f32 0.0, %v3540
    %v3542 = vpop.f32.mrb[0].mxu0
    %3543 = vdwg.mxu0
    %v3544 = vadd.f32 %v3366, %v3482
    %v3545 = vadd.f32 %v3367, %v3485
    %v3546 = vadd.f32 %v3368, %v3490
    %v3547 = vadd.f32 %v3369, %v3493
    %v3548 = vadd.f32 %v3370, %v3498
    %v3549 = vadd.f32 %v3371, %v3501
    %v3550 = vadd.f32 %v3372, %v3506
    %v3551 = vadd.f32 %v3373, %v3509
    %v3552 = vadd.f32 %v3374, %v3514
    %v3553 = vadd.f32 %v3375, %v3517
    %v3554 = vadd.f32 %v3376, %v3522
    %v3555 = vadd.f32 %v3377, %v3525
    %v3556 = vadd.f32 %v3378, %v3530
    %v3557 = vadd.f32 %v3379, %v3533
    %v3558 = vadd.f32 %v3380, %v3538
    %v3559 = vadd.f32 %v3381, %v3541
    %v3560 = vld [vmem:[%s2863 + $0x1] sm:$0xff]
    %v3561 = vld [vmem:[%s2863 + $0x11] sm:$0xff]
    %v3562 = vld [vmem:[%s2863 + $0x21] sm:$0xff]
    %v3563 = vld [vmem:[%s2863 + $0x31] sm:$0xff]
    %v3564 = vld [vmem:[%s2863 + $0x41] sm:$0xff]
    %v3565 = vld [vmem:[%s2863 + $0x51] sm:$0xff]
    %v3566 = vld [vmem:[%s2863 + $0x61] sm:$0xff]
    %v3567 = vld [vmem:[%s2863 + $0x71] sm:$0xff]
    %v3568 = vld [vmem:[%s2863 + $0xa1] sm:$0xff]
    %v3569 = vld [vmem:[%s2863 + $0xb1] sm:$0xff]
    %v3570 = vld [vmem:[%s2863 + $0xc1] sm:$0xff]
    %v3571 = vld [vmem:[%s2863 + $0xd1] sm:$0xff]
    %v3572 = vld [vmem:[%s2863 + $0xe1] sm:$0xff]
    %v3573 = vld [vmem:[%s2863 + $0xf1] sm:$0xff]
    %v3574 = vld [vmem:[%s2863 + $0x101] sm:$0xff]
    %v3575 = vld [vmem:[%s2863 + $0x111] sm:$0xff]
    %v3576 = vpack.c.bf16 %v3561, %v3560
    %v3577 = vpack.c.bf16 %v3563, %v3562
    %v3578 = vpack.c.bf16 %v3565, %v3564
    %v3579 = vpack.c.bf16 %v3567, %v3566
    %v3580 = vpack.c.bf16 %v3569, %v3568
    %v3581 = vpack.c.bf16 %v3571, %v3570
    %v3582 = vpack.c.bf16 %v3573, %v3572
    %v3583 = vpack.c.bf16 %v3575, %v3574
    %s3584 = scalar_lea.vmem [#allocation6], 64
    %v3585 = vld [vmem:[%s3584] sm:$0xf]
    %v3586 = vld [vmem:[%s3584 + $0x4] sm:$0xf]
    %v3587 = vld [vmem:[%s3584 + $0x8] sm:$0xf]
    %v3588 = vld [vmem:[%s3584 + $0xc] sm:$0xf]
    %v3593 = vunpack.c.l.b16 %v3585
    %v3594 = vunpack.c.l.b16 %v3586
    %v3595 = vunpack.c.l.b16 %v3587
    %v3596 = vunpack.c.l.b16 %v3588
    %v3597 = vpack.c.b16 %v3594, %v3593
    %v3598 = vpack.c.b16 %v3596, %v3595
    %v3602 = vsel %vm2864, %v3576, 0
    %v3605 = vsel %vm2864, %v3577, 0
    %v3608 = vsel %vm2864, %v3578, 0
    %v3611 = vsel %vm2864, %v3579, 0
    %v3614 = vsel %vm2864, %v3580, 0
    %v3617 = vsel %vm2864, %v3581, 0
    %v3620 = vsel %vm2864, %v3582, 0
    %v3623 = vsel %vm2864, %v3583, 0
    %3625 = vmatprep.subr.bf16.mxu0 0
    %3626 = vmatpush1.bf16.msra.mxu0 %v3597
    %3627 = vmatprep.subr.bf16.mxu0 0
    %3628 = vmatpush1.bf16.msra.mxu0 %v3598
    %3629 = vmatprep.subr.bf16.mxu0 0
    %3630 = vmatpush1.bf16.msra.mxu0 0
    %3631 = vmatprep.subr.bf16.mxu0 0
    %3632 = vmatpush1.bf16.msra.mxu0 0
    %3633 = vmatprep.subr.bf16.mxu0 0
    %3634 = vmatpush1.bf16.msra.mxu0 0
    %3635 = vmatprep.subr.bf16.mxu0 0
    %3636 = vmatpush1.bf16.msra.mxu0 0
    %3637 = vmatprep.subr.bf16.mxu0 0
    %3638 = vmatpush1.bf16.msra.mxu0 0
    %3639 = vmatprep.subr.bf16.mxu0 0
    %3640 = vmatpush1.bf16.msra.mxu0 0
    %3641 = vmatprep.subr.bf16.mxu0 0
    %3642 = vmatpush1.bf16.msra.mxu0 0
    %3643 = vmatprep.subr.bf16.mxu0 0
    %3644 = vmatpush1.bf16.msra.mxu0 0
    %3645 = vmatprep.subr.bf16.mxu0 0
    %3646 = vmatpush1.bf16.msra.mxu0 0
    %3647 = vmatprep.subr.bf16.mxu0 0
    %3648 = vmatpush1.bf16.msra.mxu0 0
    %3649 = vmatprep.subr.bf16.mxu0 0
    %3650 = vmatpush1.bf16.msra.mxu0 0
    %3651 = vmatprep.subr.bf16.mxu0 0
    %3652 = vmatpush1.bf16.msra.mxu0 0
    %3653 = vmatprep.subr.bf16.mxu0 0
    %3654 = vmatpush1.bf16.msra.mxu0 0
    %3655 = vmatprep.subr.bf16.mxu0 0
    %3656 = vmatpush1.bf16.msra.mxu0 0
    %3657 = vmatprep.mubr.bf16.mxu0 0
    %3658 = vmatmul.mubr.bf16.gmra.mrb[0].mxu0 %v3602
    %v3659 = vpop.f32.mrb[0].mxu0
    %v3660 = vadd.f32 0.0, %v3659
    %v3661 = vpop.f32.mrb[0].mxu0
    %v3662 = vpop.f32.mrb[0].mxu0
    %v3663 = vadd.f32 0.0, %v3662
    %v3664 = vpop.f32.mrb[0].mxu0
    %3665 = vmatprep.mubr.bf16.mxu0 0
    %3666 = vmatmul.mubr.bf16.gmra.mrb[0].mxu0 %v3605
    %v3667 = vpop.f32.mrb[0].mxu0
    %v3668 = vadd.f32 0.0, %v3667
    %v3669 = vpop.f32.mrb[0].mxu0
    %v3670 = vpop.f32.mrb[0].mxu0
    %v3671 = vadd.f32 0.0, %v3670
    %v3672 = vpop.f32.mrb[0].mxu0
    %3673 = vmatprep.mubr.bf16.mxu0 0
    %3674 = vmatmul.mubr.bf16.gmra.mrb[0].mxu0 %v3608
    %v3675 = vpop.f32.mrb[0].mxu0
    %v3676 = vadd.f32 0.0, %v3675
    %v3677 = vpop.f32.mrb[0].mxu0
    %v3678 = vpop.f32.mrb[0].mxu0
    %v3679 = vadd.f32 0.0, %v3678
    %v3680 = vpop.f32.mrb[0].mxu0
    %3681 = vmatprep.mubr.bf16.mxu0 0
    %3682 = vmatmul.mubr.bf16.gmra.mrb[0].mxu0 %v3611
    %v3683 = vpop.f32.mrb[0].mxu0
    %v3684 = vadd.f32 0.0, %v3683
    %v3685 = vpop.f32.mrb[0].mxu0
    %v3686 = vpop.f32.mrb[0].mxu0
    %v3687 = vadd.f32 0.0, %v3686
    %v3688 = vpop.f32.mrb[0].mxu0
    %3689 = vmatprep.mubr.bf16.mxu0 0
    %3690 = vmatmul.mubr.bf16.gmra.mrb[0].mxu0 %v3614
    %v3691 = vpop.f32.mrb[0].mxu0
    %v3692 = vadd.f32 0.0, %v3691
    %v3693 = vpop.f32.mrb[0].mxu0
    %v3694 = vpop.f32.mrb[0].mxu0
    %v3695 = vadd.f32 0.0, %v3694
    %v3696 = vpop.f32.mrb[0].mxu0
    %3697 = vmatprep.mubr.bf16.mxu0 0
    %3698 = vmatmul.mubr.bf16.gmra.mrb[0].mxu0 %v3617
    %v3699 = vpop.f32.mrb[0].mxu0
    %v3700 = vadd.f32 0.0, %v3699
    %v3701 = vpop.f32.mrb[0].mxu0
    %v3702 = vpop.f32.mrb[0].mxu0
    %v3703 = vadd.f32 0.0, %v3702
    %v3704 = vpop.f32.mrb[0].mxu0
    %3705 = vmatprep.mubr.bf16.mxu0 0
    %3706 = vmatmul.mubr.bf16.gmra.mrb[0].mxu0 %v3620
    %v3707 = vpop.f32.mrb[0].mxu0
    %v3708 = vadd.f32 0.0, %v3707
    %v3709 = vpop.f32.mrb[0].mxu0
    %v3710 = vpop.f32.mrb[0].mxu0
    %v3711 = vadd.f32 0.0, %v3710
    %v3712 = vpop.f32.mrb[0].mxu0
    %3713 = vmatprep.mubr.bf16.mxu0 0
    %3714 = vmatmul.mubr.bf16.gmra.mrb[0].mxu0 %v3623
    %v3715 = vpop.f32.mrb[0].mxu0
    %v3716 = vadd.f32 0.0, %v3715
    %v3717 = vpop.f32.mrb[0].mxu0
    %v3718 = vpop.f32.mrb[0].mxu0
    %v3719 = vadd.f32 0.0, %v3718
    %v3720 = vpop.f32.mrb[0].mxu0
    %3721 = vdwg.mxu0
    %v3722 = vadd.f32 %v3544, %v3660
    %v3723 = vadd.f32 %v3545, %v3663
    %v3724 = vadd.f32 %v3546, %v3668
    %v3725 = vadd.f32 %v3547, %v3671
    %v3726 = vadd.f32 %v3548, %v3676
    %v3727 = vadd.f32 %v3549, %v3679
    %v3728 = vadd.f32 %v3550, %v3684
    %v3729 = vadd.f32 %v3551, %v3687
    %v3730 = vadd.f32 %v3552, %v3692
    %v3731 = vadd.f32 %v3553, %v3695
    %v3732 = vadd.f32 %v3554, %v3700
    %v3733 = vadd.f32 %v3555, %v3703
    %v3734 = vadd.f32 %v3556, %v3708
    %v3735 = vadd.f32 %v3557, %v3711
    %v3736 = vadd.f32 %v3558, %v3716
    %v3737 = vadd.f32 %v3559, %v3719
    %v3738 = vld [vmem:[%s2863 + $0x2] sm:$0xff]
    %v3739 = vld [vmem:[%s2863 + $0x12] sm:$0xff]
    %v3740 = vld [vmem:[%s2863 + $0x22] sm:$0xff]
    %v3741 = vld [vmem:[%s2863 + $0x32] sm:$0xff]
    %v3742 = vld [vmem:[%s2863 + $0x42] sm:$0xff]
    %v3743 = vld [vmem:[%s2863 + $0x52] sm:$0xff]
    %v3744 = vld [vmem:[%s2863 + $0x62] sm:$0xff]
    %v3745 = vld [vmem:[%s2863 + $0x72] sm:$0xff]
    %v3746 = vld [vmem:[%s2863 + $0xa2] sm:$0xff]
    %v3747 = vld [vmem:[%s2863 + $0xb2] sm:$0xff]
    %v3748 = vld [vmem:[%s2863 + $0xc2] sm:$0xff]
    %v3749 = vld [vmem:[%s2863 + $0xd2] sm:$0xff]
    %v3750 = vld [vmem:[%s2863 + $0xe2] sm:$0xff]
    %v3751 = vld [vmem:[%s2863 + $0xf2] sm:$0xff]
    %v3752 = vld [vmem:[%s2863 + $0x102] sm:$0xff]
    %v3753 = vld [vmem:[%s2863 + $0x112] sm:$0xff]
    %v3754 = vpack.c.bf16 %v3739, %v3738
    %v3755 = vpack.c.bf16 %v3741, %v3740
    %v3756 = vpack.c.bf16 %v3743, %v3742
    %v3757 = vpack.c.bf16 %v3745, %v3744
    %v3758 = vpack.c.bf16 %v3747, %v3746
    %v3759 = vpack.c.bf16 %v3749, %v3748
    %v3760 = vpack.c.bf16 %v3751, %v3750
    %v3761 = vpack.c.bf16 %v3753, %v3752
    %s3762 = scalar_lea.vmem [#allocation6], 80
    %v3763 = vld [vmem:[%s3762] sm:$0xf]
    %v3764 = vld [vmem:[%s3762 + $0x4] sm:$0xf]
    %v3765 = vld [vmem:[%s3762 + $0x8] sm:$0xf]
    %v3766 = vld [vmem:[%s3762 + $0xc] sm:$0xf]
    %v3771 = vunpack.c.l.b16 %v3763
    %v3772 = vunpack.c.l.b16 %v3764
    %v3773 = vunpack.c.l.b16 %v3765
    %v3774 = vunpack.c.l.b16 %v3766
    %v3775 = vpack.c.b16 %v3772, %v3771
    %v3776 = vpack.c.b16 %v3774, %v3773
    %v3780 = vsel %vm2864, %v3754, 0
    %v3783 = vsel %vm2864, %v3755, 0
    %v3786 = vsel %vm2864, %v3756, 0
    %v3789 = vsel %vm2864, %v3757, 0
    %v3792 = vsel %vm2864, %v3758, 0
    %v3795 = vsel %vm2864, %v3759, 0
    %v3798 = vsel %vm2864, %v3760, 0
    %v3801 = vsel %vm2864, %v3761, 0
    %3803 = vmatprep.subr.bf16.mxu0 0
    %3804 = vmatpush1.bf16.msra.mxu0 %v3775
    %3805 = vmatprep.subr.bf16.mxu0 0
    %3806 = vmatpush1.bf16.msra.mxu0 %v3776
    %3807 = vmatprep.subr.bf16.mxu0 0
    %3808 = vmatpush1.bf16.msra.mxu0 0
    %3809 = vmatprep.subr.bf16.mxu0 0
    %3810 = vmatpush1.bf16.msra.mxu0 0
    %3811 = vmatprep.subr.bf16.mxu0 0
    %3812 = vmatpush1.bf16.msra.mxu0 0
    %3813 = vmatprep.subr.bf16.mxu0 0
    %3814 = vmatpush1.bf16.msra.mxu0 0
    %3815 = vmatprep.subr.bf16.mxu0 0
    %3816 = vmatpush1.bf16.msra.mxu0 0
    %3817 = vmatprep.subr.bf16.mxu0 0
    %3818 = vmatpush1.bf16.msra.mxu0 0
    %3819 = vmatprep.subr.bf16.mxu0 0
    %3820 = vmatpush1.bf16.msra.mxu0 0
    %3821 = vmatprep.subr.bf16.mxu0 0
    %3822 = vmatpush1.bf16.msra.mxu0 0
    %3823 = vmatprep.subr.bf16.mxu0 0
    %3824 = vmatpush1.bf16.msra.mxu0 0
    %3825 = vmatprep.subr.bf16.mxu0 0
    %3826 = vmatpush1.bf16.msra.mxu0 0
    %3827 = vmatprep.subr.bf16.mxu0 0
    %3828 = vmatpush1.bf16.msra.mxu0 0
    %3829 = vmatprep.subr.bf16.mxu0 0
    %3830 = vmatpush1.bf16.msra.mxu0 0
    %3831 = vmatprep.subr.bf16.mxu0 0
    %3832 = vmatpush1.bf16.msra.mxu0 0
    %3833 = vmatprep.subr.bf16.mxu0 0
    %3834 = vmatpush1.bf16.msra.mxu0 0
    %3835 = vmatprep.mubr.bf16.mxu0 0
    %3836 = vmatmul.mubr.bf16.gmra.mrb[0].mxu0 %v3780
    %v3837 = vpop.f32.mrb[0].mxu0
    %v3838 = vadd.f32 0.0, %v3837
    %v3839 = vpop.f32.mrb[0].mxu0
    %v3840 = vpop.f32.mrb[0].mxu0
    %v3841 = vadd.f32 0.0, %v3840
    %v3842 = vpop.f32.mrb[0].mxu0
    %3843 = vmatprep.mubr.bf16.mxu0 0
    %3844 = vmatmul.mubr.bf16.gmra.mrb[0].mxu0 %v3783
    %v3845 = vpop.f32.mrb[0].mxu0
    %v3846 = vadd.f32 0.0, %v3845
    %v3847 = vpop.f32.mrb[0].mxu0
    %v3848 = vpop.f32.mrb[0].mxu0
    %v3849 = vadd.f32 0.0, %v3848
    %v3850 = vpop.f32.mrb[0].mxu0
    %3851 = vmatprep.mubr.bf16.mxu0 0
    %3852 = vmatmul.mubr.bf16.gmra.mrb[0].mxu0 %v3786
    %v3853 = vpop.f32.mrb[0].mxu0
    %v3854 = vadd.f32 0.0, %v3853
    %v3855 = vpop.f32.mrb[0].mxu0
    %v3856 = vpop.f32.mrb[0].mxu0
    %v3857 = vadd.f32 0.0, %v3856
    %v3858 = vpop.f32.mrb[0].mxu0
    %3859 = vmatprep.mubr.bf16.mxu0 0
    %3860 = vmatmul.mubr.bf16.gmra.mrb[0].mxu0 %v3789
    %v3861 = vpop.f32.mrb[0].mxu0
    %v3862 = vadd.f32 0.0, %v3861
    %v3863 = vpop.f32.mrb[0].mxu0
    %v3864 = vpop.f32.mrb[0].mxu0
    %v3865 = vadd.f32 0.0, %v3864
    %v3866 = vpop.f32.mrb[0].mxu0
    %3867 = vmatprep.mubr.bf16.mxu0 0
    %3868 = vmatmul.mubr.bf16.gmra.mrb[0].mxu0 %v3792
    %v3869 = vpop.f32.mrb[0].mxu0
    %v3870 = vadd.f32 0.0, %v3869
    %v3871 = vpop.f32.mrb[0].mxu0
    %v3872 = vpop.f32.mrb[0].mxu0
    %v3873 = vadd.f32 0.0, %v3872
    %v3874 = vpop.f32.mrb[0].mxu0
    %3875 = vmatprep.mubr.bf16.mxu0 0
    %3876 = vmatmul.mubr.bf16.gmra.mrb[0].mxu0 %v3795
    %v3877 = vpop.f32.mrb[0].mxu0
    %v3878 = vadd.f32 0.0, %v3877
    %v3879 = vpop.f32.mrb[0].mxu0
    %v3880 = vpop.f32.mrb[0].mxu0
    %v3881 = vadd.f32 0.0, %v3880
    %v3882 = vpop.f32.mrb[0].mxu0
    %3883 = vmatprep.mubr.bf16.mxu0 0
    %3884 = vmatmul.mubr.bf16.gmra.mrb[0].mxu0 %v3798
    %v3885 = vpop.f32.mrb[0].mxu0
    %v3886 = vadd.f32 0.0, %v3885
    %v3887 = vpop.f32.mrb[0].mxu0
    %v3888 = vpop.f32.mrb[0].mxu0
    %v3889 = vadd.f32 0.0, %v3888
    %v3890 = vpop.f32.mrb[0].mxu0
    %3891 = vmatprep.mubr.bf16.mxu0 0
    %3892 = vmatmul.mubr.bf16.gmra.mrb[0].mxu0 %v3801
    %v3893 = vpop.f32.mrb[0].mxu0
    %v3894 = vadd.f32 0.0, %v3893
    %v3895 = vpop.f32.mrb[0].mxu0
    %v3896 = vpop.f32.mrb[0].mxu0
    %v3897 = vadd.f32 0.0, %v3896
    %v3898 = vpop.f32.mrb[0].mxu0
    %3899 = vdwg.mxu0
    %v3900 = vadd.f32 %v3722, %v3838
    %v3901 = vadd.f32 %v3723, %v3841
    %v3902 = vadd.f32 %v3724, %v3846
    %v3903 = vadd.f32 %v3725, %v3849
    %v3904 = vadd.f32 %v3726, %v3854
    %v3905 = vadd.f32 %v3727, %v3857
    %v3906 = vadd.f32 %v3728, %v3862
    %v3907 = vadd.f32 %v3729, %v3865
    %v3908 = vadd.f32 %v3730, %v3870
    %v3909 = vadd.f32 %v3731, %v3873
    %v3910 = vadd.f32 %v3732, %v3878
    %v3911 = vadd.f32 %v3733, %v3881
    %v3912 = vadd.f32 %v3734, %v3886
    %v3913 = vadd.f32 %v3735, %v3889
    %v3914 = vadd.f32 %v3736, %v3894
    %v3915 = vadd.f32 %v3737, %v3897
    %s3916 = scalar_lea.vmem [#allocation2], 32
    %v3917 = vld [vmem:[%s3916] sm:$0xff]
    %v3918 = vld [vmem:[%s3916 + $0x10] sm:$0xff]
    %v3919 = vld [vmem:[%s3916 + $0x20] sm:$0xff]
    %v3920 = vld [vmem:[%s3916 + $0x30] sm:$0xff]
    %v3921 = vld [vmem:[%s3916 + $0x40] sm:$0xff]
    %v3922 = vld [vmem:[%s3916 + $0x50] sm:$0xff]
    %v3923 = vld [vmem:[%s3916 + $0x60] sm:$0xff]
    %v3924 = vld [vmem:[%s3916 + $0x70] sm:$0xff]
    %v3925 = vld [vmem:[%s3916 + $0xa0] sm:$0xff]
    %v3926 = vld [vmem:[%s3916 + $0xb0] sm:$0xff]
    %v3927 = vld [vmem:[%s3916 + $0xc0] sm:$0xff]
    %v3928 = vld [vmem:[%s3916 + $0xd0] sm:$0xff]
    %v3929 = vld [vmem:[%s3916 + $0xe0] sm:$0xff]
    %v3930 = vld [vmem:[%s3916 + $0xf0] sm:$0xff]
    %v3931 = vld [vmem:[%s3916 + $0x100] sm:$0xff]
    %v3932 = vld [vmem:[%s3916 + $0x110] sm:$0xff]
    %v3933 = vpack.c.bf16 %v3918, %v3917
    %v3934 = vpack.c.bf16 %v3920, %v3919
    %v3935 = vpack.c.bf16 %v3922, %v3921
    %v3936 = vpack.c.bf16 %v3924, %v3923
    %v3937 = vpack.c.bf16 %v3926, %v3925
    %v3938 = vpack.c.bf16 %v3928, %v3927
    %v3939 = vpack.c.bf16 %v3930, %v3929
    %v3940 = vpack.c.bf16 %v3932, %v3931
    %s3941 = scalar_lea.vmem [#allocation6], 96
    %v3942 = vld [vmem:[%s3941] sm:$0xf]
    %v3943 = vld [vmem:[%s3941 + $0x4] sm:$0xf]
    %v3944 = vld [vmem:[%s3941 + $0x8] sm:$0xf]
    %v3945 = vld [vmem:[%s3941 + $0xc] sm:$0xf]
    %v3950 = vunpack.c.l.b16 %v3942
    %v3951 = vunpack.c.l.b16 %v3943
    %v3952 = vunpack.c.l.b16 %v3944
    %v3953 = vunpack.c.l.b16 %v3945
    %v3954 = vpack.c.b16 %v3951, %v3950
    %v3955 = vpack.c.b16 %v3953, %v3952
    %v3959 = vsel %vm2864, %v3933, 0
    %v3962 = vsel %vm2864, %v3934, 0
    %v3965 = vsel %vm2864, %v3935, 0
    %v3968 = vsel %vm2864, %v3936, 0
    %v3971 = vsel %vm2864, %v3937, 0
    %v3974 = vsel %vm2864, %v3938, 0
    %v3977 = vsel %vm2864, %v3939, 0
    %v3980 = vsel %vm2864, %v3940, 0
    %3982 = vmatprep.subr.bf16.mxu0 0
    %3983 = vmatpush1.bf16.msra.mxu0 %v3954
    %3984 = vmatprep.subr.bf16.mxu0 0
    %3985 = vmatpush1.bf16.msra.mxu0 %v3955
    %3986 = vmatprep.subr.bf16.mxu0 0
    %3987 = vmatpush1.bf16.msra.mxu0 0
    %3988 = vmatprep.subr.bf16.mxu0 0
    %3989 = vmatpush1.bf16.msra.mxu0 0
    %3990 = vmatprep.subr.bf16.mxu0 0
    %3991 = vmatpush1.bf16.msra.mxu0 0
    %3992 = vmatprep.subr.bf16.mxu0 0
    %3993 = vmatpush1.bf16.msra.mxu0 0
    %3994 = vmatprep.subr.bf16.mxu0 0
    %3995 = vmatpush1.bf16.msra.mxu0 0
    %3996 = vmatprep.subr.bf16.mxu0 0
    %3997 = vmatpush1.bf16.msra.mxu0 0
    %3998 = vmatprep.subr.bf16.mxu0 0
    %3999 = vmatpush1.bf16.msra.mxu0 0
    %4000 = vmatprep.subr.bf16.mxu0 0
    %4001 = vmatpush1.bf16.msra.mxu0 0
    %4002 = vmatprep.subr.bf16.mxu0 0
    %4003 = vmatpush1.bf16.msra.mxu0 0
    %4004 = vmatprep.subr.bf16.mxu0 0
    %4005 = vmatpush1.bf16.msra.mxu0 0
    %4006 = vmatprep.subr.bf16.mxu0 0
    %4007 = vmatpush1.bf16.msra.mxu0 0
    %4008 = vmatprep.subr.bf16.mxu0 0
    %4009 = vmatpush1.bf16.msra.mxu0 0
    %4010 = vmatprep.subr.bf16.mxu0 0
    %4011 = vmatpush1.bf16.msra.mxu0 0
    %4012 = vmatprep.subr.bf16.mxu0 0
    %4013 = vmatpush1.bf16.msra.mxu0 0
    %4014 = vmatprep.mubr.bf16.mxu0 0
    %4015 = vmatmul.mubr.bf16.gmra.mrb[0].mxu0 %v3959
    %v4016 = vpop.f32.mrb[0].mxu0
    %v4017 = vadd.f32 0.0, %v4016
    %v4018 = vpop.f32.mrb[0].mxu0
    %v4019 = vpop.f32.mrb[0].mxu0
    %v4020 = vadd.f32 0.0, %v4019
    %v4021 = vpop.f32.mrb[0].mxu0
    %4022 = vmatprep.mubr.bf16.mxu0 0
    %4023 = vmatmul.mubr.bf16.gmra.mrb[0].mxu0 %v3962
    %v4024 = vpop.f32.mrb[0].mxu0
    %v4025 = vadd.f32 0.0, %v4024
    %v4026 = vpop.f32.mrb[0].mxu0
    %v4027 = vpop.f32.mrb[0].mxu0
    %v4028 = vadd.f32 0.0, %v4027
    %v4029 = vpop.f32.mrb[0].mxu0
    %4030 = vmatprep.mubr.bf16.mxu0 0
    %4031 = vmatmul.mubr.bf16.gmra.mrb[0].mxu0 %v3965
    %v4032 = vpop.f32.mrb[0].mxu0
    %v4033 = vadd.f32 0.0, %v4032
    %v4034 = vpop.f32.mrb[0].mxu0
    %v4035 = vpop.f32.mrb[0].mxu0
    %v4036 = vadd.f32 0.0, %v4035
    %v4037 = vpop.f32.mrb[0].mxu0
    %4038 = vmatprep.mubr.bf16.mxu0 0
    %4039 = vmatmul.mubr.bf16.gmra.mrb[0].mxu0 %v3968
    %v4040 = vpop.f32.mrb[0].mxu0
    %v4041 = vadd.f32 0.0, %v4040
    %v4042 = vpop.f32.mrb[0].mxu0
    %v4043 = vpop.f32.mrb[0].mxu0
    %v4044 = vadd.f32 0.0, %v4043
    %v4045 = vpop.f32.mrb[0].mxu0
    %4046 = vmatprep.mubr.bf16.mxu0 0
    %4047 = vmatmul.mubr.bf16.gmra.mrb[0].mxu0 %v3971
    %v4048 = vpop.f32.mrb[0].mxu0
    %v4049 = vadd.f32 0.0, %v4048
    %v4050 = vpop.f32.mrb[0].mxu0
    %v4051 = vpop.f32.mrb[0].mxu0
    %v4052 = vadd.f32 0.0, %v4051
    %v4053 = vpop.f32.mrb[0].mxu0
    %4054 = vmatprep.mubr.bf16.mxu0 0
    %4055 = vmatmul.mubr.bf16.gmra.mrb[0].mxu0 %v3974
    %v4056 = vpop.f32.mrb[0].mxu0
    %v4057 = vadd.f32 0.0, %v4056
    %v4058 = vpop.f32.mrb[0].mxu0
    %v4059 = vpop.f32.mrb[0].mxu0
    %v4060 = vadd.f32 0.0, %v4059
    %v4061 = vpop.f32.mrb[0].mxu0
    %4062 = vmatprep.mubr.bf16.mxu0 0
    %4063 = vmatmul.mubr.bf16.gmra.mrb[0].mxu0 %v3977
    %v4064 = vpop.f32.mrb[0].mxu0
    %v4065 = vadd.f32 0.0, %v4064
    %v4066 = vpop.f32.mrb[0].mxu0
    %v4067 = vpop.f32.mrb[0].mxu0
    %v4068 = vadd.f32 0.0, %v4067
    %v4069 = vpop.f32.mrb[0].mxu0
    %4070 = vmatprep.mubr.bf16.mxu0 0
    %4071 = vmatmul.mubr.bf16.gmra.mrb[0].mxu0 %v3980
    %v4072 = vpop.f32.mrb[0].mxu0
    %v4073 = vadd.f32 0.0, %v4072
    %v4074 = vpop.f32.mrb[0].mxu0
    %v4075 = vpop.f32.mrb[0].mxu0
    %v4076 = vadd.f32 0.0, %v4075
    %v4077 = vpop.f32.mrb[0].mxu0
    %4078 = vdwg.mxu0
    %v4079 = vadd.f32 %v3900, %v4017
    %v4080 = vadd.f32 %v3901, %v4020
    %v4081 = vadd.f32 %v3902, %v4025
    %v4082 = vadd.f32 %v3903, %v4028
    %v4083 = vadd.f32 %v3904, %v4033
    %v4084 = vadd.f32 %v3905, %v4036
    %v4085 = vadd.f32 %v3906, %v4041
    %v4086 = vadd.f32 %v3907, %v4044
    %v4087 = vadd.f32 %v3908, %v4049
    %v4088 = vadd.f32 %v3909, %v4052
    %v4089 = vadd.f32 %v3910, %v4057
    %v4090 = vadd.f32 %v3911, %v4060
    %v4091 = vadd.f32 %v3912, %v4065
    %v4092 = vadd.f32 %v3913, %v4068
    %v4093 = vadd.f32 %v3914, %v4073
    %v4094 = vadd.f32 %v3915, %v4076
    %v4095 = vld [vmem:[%s3916 + $0x1] sm:$0xff]
    %v4096 = vld [vmem:[%s3916 + $0x11] sm:$0xff]
    %v4097 = vld [vmem:[%s3916 + $0x21] sm:$0xff]
    %v4098 = vld [vmem:[%s3916 + $0x31] sm:$0xff]
    %v4099 = vld [vmem:[%s3916 + $0x41] sm:$0xff]
    %v4100 = vld [vmem:[%s3916 + $0x51] sm:$0xff]
    %v4101 = vld [vmem:[%s3916 + $0x61] sm:$0xff]
    %v4102 = vld [vmem:[%s3916 + $0x71] sm:$0xff]
    %v4103 = vld [vmem:[%s3916 + $0xa1] sm:$0xff]
    %v4104 = vld [vmem:[%s3916 + $0xb1] sm:$0xff]
    %v4105 = vld [vmem:[%s3916 + $0xc1] sm:$0xff]
    %v4106 = vld [vmem:[%s3916 + $0xd1] sm:$0xff]
    %v4107 = vld [vmem:[%s3916 + $0xe1] sm:$0xff]
    %v4108 = vld [vmem:[%s3916 + $0xf1] sm:$0xff]
    %v4109 = vld [vmem:[%s3916 + $0x101] sm:$0xff]
    %v4110 = vld [vmem:[%s3916 + $0x111] sm:$0xff]
    %v4111 = vpack.c.bf16 %v4096, %v4095
    %v4112 = vpack.c.bf16 %v4098, %v4097
    %v4113 = vpack.c.bf16 %v4100, %v4099
    %v4114 = vpack.c.bf16 %v4102, %v4101
    %v4115 = vpack.c.bf16 %v4104, %v4103
    %v4116 = vpack.c.bf16 %v4106, %v4105
    %v4117 = vpack.c.bf16 %v4108, %v4107
    %v4118 = vpack.c.bf16 %v4110, %v4109
    %s4119 = scalar_lea.vmem [#allocation6], 112
    %v4120 = vld [vmem:[%s4119] sm:$0xf]
    %v4121 = vld [vmem:[%s4119 + $0x4] sm:$0xf]
    %v4122 = vld [vmem:[%s4119 + $0x8] sm:$0xf]
    %v4123 = vld [vmem:[%s4119 + $0xc] sm:$0xf]
    %v4128 = vunpack.c.l.b16 %v4120
    %v4129 = vunpack.c.l.b16 %v4121
    %v4130 = vunpack.c.l.b16 %v4122
    %v4131 = vunpack.c.l.b16 %v4123
    %v4132 = vpack.c.b16 %v4129, %v4128
    %v4133 = vpack.c.b16 %v4131, %v4130
    %v4137 = vsel %vm2864, %v4111, 0
    %v4140 = vsel %vm2864, %v4112, 0
    %v4143 = vsel %vm2864, %v4113, 0
    %v4146 = vsel %vm2864, %v4114, 0
    %v4149 = vsel %vm2864, %v4115, 0
    %v4152 = vsel %vm2864, %v4116, 0
    %v4155 = vsel %vm2864, %v4117, 0
    %v4158 = vsel %vm2864, %v4118, 0
    %4160 = vmatprep.subr.bf16.mxu0 0
    %4161 = vmatpush1.bf16.msra.mxu0 %v4132
    %4162 = vmatprep.subr.bf16.mxu0 0
    %4163 = vmatpush1.bf16.msra.mxu0 %v4133
    %4164 = vmatprep.subr.bf16.mxu0 0
    %4165 = vmatpush1.bf16.msra.mxu0 0
    %4166 = vmatprep.subr.bf16.mxu0 0
    %4167 = vmatpush1.bf16.msra.mxu0 0
    %4168 = vmatprep.subr.bf16.mxu0 0
    %4169 = vmatpush1.bf16.msra.mxu0 0
    %4170 = vmatprep.subr.bf16.mxu0 0
    %4171 = vmatpush1.bf16.msra.mxu0 0
    %4172 = vmatprep.subr.bf16.mxu0 0
    %4173 = vmatpush1.bf16.msra.mxu0 0
    %4174 = vmatprep.subr.bf16.mxu0 0
    %4175 = vmatpush1.bf16.msra.mxu0 0
    %4176 = vmatprep.subr.bf16.mxu0 0
    %4177 = vmatpush1.bf16.msra.mxu0 0
    %4178 = vmatprep.subr.bf16.mxu0 0
    %4179 = vmatpush1.bf16.msra.mxu0 0
    %4180 = vmatprep.subr.bf16.mxu0 0
    %4181 = vmatpush1.bf16.msra.mxu0 0
    %4182 = vmatprep.subr.bf16.mxu0 0
    %4183 = vmatpush1.bf16.msra.mxu0 0
    %4184 = vmatprep.subr.bf16.mxu0 0
    %4185 = vmatpush1.bf16.msra.mxu0 0
    %4186 = vmatprep.subr.bf16.mxu0 0
    %4187 = vmatpush1.bf16.msra.mxu0 0
    %4188 = vmatprep.subr.bf16.mxu0 0
    %4189 = vmatpush1.bf16.msra.mxu0 0
    %4190 = vmatprep.subr.bf16.mxu0 0
    %4191 = vmatpush1.bf16.msra.mxu0 0
    %4192 = vmatprep.mubr.bf16.mxu0 0
    %4193 = vmatmul.mubr.bf16.gmra.mrb[0].mxu0 %v4137
    %v4194 = vpop.f32.mrb[0].mxu0
    %v4195 = vadd.f32 0.0, %v4194
    %v4196 = vpop.f32.mrb[0].mxu0
    %v4197 = vpop.f32.mrb[0].mxu0
    %v4198 = vadd.f32 0.0, %v4197
    %v4199 = vpop.f32.mrb[0].mxu0
    %4200 = vmatprep.mubr.bf16.mxu0 0
    %4201 = vmatmul.mubr.bf16.gmra.mrb[0].mxu0 %v4140
    %v4202 = vpop.f32.mrb[0].mxu0
    %v4203 = vadd.f32 0.0, %v4202
    %v4204 = vpop.f32.mrb[0].mxu0
    %v4205 = vpop.f32.mrb[0].mxu0
    %v4206 = vadd.f32 0.0, %v4205
    %v4207 = vpop.f32.mrb[0].mxu0
    %4208 = vmatprep.mubr.bf16.mxu0 0
    %4209 = vmatmul.mubr.bf16.gmra.mrb[0].mxu0 %v4143
    %v4210 = vpop.f32.mrb[0].mxu0
    %v4211 = vadd.f32 0.0, %v4210
    %v4212 = vpop.f32.mrb[0].mxu0
    %v4213 = vpop.f32.mrb[0].mxu0
    %v4214 = vadd.f32 0.0, %v4213
    %v4215 = vpop.f32.mrb[0].mxu0
    %4216 = vmatprep.mubr.bf16.mxu0 0
    %4217 = vmatmul.mubr.bf16.gmra.mrb[0].mxu0 %v4146
    %v4218 = vpop.f32.mrb[0].mxu0
    %v4219 = vadd.f32 0.0, %v4218
    %v4220 = vpop.f32.mrb[0].mxu0
    %v4221 = vpop.f32.mrb[0].mxu0
    %v4222 = vadd.f32 0.0, %v4221
    %v4223 = vpop.f32.mrb[0].mxu0
    %4224 = vmatprep.mubr.bf16.mxu0 0
    %4225 = vmatmul.mubr.bf16.gmra.mrb[0].mxu0 %v4149
    %v4226 = vpop.f32.mrb[0].mxu0
    %v4227 = vadd.f32 0.0, %v4226
    %v4228 = vpop.f32.mrb[0].mxu0
    %v4229 = vpop.f32.mrb[0].mxu0
    %v4230 = vadd.f32 0.0, %v4229
    %v4231 = vpop.f32.mrb[0].mxu0
    %4232 = vmatprep.mubr.bf16.mxu0 0
    %4233 = vmatmul.mubr.bf16.gmra.mrb[0].mxu0 %v4152
    %v4234 = vpop.f32.mrb[0].mxu0
    %v4235 = vadd.f32 0.0, %v4234
    %v4236 = vpop.f32.mrb[0].mxu0
    %v4237 = vpop.f32.mrb[0].mxu0
    %v4238 = vadd.f32 0.0, %v4237
    %v4239 = vpop.f32.mrb[0].mxu0
    %4240 = vmatprep.mubr.bf16.mxu0 0
    %4241 = vmatmul.mubr.bf16.gmra.mrb[0].mxu0 %v4155
    %v4242 = vpop.f32.mrb[0].mxu0
    %v4243 = vadd.f32 0.0, %v4242
    %v4244 = vpop.f32.mrb[0].mxu0
    %v4245 = vpop.f32.mrb[0].mxu0
    %v4246 = vadd.f32 0.0, %v4245
    %v4247 = vpop.f32.mrb[0].mxu0
    %4248 = vmatprep.mubr.bf16.mxu0 0
    %4249 = vmatmul.mubr.bf16.gmra.mrb[0].mxu0 %v4158
    %v4250 = vpop.f32.mrb[0].mxu0
    %v4251 = vadd.f32 0.0, %v4250
    %v4252 = vpop.f32.mrb[0].mxu0
    %v4253 = vpop.f32.mrb[0].mxu0
    %v4254 = vadd.f32 0.0, %v4253
    %v4255 = vpop.f32.mrb[0].mxu0
    %4256 = vdwg.mxu0
    %v4257 = vadd.f32 %v4079, %v4195
    %v4258 = vadd.f32 %v4080, %v4198
    %v4259 = vadd.f32 %v4081, %v4203
    %v4260 = vadd.f32 %v4082, %v4206
    %v4261 = vadd.f32 %v4083, %v4211
    %v4262 = vadd.f32 %v4084, %v4214
    %v4263 = vadd.f32 %v4085, %v4219
    %v4264 = vadd.f32 %v4086, %v4222
    %v4265 = vadd.f32 %v4087, %v4227
    %v4266 = vadd.f32 %v4088, %v4230
    %v4267 = vadd.f32 %v4089, %v4235
    %v4268 = vadd.f32 %v4090, %v4238
    %v4269 = vadd.f32 %v4091, %v4243
    %v4270 = vadd.f32 %v4092, %v4246
    %v4271 = vadd.f32 %v4093, %v4251
    %v4272 = vadd.f32 %v4094, %v4254
    %v4273 = vld [vmem:[%s3916 + $0x2] sm:$0xff]
    %v4274 = vld [vmem:[%s3916 + $0x12] sm:$0xff]
    %v4275 = vld [vmem:[%s3916 + $0x22] sm:$0xff]
    %v4276 = vld [vmem:[%s3916 + $0x32] sm:$0xff]
    %v4277 = vld [vmem:[%s3916 + $0x42] sm:$0xff]
    %v4278 = vld [vmem:[%s3916 + $0x52] sm:$0xff]
    %v4279 = vld [vmem:[%s3916 + $0x62] sm:$0xff]
    %v4280 = vld [vmem:[%s3916 + $0x72] sm:$0xff]
    %v4281 = vld [vmem:[%s3916 + $0xa2] sm:$0xff]
    %v4282 = vld [vmem:[%s3916 + $0xb2] sm:$0xff]
    %v4283 = vld [vmem:[%s3916 + $0xc2] sm:$0xff]
    %v4284 = vld [vmem:[%s3916 + $0xd2] sm:$0xff]
    %v4285 = vld [vmem:[%s3916 + $0xe2] sm:$0xff]
    %v4286 = vld [vmem:[%s3916 + $0xf2] sm:$0xff]
    %v4287 = vld [vmem:[%s3916 + $0x102] sm:$0xff]
    %v4288 = vld [vmem:[%s3916 + $0x112] sm:$0xff]
    %v4289 = vpack.c.bf16 %v4274, %v4273
    %v4290 = vpack.c.bf16 %v4276, %v4275
    %v4291 = vpack.c.bf16 %v4278, %v4277
    %v4292 = vpack.c.bf16 %v4280, %v4279
    %v4293 = vpack.c.bf16 %v4282, %v4281
    %v4294 = vpack.c.bf16 %v4284, %v4283
    %v4295 = vpack.c.bf16 %v4286, %v4285
    %v4296 = vpack.c.bf16 %v4288, %v4287
    %s4297 = scalar_lea.vmem [#allocation6], 128
    %v4298 = vld [vmem:[%s4297] sm:$0xf]
    %v4299 = vld [vmem:[%s4297 + $0x4] sm:$0xf]
    %v4300 = vld [vmem:[%s4297 + $0x8] sm:$0xf]
    %v4301 = vld [vmem:[%s4297 + $0xc] sm:$0xf]
    %v4306 = vunpack.c.l.b16 %v4298
    %v4307 = vunpack.c.l.b16 %v4299
    %v4308 = vunpack.c.l.b16 %v4300
    %v4309 = vunpack.c.l.b16 %v4301
    %v4310 = vpack.c.b16 %v4307, %v4306
    %v4311 = vpack.c.b16 %v4309, %v4308
    %v4315 = vsel %vm2864, %v4289, 0
    %v4318 = vsel %vm2864, %v4290, 0
    %v4321 = vsel %vm2864, %v4291, 0
    %v4324 = vsel %vm2864, %v4292, 0
    %v4327 = vsel %vm2864, %v4293, 0
    %v4330 = vsel %vm2864, %v4294, 0
    %v4333 = vsel %vm2864, %v4295, 0
    %v4336 = vsel %vm2864, %v4296, 0
    %4338 = vmatprep.subr.bf16.mxu0 0
    %4339 = vmatpush1.bf16.msra.mxu0 %v4310
    %4340 = vmatprep.subr.bf16.mxu0 0
    %4341 = vmatpush1.bf16.msra.mxu0 %v4311
    %4342 = vmatprep.subr.bf16.mxu0 0
    %4343 = vmatpush1.bf16.msra.mxu0 0
    %4344 = vmatprep.subr.bf16.mxu0 0
    %4345 = vmatpush1.bf16.msra.mxu0 0
    %4346 = vmatprep.subr.bf16.mxu0 0
    %4347 = vmatpush1.bf16.msra.mxu0 0
    %4348 = vmatprep.subr.bf16.mxu0 0
    %4349 = vmatpush1.bf16.msra.mxu0 0
    %4350 = vmatprep.subr.bf16.mxu0 0
    %4351 = vmatpush1.bf16.msra.mxu0 0
    %4352 = vmatprep.subr.bf16.mxu0 0
    %4353 = vmatpush1.bf16.msra.mxu0 0
    %4354 = vmatprep.subr.bf16.mxu0 0
    %4355 = vmatpush1.bf16.msra.mxu0 0
    %4356 = vmatprep.subr.bf16.mxu0 0
    %4357 = vmatpush1.bf16.msra.mxu0 0
    %4358 = vmatprep.subr.bf16.mxu0 0
    %4359 = vmatpush1.bf16.msra.mxu0 0
    %4360 = vmatprep.subr.bf16.mxu0 0
    %4361 = vmatpush1.bf16.msra.mxu0 0
    %4362 = vmatprep.subr.bf16.mxu0 0
    %4363 = vmatpush1.bf16.msra.mxu0 0
    %4364 = vmatprep.subr.bf16.mxu0 0
    %4365 = vmatpush1.bf16.msra.mxu0 0
    %4366 = vmatprep.subr.bf16.mxu0 0
    %4367 = vmatpush1.bf16.msra.mxu0 0
    %4368 = vmatprep.subr.bf16.mxu0 0
    %4369 = vmatpush1.bf16.msra.mxu0 0
    %4370 = vmatprep.mubr.bf16.mxu0 0
    %4371 = vmatmul.mubr.bf16.gmra.mrb[0].mxu0 %v4315
    %v4372 = vpop.f32.mrb[0].mxu0
    %v4373 = vadd.f32 0.0, %v4372
    %v4374 = vpop.f32.mrb[0].mxu0
    %v4375 = vpop.f32.mrb[0].mxu0
    %v4376 = vadd.f32 0.0, %v4375
    %v4377 = vpop.f32.mrb[0].mxu0
    %4378 = vmatprep.mubr.bf16.mxu0 0
    %4379 = vmatmul.mubr.bf16.gmra.mrb[0].mxu0 %v4318
    %v4380 = vpop.f32.mrb[0].mxu0
    %v4381 = vadd.f32 0.0, %v4380
    %v4382 = vpop.f32.mrb[0].mxu0
    %v4383 = vpop.f32.mrb[0].mxu0
    %v4384 = vadd.f32 0.0, %v4383
    %v4385 = vpop.f32.mrb[0].mxu0
    %4386 = vmatprep.mubr.bf16.mxu0 0
    %4387 = vmatmul.mubr.bf16.gmra.mrb[0].mxu0 %v4321
    %v4388 = vpop.f32.mrb[0].mxu0
    %v4389 = vadd.f32 0.0, %v4388
    %v4390 = vpop.f32.mrb[0].mxu0
    %v4391 = vpop.f32.mrb[0].mxu0
    %v4392 = vadd.f32 0.0, %v4391
    %v4393 = vpop.f32.mrb[0].mxu0
    %4394 = vmatprep.mubr.bf16.mxu0 0
    %4395 = vmatmul.mubr.bf16.gmra.mrb[0].mxu0 %v4324
    %v4396 = vpop.f32.mrb[0].mxu0
    %v4397 = vadd.f32 0.0, %v4396
    %v4398 = vpop.f32.mrb[0].mxu0
    %v4399 = vpop.f32.mrb[0].mxu0
    %v4400 = vadd.f32 0.0, %v4399
    %v4401 = vpop.f32.mrb[0].mxu0
    %4402 = vmatprep.mubr.bf16.mxu0 0
    %4403 = vmatmul.mubr.bf16.gmra.mrb[0].mxu0 %v4327
    %v4404 = vpop.f32.mrb[0].mxu0
    %v4405 = vadd.f32 0.0, %v4404
    %v4406 = vpop.f32.mrb[0].mxu0
    %v4407 = vpop.f32.mrb[0].mxu0
    %v4408 = vadd.f32 0.0, %v4407
    %v4409 = vpop.f32.mrb[0].mxu0
    %4410 = vmatprep.mubr.bf16.mxu0 0
    %4411 = vmatmul.mubr.bf16.gmra.mrb[0].mxu0 %v4330
    %v4412 = vpop.f32.mrb[0].mxu0
    %v4413 = vadd.f32 0.0, %v4412
    %v4414 = vpop.f32.mrb[0].mxu0
    %v4415 = vpop.f32.mrb[0].mxu0
    %v4416 = vadd.f32 0.0, %v4415
    %v4417 = vpop.f32.mrb[0].mxu0
    %4418 = vmatprep.mubr.bf16.mxu0 0
    %4419 = vmatmul.mubr.bf16.gmra.mrb[0].mxu0 %v4333
    %v4420 = vpop.f32.mrb[0].mxu0
    %v4421 = vadd.f32 0.0, %v4420
    %v4422 = vpop.f32.mrb[0].mxu0
    %v4423 = vpop.f32.mrb[0].mxu0
    %v4424 = vadd.f32 0.0, %v4423
    %v4425 = vpop.f32.mrb[0].mxu0
    %4426 = vmatprep.mubr.bf16.mxu0 0
    %4427 = vmatmul.mubr.bf16.gmra.mrb[0].mxu0 %v4336
    %v4428 = vpop.f32.mrb[0].mxu0
    %v4429 = vadd.f32 0.0, %v4428
    %v4430 = vpop.f32.mrb[0].mxu0
    %v4431 = vpop.f32.mrb[0].mxu0
    %v4432 = vadd.f32 0.0, %v4431
    %v4433 = vpop.f32.mrb[0].mxu0
    %4434 = vdwg.mxu0
    %v4435 = vadd.f32 %v4257, %v4373
    %v4436 = vadd.f32 %v4258, %v4376
    %v4437 = vadd.f32 %v4259, %v4381
    %v4438 = vadd.f32 %v4260, %v4384
    %v4439 = vadd.f32 %v4261, %v4389
    %v4440 = vadd.f32 %v4262, %v4392
    %v4441 = vadd.f32 %v4263, %v4397
    %v4442 = vadd.f32 %v4264, %v4400
    %v4443 = vadd.f32 %v4265, %v4405
    %v4444 = vadd.f32 %v4266, %v4408
    %v4445 = vadd.f32 %v4267, %v4413
    %v4446 = vadd.f32 %v4268, %v4416
    %v4447 = vadd.f32 %v4269, %v4421
    %v4448 = vadd.f32 %v4270, %v4424
    %v4449 = vadd.f32 %v4271, %v4429
    %v4450 = vadd.f32 %v4272, %v4432
    %v4451 = vld [vmem:[%s4] sm:$0x1]
    %v4453 = vlaneseq
    %v4454 = vshrl.u32 %v4453, 7
    %v4455 = vsub.s32 0, %v4454
    %v4456 = vrot.slane %v4451, %v4455
    %v4458 = vadd.f32 %v4435, %v4456
    %v4459 = vadd.f32 %v4436, %v4456
    %v4460 = vadd.f32 %v4437, %v4456
    %v4461 = vadd.f32 %v4438, %v4456
    %v4462 = vadd.f32 %v4439, %v4456
    %v4463 = vadd.f32 %v4440, %v4456
    %v4464 = vadd.f32 %v4441, %v4456
    %v4465 = vadd.f32 %v4442, %v4456
    %v4466 = vadd.f32 %v4443, %v4456
    %v4467 = vadd.f32 %v4444, %v4456
    %v4468 = vadd.f32 %v4445, %v4456
    %v4469 = vadd.f32 %v4446, %v4456
    %v4470 = vadd.f32 %v4447, %v4456
    %v4471 = vadd.f32 %v4448, %v4456
    %v4472 = vadd.f32 %v4449, %v4456
    %v4473 = vadd.f32 %v4450, %v4456
    %v4474 = vmax.f32 %v4458, 0.0
    %v4475 = vmax.f32 %v4459, 0.0
    %v4476 = vmax.f32 %v4460, 0.0
    %v4477 = vmax.f32 %v4461, 0.0
    %v4478 = vmax.f32 %v4462, 0.0
    %v4479 = vmax.f32 %v4463, 0.0
    %v4480 = vmax.f32 %v4464, 0.0
    %v4481 = vmax.f32 %v4465, 0.0
    %v4482 = vmax.f32 %v4466, 0.0
    %v4483 = vmax.f32 %v4467, 0.0
    %v4484 = vmax.f32 %v4468, 0.0
    %v4485 = vmax.f32 %v4469, 0.0
    %v4486 = vmax.f32 %v4470, 0.0
    %v4487 = vmax.f32 %v4471, 0.0
    %v4488 = vmax.f32 %v4472, 0.0
    %v4489 = vmax.f32 %v4473, 0.0
    %v4490 = vmax.f32 %v4474, %v4475
    %v4491 = vmax.f32 %v4476, %v4477
    %v4492 = vmax.f32 %v4478, %v4479
    %v4493 = vmax.f32 %v4480, %v4481
    %v4494 = vmax.f32 %v4482, %v4483
    %v4495 = vmax.f32 %v4484, %v4485
    %v4496 = vmax.f32 %v4486, %v4487
    %v4497 = vmax.f32 %v4488, %v4489
    %v4506 = vcombine.high %v4490, %v4490
    %v4508 = vunpack.c.l.s4 1983009808
    %v4509 = vunpack.c.0.s8 %v4508
    %v4510 = vlaneseq
    %v4511 = vshrl.u32 %v4510, 7
    %v4512 = vsub.s32 %v4509, %v4511
    %v4513 = vrot.slane %v4490, %v4512
    %v4515 = vunpack.c.l.s4 1983009808
    %v4516 = vunpack.c.0.s8 %v4515
    %v4517 = vlaneseq
    %v4518 = vshrl.u32 %v4517, 7
    %v4519 = vsub.s32 %v4516, %v4518
    %v4520 = vrot.slane %v4506, %v4519
    %v4521 = vcombine.high %v4513, %v4513
    %v4522 = vcombine.high %v4520, %v4520
    %v4523 = vcombine.high %v4491, %v4491
    %v4525 = vunpack.c.l.s4 1983009808
    %v4526 = vunpack.c.0.s8 %v4525
    %v4527 = vlaneseq
    %v4528 = vshrl.u32 %v4527, 7
    %v4529 = vsub.s32 %v4526, %v4528
    %v4530 = vrot.slane %v4491, %v4529
    %v4532 = vunpack.c.l.s4 1983009808
    %v4533 = vunpack.c.0.s8 %v4532
    %v4534 = vlaneseq
    %v4535 = vshrl.u32 %v4534, 7
    %v4536 = vsub.s32 %v4533, %v4535
    %v4537 = vrot.slane %v4523, %v4536
    %v4538 = vcombine.high %v4530, %v4530
    %v4539 = vcombine.high %v4537, %v4537
    %v4540 = vcombine.high %v4492, %v4492
    %v4542 = vunpack.c.l.s4 1983009808
    %v4543 = vunpack.c.0.s8 %v4542
    %v4544 = vlaneseq
    %v4545 = vshrl.u32 %v4544, 7
    %v4546 = vsub.s32 %v4543, %v4545
    %v4547 = vrot.slane %v4492, %v4546
    %v4549 = vunpack.c.l.s4 1983009808
    %v4550 = vunpack.c.0.s8 %v4549
    %v4551 = vlaneseq
    %v4552 = vshrl.u32 %v4551, 7
    %v4553 = vsub.s32 %v4550, %v4552
    %v4554 = vrot.slane %v4540, %v4553
    %v4555 = vcombine.high %v4547, %v4547
    %v4556 = vcombine.high %v4554, %v4554
    %v4557 = vcombine.high %v4493, %v4493
    %v4559 = vunpack.c.l.s4 1983009808
    %v4560 = vunpack.c.0.s8 %v4559
    %v4561 = vlaneseq
    %v4562 = vshrl.u32 %v4561, 7
    %v4563 = vsub.s32 %v4560, %v4562
    %v4564 = vrot.slane %v4493, %v4563
    %v4566 = vunpack.c.l.s4 1983009808
    %v4567 = vunpack.c.0.s8 %v4566
    %v4568 = vlaneseq
    %v4569 = vshrl.u32 %v4568, 7
    %v4570 = vsub.s32 %v4567, %v4569
    %v4571 = vrot.slane %v4557, %v4570
    %v4572 = vcombine.high %v4564, %v4564
    %v4573 = vcombine.high %v4571, %v4571
    %v4574 = vcombine.high %v4494, %v4494
    %v4576 = vunpack.c.l.s4 1983009808
    %v4577 = vunpack.c.0.s8 %v4576
    %v4578 = vlaneseq
    %v4579 = vshrl.u32 %v4578, 7
    %v4580 = vsub.s32 %v4577, %v4579
    %v4581 = vrot.slane %v4494, %v4580
    %v4583 = vunpack.c.l.s4 1983009808
    %v4584 = vunpack.c.0.s8 %v4583
    %v4585 = vlaneseq
    %v4586 = vshrl.u32 %v4585, 7
    %v4587 = vsub.s32 %v4584, %v4586
    %v4588 = vrot.slane %v4574, %v4587
    %v4589 = vcombine.high %v4581, %v4581
    %v4590 = vcombine.high %v4588, %v4588
    %v4591 = vcombine.high %v4495, %v4495
    %v4593 = vunpack.c.l.s4 1983009808
    %v4594 = vunpack.c.0.s8 %v4593
    %v4595 = vlaneseq
    %v4596 = vshrl.u32 %v4595, 7
    %v4597 = vsub.s32 %v4594, %v4596
    %v4598 = vrot.slane %v4495, %v4597
    %v4600 = vunpack.c.l.s4 1983009808
    %v4601 = vunpack.c.0.s8 %v4600
    %v4602 = vlaneseq
    %v4603 = vshrl.u32 %v4602, 7
    %v4604 = vsub.s32 %v4601, %v4603
    %v4605 = vrot.slane %v4591, %v4604
    %v4606 = vcombine.high %v4598, %v4598
    %v4607 = vcombine.high %v4605, %v4605
    %v4608 = vcombine.high %v4496, %v4496
    %v4610 = vunpack.c.l.s4 1983009808
    %v4611 = vunpack.c.0.s8 %v4610
    %v4612 = vlaneseq
    %v4613 = vshrl.u32 %v4612, 7
    %v4614 = vsub.s32 %v4611, %v4613
    %v4615 = vrot.slane %v4496, %v4614
    %v4617 = vunpack.c.l.s4 1983009808
    %v4618 = vunpack.c.0.s8 %v4617
    %v4619 = vlaneseq
    %v4620 = vshrl.u32 %v4619, 7
    %v4621 = vsub.s32 %v4618, %v4620
    %v4622 = vrot.slane %v4608, %v4621
    %v4623 = vcombine.high %v4615, %v4615
    %v4624 = vcombine.high %v4622, %v4622
    %v4625 = vcombine.high %v4497, %v4497
    %v4627 = vunpack.c.l.s4 1983009808
    %v4628 = vunpack.c.0.s8 %v4627
    %v4629 = vlaneseq
    %v4630 = vshrl.u32 %v4629, 7
    %v4631 = vsub.s32 %v4628, %v4630
    %v4632 = vrot.slane %v4497, %v4631
    %v4634 = vunpack.c.l.s4 1983009808
    %v4635 = vunpack.c.0.s8 %v4634
    %v4636 = vlaneseq
    %v4637 = vshrl.u32 %v4636, 7
    %v4638 = vsub.s32 %v4635, %v4637
    %v4639 = vrot.slane %v4625, %v4638
    %v4640 = vcombine.high %v4632, %v4632
    %v4641 = vcombine.high %v4639, %v4639
    %v4674 = vrot.slane %v4513, 7
    %v4675 = vrot.slane %v4674, 2
    %v4676 = vrot.slane %v4521, 7
    %v4677 = vrot.slane %v4676, 2
    %v4678 = vrot.slane %v4520, 7
    %v4679 = vrot.slane %v4678, 2
    %v4680 = vrot.slane %v4522, 7
    %v4681 = vrot.slane %v4680, 2
    %v4682 = vrot.slane %v4530, 7
    %v4683 = vrot.slane %v4682, 2
    %v4684 = vrot.slane %v4538, 7
    %v4685 = vrot.slane %v4684, 2
    %v4686 = vrot.slane %v4537, 7
    %v4687 = vrot.slane %v4686, 2
    %v4688 = vrot.slane %v4539, 7
    %v4689 = vrot.slane %v4688, 2
    %v4690 = vrot.slane %v4547, 7
    %v4691 = vrot.slane %v4690, 2
    %v4692 = vrot.slane %v4555, 7
    %v4693 = vrot.slane %v4692, 2
    %v4694 = vrot.slane %v4554, 7
    %v4695 = vrot.slane %v4694, 2
    %v4696 = vrot.slane %v4556, 7
    %v4697 = vrot.slane %v4696, 2
    %v4698 = vrot.slane %v4564, 7
    %v4699 = vrot.slane %v4698, 2
    %v4700 = vrot.slane %v4572, 7
    %v4701 = vrot.slane %v4700, 2
    %v4702 = vrot.slane %v4571, 7
    %v4703 = vrot.slane %v4702, 2
    %v4704 = vrot.slane %v4573, 7
    %v4705 = vrot.slane %v4704, 2
    %v4706 = vrot.slane %v4581, 7
    %v4707 = vrot.slane %v4706, 2
    %v4708 = vrot.slane %v4589, 7
    %v4709 = vrot.slane %v4708, 2
    %v4710 = vrot.slane %v4588, 7
    %v4711 = vrot.slane %v4710, 2
    %v4712 = vrot.slane %v4590, 7
    %v4713 = vrot.slane %v4712, 2
    %v4714 = vrot.slane %v4598, 7
    %v4715 = vrot.slane %v4714, 2
    %v4716 = vrot.slane %v4606, 7
    %v4717 = vrot.slane %v4716, 2
    %v4718 = vrot.slane %v4605, 7
    %v4719 = vrot.slane %v4718, 2
    %v4720 = vrot.slane %v4607, 7
    %v4721 = vrot.slane %v4720, 2
    %v4722 = vrot.slane %v4615, 7
    %v4723 = vrot.slane %v4722, 2
    %v4724 = vrot.slane %v4623, 7
    %v4725 = vrot.slane %v4724, 2
    %v4726 = vrot.slane %v4622, 7
    %v4727 = vrot.slane %v4726, 2
    %v4728 = vrot.slane %v4624, 7
    %v4729 = vrot.slane %v4728, 2
    %v4730 = vrot.slane %v4632, 7
    %v4731 = vrot.slane %v4730, 2
    %v4732 = vrot.slane %v4640, 7
    %v4733 = vrot.slane %v4732, 2
    %v4734 = vrot.slane %v4639, 7
    %v4735 = vrot.slane %v4734, 2
    %v4736 = vrot.slane %v4641, 7
    %v4737 = vrot.slane %v4736, 2
    %v4770 = vmax.f32 %v4513, %v4675
    %v4771 = vmax.f32 %v4521, %v4677
    %v4772 = vmax.f32 %v4520, %v4679
    %v4773 = vmax.f32 %v4522, %v4681
    %v4774 = vmax.f32 %v4530, %v4683
    %v4775 = vmax.f32 %v4538, %v4685
    %v4776 = vmax.f32 %v4537, %v4687
    %v4777 = vmax.f32 %v4539, %v4689
    %v4778 = vmax.f32 %v4547, %v4691
    %v4779 = vmax.f32 %v4555, %v4693
    %v4780 = vmax.f32 %v4554, %v4695
    %v4781 = vmax.f32 %v4556, %v4697
    %v4782 = vmax.f32 %v4564, %v4699
    %v4783 = vmax.f32 %v4572, %v4701
    %v4784 = vmax.f32 %v4571, %v4703
    %v4785 = vmax.f32 %v4573, %v4705
    %v4786 = vmax.f32 %v4581, %v4707
    %v4787 = vmax.f32 %v4589, %v4709
    %v4788 = vmax.f32 %v4588, %v4711
    %v4789 = vmax.f32 %v4590, %v4713
    %v4790 = vmax.f32 %v4598, %v4715
    %v4791 = vmax.f32 %v4606, %v4717
    %v4792 = vmax.f32 %v4605, %v4719
    %v4793 = vmax.f32 %v4607, %v4721
    %v4794 = vmax.f32 %v4615, %v4723
    %v4795 = vmax.f32 %v4623, %v4725
    %v4796 = vmax.f32 %v4622, %v4727
    %v4797 = vmax.f32 %v4624, %v4729
    %v4798 = vmax.f32 %v4632, %v4731
    %v4799 = vmax.f32 %v4640, %v4733
    %v4800 = vmax.f32 %v4639, %v4735
    %v4801 = vmax.f32 %v4641, %v4737
    %v4802 = vpack.c.bf16 %v4770, %v4770
    %v4803 = vpack.c.bf16 %v4771, %v4771
    %v4804 = vpack.c.bf16 %v4772, %v4772
    %v4805 = vpack.c.bf16 %v4773, %v4773
    %v4806 = vpack.c.bf16 %v4774, %v4774
    %v4807 = vpack.c.bf16 %v4775, %v4775
    %v4808 = vpack.c.bf16 %v4776, %v4776
    %v4809 = vpack.c.bf16 %v4777, %v4777
    %v4810 = vpack.c.bf16 %v4778, %v4778
    %v4811 = vpack.c.bf16 %v4779, %v4779
    %v4812 = vpack.c.bf16 %v4780, %v4780
    %v4813 = vpack.c.bf16 %v4781, %v4781
    %v4814 = vpack.c.bf16 %v4782, %v4782
    %v4815 = vpack.c.bf16 %v4783, %v4783
    %v4816 = vpack.c.bf16 %v4784, %v4784
    %v4817 = vpack.c.bf16 %v4785, %v4785
    %v4818 = vpack.c.bf16 %v4786, %v4786
    %v4819 = vpack.c.bf16 %v4787, %v4787
    %v4820 = vpack.c.bf16 %v4788, %v4788
    %v4821 = vpack.c.bf16 %v4789, %v4789
    %v4822 = vpack.c.bf16 %v4790, %v4790
    %v4823 = vpack.c.bf16 %v4791, %v4791
    %v4824 = vpack.c.bf16 %v4792, %v4792
    %v4825 = vpack.c.bf16 %v4793, %v4793
    %v4826 = vpack.c.bf16 %v4794, %v4794
    %v4827 = vpack.c.bf16 %v4795, %v4795
    %v4828 = vpack.c.bf16 %v4796, %v4796
    %v4829 = vpack.c.bf16 %v4797, %v4797
    %v4830 = vpack.c.bf16 %v4798, %v4798
    %v4831 = vpack.c.bf16 %v4799, %v4799
    %v4832 = vpack.c.bf16 %v4800, %v4800
    %v4833 = vpack.c.bf16 %v4801, %v4801
    %v4834 = vld [vmem:[#allocation8] sm:$0xff]
    %v4835 = vld [vmem:[#allocation8 + $0x8] sm:$0xff]
    %v4836 = vld [vmem:[#allocation8 + $0x10] sm:$0xff]
    %v4837 = vld [vmem:[#allocation8 + $0x18] sm:$0xff]
    %v4838 = vld [vmem:[#allocation8 + $0x20] sm:$0xff]
    %v4839 = vld [vmem:[#allocation8 + $0x28] sm:$0xff]
    %v4840 = vld [vmem:[#allocation8 + $0x30] sm:$0xff]
    %v4841 = vld [vmem:[#allocation8 + $0x38] sm:$0xff]
    %s4842 = scalar_lea.vmem [#allocation8], 64
    %v4843 = vld [vmem:[%s4842] sm:$0xff]
    %v4844 = vld [vmem:[%s4842 + $0x8] sm:$0xff]
    %v4845 = vld [vmem:[%s4842 + $0x10] sm:$0xff]
    %v4846 = vld [vmem:[%s4842 + $0x18] sm:$0xff]
    %v4847 = vld [vmem:[%s4842 + $0x20] sm:$0xff]
    %v4848 = vld [vmem:[%s4842 + $0x28] sm:$0xff]
    %v4849 = vld [vmem:[%s4842 + $0x30] sm:$0xff]
    %v4850 = vld [vmem:[%s4842 + $0x38] sm:$0xff]
    %v4853 = vunpack.c.l.b16 %v4803
    %v4854 = vunpack.c.l.b16 %v4819
    %v4855 = vrot.slane %v4854, 7
    %v4856 = vsel %vm2728, %v4855, %v4853
    %v4857 = vpack.c.b16 %v4856, %v4856
    %v4866 = vunpack.c.l.b16 %v4843
    %v4867 = vunpack.c.h.b16 %v4843
    %v4868 = vunpack.c.l.b16 %v4844
    %v4869 = vunpack.c.h.b16 %v4844
    %v4870 = vunpack.c.l.b16 %v4845
    %v4871 = vunpack.c.h.b16 %v4845
    %v4872 = vunpack.c.l.b16 %v4846
    %v4873 = vunpack.c.h.b16 %v4846
    %v4874 = vunpack.c.l.b16 %v4847
    %v4875 = vunpack.c.h.b16 %v4847
    %v4876 = vunpack.c.l.b16 %v4848
    %v4877 = vunpack.c.h.b16 %v4848
    %v4878 = vunpack.c.l.b16 %v4849
    %v4879 = vunpack.c.h.b16 %v4849
    %v4880 = vunpack.c.l.b16 %v4850
    %v4881 = vunpack.c.h.b16 %v4850
    %v4882 = vpack.c.b16 %v4868, %v4866
    %v4883 = vpack.c.b16 %v4869, %v4867
    %v4884 = vpack.c.b16 %v4872, %v4870
    %v4885 = vpack.c.b16 %v4873, %v4871
    %v4886 = vpack.c.b16 %v4876, %v4874
    %v4887 = vpack.c.b16 %v4877, %v4875
    %v4888 = vpack.c.b16 %v4880, %v4878
    %v4889 = vpack.c.b16 %v4881, %v4879
    %vm4898 = vcmask 523264
    %v4900 = vsel %vm4898, %v4857, 0
    %4902 = vmatprep.subr.bf16.mxu0 %v4883
    %4903 = vmatpush1.bf16.msra.mxu0 %v4882
    %4904 = vmatprep.subr.bf16.mxu0 %v4885
    %4905 = vmatpush1.bf16.msra.mxu0 %v4884
    %4906 = vmatprep.subr.bf16.mxu0 %v4887
    %4907 = vmatpush1.bf16.msra.mxu0 %v4886
    %4908 = vmatprep.subr.bf16.mxu0 %v4889
    %4909 = vmatpush1.bf16.msra.mxu0 %v4888
    %4910 = vmatprep.subr.bf16.mxu0 0
    %4911 = vmatpush1.bf16.msra.mxu0 0
    %4912 = vmatprep.subr.bf16.mxu0 0
    %4913 = vmatpush1.bf16.msra.mxu0 0
    %4914 = vmatprep.subr.bf16.mxu0 0
    %4915 = vmatpush1.bf16.msra.mxu0 0
    %4916 = vmatprep.subr.bf16.mxu0 0
    %4917 = vmatpush1.bf16.msra.mxu0 0
    %4918 = vmatprep.subr.bf16.mxu0 0
    %4919 = vmatpush1.bf16.msra.mxu0 0
    %4920 = vmatprep.subr.bf16.mxu0 0
    %4921 = vmatpush1.bf16.msra.mxu0 0
    %4922 = vmatprep.subr.bf16.mxu0 0
    %4923 = vmatpush1.bf16.msra.mxu0 0
    %4924 = vmatprep.subr.bf16.mxu0 0
    %4925 = vmatpush1.bf16.msra.mxu0 0
    %4926 = vmatprep.subr.bf16.mxu0 0
    %4927 = vmatpush1.bf16.msra.mxu0 0
    %4928 = vmatprep.subr.bf16.mxu0 0
    %4929 = vmatpush1.bf16.msra.mxu0 0
    %4930 = vmatprep.subr.bf16.mxu0 0
    %4931 = vmatpush1.bf16.msra.mxu0 0
    %4932 = vmatprep.subr.bf16.mxu0 0
    %4933 = vmatpush1.bf16.msra.mxu0 0
    %4934 = vmatprep.mubr.bf16.mxu0 0
    %4935 = vmatmul.mubr.bf16.gmra.mrb[0].mxu0 %v4900
    %v4936 = vpop.f32.mrb[0].mxu0
    %v4937 = vadd.f32 0.0, %v4936
    %v4938 = vpop.f32.mrb[0].mxu0
    %v4939 = vadd.f32 0.0, %v4938
    %v4940 = vpop.f32.mrb[0].mxu0
    %v4941 = vpop.f32.mrb[0].mxu0
    %4942 = vdwg.mxu0
    %v4945 = vunpack.c.l.b16 %v4802
    %v4946 = vunpack.c.l.b16 %v4818
    %v4947 = vrot.slane %v4946, 7
    %v4948 = vsel %vm2728, %v4947, %v4945
    %v4949 = vpack.c.b16 %v4948, %v4948
    %v4958 = vunpack.c.l.b16 %v4834
    %v4959 = vunpack.c.h.b16 %v4834
    %v4960 = vunpack.c.l.b16 %v4835
    %v4961 = vunpack.c.h.b16 %v4835
    %v4962 = vunpack.c.l.b16 %v4836
    %v4963 = vunpack.c.h.b16 %v4836
    %v4964 = vunpack.c.l.b16 %v4837
    %v4965 = vunpack.c.h.b16 %v4837
    %v4966 = vunpack.c.l.b16 %v4838
    %v4967 = vunpack.c.h.b16 %v4838
    %v4968 = vunpack.c.l.b16 %v4839
    %v4969 = vunpack.c.h.b16 %v4839
    %v4970 = vunpack.c.l.b16 %v4840
    %v4971 = vunpack.c.h.b16 %v4840
    %v4972 = vunpack.c.l.b16 %v4841
    %v4973 = vunpack.c.h.b16 %v4841
    %v4974 = vpack.c.b16 %v4960, %v4958
    %v4975 = vpack.c.b16 %v4961, %v4959
    %v4976 = vpack.c.b16 %v4964, %v4962
    %v4977 = vpack.c.b16 %v4965, %v4963
    %v4978 = vpack.c.b16 %v4968, %v4966
    %v4979 = vpack.c.b16 %v4969, %v4967
    %v4980 = vpack.c.b16 %v4972, %v4970
    %v4981 = vpack.c.b16 %v4973, %v4971
    %v4991 = vsel %vm4898, %v4949, 0
    %4993 = vmatprep.subr.bf16.mxu0 %v4975
    %4994 = vmatpush1.bf16.msra.mxu0 %v4974
    %4995 = vmatprep.subr.bf16.mxu0 %v4977
    %4996 = vmatpush1.bf16.msra.mxu0 %v4976
    %4997 = vmatprep.subr.bf16.mxu0 %v4979
    %4998 = vmatpush1.bf16.msra.mxu0 %v4978
    %4999 = vmatprep.subr.bf16.mxu0 %v4981
    %5000 = vmatpush1.bf16.msra.mxu0 %v4980
    %5001 = vmatprep.subr.bf16.mxu0 0
    %5002 = vmatpush1.bf16.msra.mxu0 0
    %5003 = vmatprep.subr.bf16.mxu0 0
    %5004 = vmatpush1.bf16.msra.mxu0 0
    %5005 = vmatprep.subr.bf16.mxu0 0
    %5006 = vmatpush1.bf16.msra.mxu0 0
    %5007 = vmatprep.subr.bf16.mxu0 0
    %5008 = vmatpush1.bf16.msra.mxu0 0
    %5009 = vmatprep.subr.bf16.mxu0 0
    %5010 = vmatpush1.bf16.msra.mxu0 0
    %5011 = vmatprep.subr.bf16.mxu0 0
    %5012 = vmatpush1.bf16.msra.mxu0 0
    %5013 = vmatprep.subr.bf16.mxu0 0
    %5014 = vmatpush1.bf16.msra.mxu0 0
    %5015 = vmatprep.subr.bf16.mxu0 0
    %5016 = vmatpush1.bf16.msra.mxu0 0
    %5017 = vmatprep.subr.bf16.mxu0 0
    %5018 = vmatpush1.bf16.msra.mxu0 0
    %5019 = vmatprep.subr.bf16.mxu0 0
    %5020 = vmatpush1.bf16.msra.mxu0 0
    %5021 = vmatprep.subr.bf16.mxu0 0
    %5022 = vmatpush1.bf16.msra.mxu0 0
    %5023 = vmatprep.subr.bf16.mxu0 0
    %5024 = vmatpush1.bf16.msra.mxu0 0
    %5025 = vmatprep.mubr.bf16.mxu0 0
    %5026 = vmatmul.mubr.bf16.gmra.mrb[0].mxu0 %v4991
    %v5027 = vpop.f32.mrb[0].mxu0
    %v5028 = vadd.f32 %v4937, %v5027
    %v5029 = vpop.f32.mrb[0].mxu0
    %v5030 = vadd.f32 %v4939, %v5029
    %v5031 = vpop.f32.mrb[0].mxu0
    %v5032 = vpop.f32.mrb[0].mxu0
    %5033 = vdwg.mxu0
    %s5034 = scalar_lea.vmem [#allocation8], 128
    %v5035 = vld [vmem:[%s5034] sm:$0xff]
    %v5036 = vld [vmem:[%s5034 + $0x8] sm:$0xff]
    %v5037 = vld [vmem:[%s5034 + $0x10] sm:$0xff]
    %v5038 = vld [vmem:[%s5034 + $0x18] sm:$0xff]
    %v5039 = vld [vmem:[%s5034 + $0x20] sm:$0xff]
    %v5040 = vld [vmem:[%s5034 + $0x28] sm:$0xff]
    %v5041 = vld [vmem:[%s5034 + $0x30] sm:$0xff]
    %v5042 = vld [vmem:[%s5034 + $0x38] sm:$0xff]
    %v5045 = vunpack.c.l.b16 %v4804
    %v5046 = vunpack.c.l.b16 %v4820
    %v5047 = vrot.slane %v5046, 7
    %v5048 = vsel %vm2728, %v5047, %v5045
    %v5049 = vpack.c.b16 %v5048, %v5048
    %v5058 = vunpack.c.l.b16 %v5035
    %v5059 = vunpack.c.h.b16 %v5035
    %v5060 = vunpack.c.l.b16 %v5036
    %v5061 = vunpack.c.h.b16 %v5036
    %v5062 = vunpack.c.l.b16 %v5037
    %v5063 = vunpack.c.h.b16 %v5037
    %v5064 = vunpack.c.l.b16 %v5038
    %v5065 = vunpack.c.h.b16 %v5038
    %v5066 = vunpack.c.l.b16 %v5039
    %v5067 = vunpack.c.h.b16 %v5039
    %v5068 = vunpack.c.l.b16 %v5040
    %v5069 = vunpack.c.h.b16 %v5040
    %v5070 = vunpack.c.l.b16 %v5041
    %v5071 = vunpack.c.h.b16 %v5041
    %v5072 = vunpack.c.l.b16 %v5042
    %v5073 = vunpack.c.h.b16 %v5042
    %v5074 = vpack.c.b16 %v5060, %v5058
    %v5075 = vpack.c.b16 %v5061, %v5059
    %v5076 = vpack.c.b16 %v5064, %v5062
    %v5077 = vpack.c.b16 %v5065, %v5063
    %v5078 = vpack.c.b16 %v5068, %v5066
    %v5079 = vpack.c.b16 %v5069, %v5067
    %v5080 = vpack.c.b16 %v5072, %v5070
    %v5081 = vpack.c.b16 %v5073, %v5071
    %v5091 = vsel %vm4898, %v5049, 0
    %5093 = vmatprep.subr.bf16.mxu0 %v5075
    %5094 = vmatpush1.bf16.msra.mxu0 %v5074
    %5095 = vmatprep.subr.bf16.mxu0 %v5077
    %5096 = vmatpush1.bf16.msra.mxu0 %v5076
    %5097 = vmatprep.subr.bf16.mxu0 %v5079
    %5098 = vmatpush1.bf16.msra.mxu0 %v5078
    %5099 = vmatprep.subr.bf16.mxu0 %v5081
    %5100 = vmatpush1.bf16.msra.mxu0 %v5080
    %5101 = vmatprep.subr.bf16.mxu0 0
    %5102 = vmatpush1.bf16.msra.mxu0 0
    %5103 = vmatprep.subr.bf16.mxu0 0
    %5104 = vmatpush1.bf16.msra.mxu0 0
    %5105 = vmatprep.subr.bf16.mxu0 0
    %5106 = vmatpush1.bf16.msra.mxu0 0
    %5107 = vmatprep.subr.bf16.mxu0 0
    %5108 = vmatpush1.bf16.msra.mxu0 0
    %5109 = vmatprep.subr.bf16.mxu0 0
    %5110 = vmatpush1.bf16.msra.mxu0 0
    %5111 = vmatprep.subr.bf16.mxu0 0
    %5112 = vmatpush1.bf16.msra.mxu0 0
    %5113 = vmatprep.subr.bf16.mxu0 0
    %5114 = vmatpush1.bf16.msra.mxu0 0
    %5115 = vmatprep.subr.bf16.mxu0 0
    %5116 = vmatpush1.bf16.msra.mxu0 0
    %5117 = vmatprep.subr.bf16.mxu0 0
    %5118 = vmatpush1.bf16.msra.mxu0 0
    %5119 = vmatprep.subr.bf16.mxu0 0
    %5120 = vmatpush1.bf16.msra.mxu0 0
    %5121 = vmatprep.subr.bf16.mxu0 0
    %5122 = vmatpush1.bf16.msra.mxu0 0
    %5123 = vmatprep.subr.bf16.mxu0 0
    %5124 = vmatpush1.bf16.msra.mxu0 0
    %5125 = vmatprep.mubr.bf16.mxu0 0
    %5126 = vmatmul.mubr.bf16.gmra.mrb[0].mxu0 %v5091
    %v5127 = vpop.f32.mrb[0].mxu0
    %v5128 = vadd.f32 0.0, %v5127
    %v5129 = vpop.f32.mrb[0].mxu0
    %v5130 = vadd.f32 0.0, %v5129
    %v5131 = vpop.f32.mrb[0].mxu0
    %v5132 = vpop.f32.mrb[0].mxu0
    %5133 = vdwg.mxu0
    %v5134 = vadd.f32 %v5028, %v5128
    %v5135 = vadd.f32 %v5030, %v5130
    %s5136 = scalar_lea.vmem [#allocation8], 192
    %v5137 = vld [vmem:[%s5136] sm:$0xff]
    %v5138 = vld [vmem:[%s5136 + $0x8] sm:$0xff]
    %v5139 = vld [vmem:[%s5136 + $0x10] sm:$0xff]
    %v5140 = vld [vmem:[%s5136 + $0x18] sm:$0xff]
    %v5141 = vld [vmem:[%s5136 + $0x20] sm:$0xff]
    %v5142 = vld [vmem:[%s5136 + $0x28] sm:$0xff]
    %v5143 = vld [vmem:[%s5136 + $0x30] sm:$0xff]
    %v5144 = vld [vmem:[%s5136 + $0x38] sm:$0xff]
    %v5147 = vunpack.c.l.b16 %v4805
    %v5148 = vunpack.c.l.b16 %v4821
    %v5149 = vrot.slane %v5148, 7
    %v5150 = vsel %vm2728, %v5149, %v5147
    %v5151 = vpack.c.b16 %v5150, %v5150
    %v5160 = vunpack.c.l.b16 %v5137
    %v5161 = vunpack.c.h.b16 %v5137
    %v5162 = vunpack.c.l.b16 %v5138
    %v5163 = vunpack.c.h.b16 %v5138
    %v5164 = vunpack.c.l.b16 %v5139
    %v5165 = vunpack.c.h.b16 %v5139
    %v5166 = vunpack.c.l.b16 %v5140
    %v5167 = vunpack.c.h.b16 %v5140
    %v5168 = vunpack.c.l.b16 %v5141
    %v5169 = vunpack.c.h.b16 %v5141
    %v5170 = vunpack.c.l.b16 %v5142
    %v5171 = vunpack.c.h.b16 %v5142
    %v5172 = vunpack.c.l.b16 %v5143
    %v5173 = vunpack.c.h.b16 %v5143
    %v5174 = vunpack.c.l.b16 %v5144
    %v5175 = vunpack.c.h.b16 %v5144
    %v5176 = vpack.c.b16 %v5162, %v5160
    %v5177 = vpack.c.b16 %v5163, %v5161
    %v5178 = vpack.c.b16 %v5166, %v5164
    %v5179 = vpack.c.b16 %v5167, %v5165
    %v5180 = vpack.c.b16 %v5170, %v5168
    %v5181 = vpack.c.b16 %v5171, %v5169
    %v5182 = vpack.c.b16 %v5174, %v5172
    %v5183 = vpack.c.b16 %v5175, %v5173
    %v5193 = vsel %vm4898, %v5151, 0
    %5195 = vmatprep.subr.bf16.mxu0 %v5177
    %5196 = vmatpush1.bf16.msra.mxu0 %v5176
    %5197 = vmatprep.subr.bf16.mxu0 %v5179
    %5198 = vmatpush1.bf16.msra.mxu0 %v5178
    %5199 = vmatprep.subr.bf16.mxu0 %v5181
    %5200 = vmatpush1.bf16.msra.mxu0 %v5180
    %5201 = vmatprep.subr.bf16.mxu0 %v5183
    %5202 = vmatpush1.bf16.msra.mxu0 %v5182
    %5203 = vmatprep.subr.bf16.mxu0 0
    %5204 = vmatpush1.bf16.msra.mxu0 0
    %5205 = vmatprep.subr.bf16.mxu0 0
    %5206 = vmatpush1.bf16.msra.mxu0 0
    %5207 = vmatprep.subr.bf16.mxu0 0
    %5208 = vmatpush1.bf16.msra.mxu0 0
    %5209 = vmatprep.subr.bf16.mxu0 0
    %5210 = vmatpush1.bf16.msra.mxu0 0
    %5211 = vmatprep.subr.bf16.mxu0 0
    %5212 = vmatpush1.bf16.msra.mxu0 0
    %5213 = vmatprep.subr.bf16.mxu0 0
    %5214 = vmatpush1.bf16.msra.mxu0 0
    %5215 = vmatprep.subr.bf16.mxu0 0
    %5216 = vmatpush1.bf16.msra.mxu0 0
    %5217 = vmatprep.subr.bf16.mxu0 0
    %5218 = vmatpush1.bf16.msra.mxu0 0
    %5219 = vmatprep.subr.bf16.mxu0 0
    %5220 = vmatpush1.bf16.msra.mxu0 0
    %5221 = vmatprep.subr.bf16.mxu0 0
    %5222 = vmatpush1.bf16.msra.mxu0 0
    %5223 = vmatprep.subr.bf16.mxu0 0
    %5224 = vmatpush1.bf16.msra.mxu0 0
    %5225 = vmatprep.subr.bf16.mxu0 0
    %5226 = vmatpush1.bf16.msra.mxu0 0
    %5227 = vmatprep.mubr.bf16.mxu0 0
    %5228 = vmatmul.mubr.bf16.gmra.mrb[0].mxu0 %v5193
    %v5229 = vpop.f32.mrb[0].mxu0
    %v5230 = vadd.f32 0.0, %v5229
    %v5231 = vpop.f32.mrb[0].mxu0
    %v5232 = vadd.f32 0.0, %v5231
    %v5233 = vpop.f32.mrb[0].mxu0
    %v5234 = vpop.f32.mrb[0].mxu0
    %5235 = vdwg.mxu0
    %v5236 = vadd.f32 %v5134, %v5230
    %v5237 = vadd.f32 %v5135, %v5232
    %s5238 = scalar_lea.vmem [#allocation8], 256
    %v5239 = vld [vmem:[%s5238] sm:$0xff]
    %v5240 = vld [vmem:[%s5238 + $0x8] sm:$0xff]
    %v5241 = vld [vmem:[%s5238 + $0x10] sm:$0xff]
    %v5242 = vld [vmem:[%s5238 + $0x18] sm:$0xff]
    %v5243 = vld [vmem:[%s5238 + $0x20] sm:$0xff]
    %v5244 = vld [vmem:[%s5238 + $0x28] sm:$0xff]
    %v5245 = vld [vmem:[%s5238 + $0x30] sm:$0xff]
    %v5246 = vld [vmem:[%s5238 + $0x38] sm:$0xff]
    %v5249 = vunpack.c.l.b16 %v4806
    %v5250 = vunpack.c.l.b16 %v4822
    %v5251 = vrot.slane %v5250, 7
    %v5252 = vsel %vm2728, %v5251, %v5249
    %v5253 = vpack.c.b16 %v5252, %v5252
    %v5262 = vunpack.c.l.b16 %v5239
    %v5263 = vunpack.c.h.b16 %v5239
    %v5264 = vunpack.c.l.b16 %v5240
    %v5265 = vunpack.c.h.b16 %v5240
    %v5266 = vunpack.c.l.b16 %v5241
    %v5267 = vunpack.c.h.b16 %v5241
    %v5268 = vunpack.c.l.b16 %v5242
    %v5269 = vunpack.c.h.b16 %v5242
    %v5270 = vunpack.c.l.b16 %v5243
    %v5271 = vunpack.c.h.b16 %v5243
    %v5272 = vunpack.c.l.b16 %v5244
    %v5273 = vunpack.c.h.b16 %v5244
    %v5274 = vunpack.c.l.b16 %v5245
    %v5275 = vunpack.c.h.b16 %v5245
    %v5276 = vunpack.c.l.b16 %v5246
    %v5277 = vunpack.c.h.b16 %v5246
    %v5278 = vpack.c.b16 %v5264, %v5262
    %v5279 = vpack.c.b16 %v5265, %v5263
    %v5280 = vpack.c.b16 %v5268, %v5266
    %v5281 = vpack.c.b16 %v5269, %v5267
    %v5282 = vpack.c.b16 %v5272, %v5270
    %v5283 = vpack.c.b16 %v5273, %v5271
    %v5284 = vpack.c.b16 %v5276, %v5274
    %v5285 = vpack.c.b16 %v5277, %v5275
    %v5295 = vsel %vm4898, %v5253, 0
    %5297 = vmatprep.subr.bf16.mxu0 %v5279
    %5298 = vmatpush1.bf16.msra.mxu0 %v5278
    %5299 = vmatprep.subr.bf16.mxu0 %v5281
    %5300 = vmatpush1.bf16.msra.mxu0 %v5280
    %5301 = vmatprep.subr.bf16.mxu0 %v5283
    %5302 = vmatpush1.bf16.msra.mxu0 %v5282
    %5303 = vmatprep.subr.bf16.mxu0 %v5285
    %5304 = vmatpush1.bf16.msra.mxu0 %v5284
    %5305 = vmatprep.subr.bf16.mxu0 0
    %5306 = vmatpush1.bf16.msra.mxu0 0
    %5307 = vmatprep.subr.bf16.mxu0 0
    %5308 = vmatpush1.bf16.msra.mxu0 0
    %5309 = vmatprep.subr.bf16.mxu0 0
    %5310 = vmatpush1.bf16.msra.mxu0 0
    %5311 = vmatprep.subr.bf16.mxu0 0
    %5312 = vmatpush1.bf16.msra.mxu0 0
    %5313 = vmatprep.subr.bf16.mxu0 0
    %5314 = vmatpush1.bf16.msra.mxu0 0
    %5315 = vmatprep.subr.bf16.mxu0 0
    %5316 = vmatpush1.bf16.msra.mxu0 0
    %5317 = vmatprep.subr.bf16.mxu0 0
    %5318 = vmatpush1.bf16.msra.mxu0 0
    %5319 = vmatprep.subr.bf16.mxu0 0
    %5320 = vmatpush1.bf16.msra.mxu0 0
    %5321 = vmatprep.subr.bf16.mxu0 0
    %5322 = vmatpush1.bf16.msra.mxu0 0
    %5323 = vmatprep.subr.bf16.mxu0 0
    %5324 = vmatpush1.bf16.msra.mxu0 0
    %5325 = vmatprep.subr.bf16.mxu0 0
    %5326 = vmatpush1.bf16.msra.mxu0 0
    %5327 = vmatprep.subr.bf16.mxu0 0
    %5328 = vmatpush1.bf16.msra.mxu0 0
    %5329 = vmatprep.mubr.bf16.mxu0 0
    %5330 = vmatmul.mubr.bf16.gmra.mrb[0].mxu0 %v5295
    %v5331 = vpop.f32.mrb[0].mxu0
    %v5332 = vadd.f32 0.0, %v5331
    %v5333 = vpop.f32.mrb[0].mxu0
    %v5334 = vadd.f32 0.0, %v5333
    %v5335 = vpop.f32.mrb[0].mxu0
    %v5336 = vpop.f32.mrb[0].mxu0
    %5337 = vdwg.mxu0
    %v5338 = vadd.f32 %v5236, %v5332
    %v5339 = vadd.f32 %v5237, %v5334
    %s5340 = scalar_lea.vmem [#allocation8], 320
    %v5341 = vld [vmem:[%s5340] sm:$0xff]
    %v5342 = vld [vmem:[%s5340 + $0x8] sm:$0xff]
    %v5343 = vld [vmem:[%s5340 + $0x10] sm:$0xff]
    %v5344 = vld [vmem:[%s5340 + $0x18] sm:$0xff]
    %v5345 = vld [vmem:[%s5340 + $0x20] sm:$0xff]
    %v5346 = vld [vmem:[%s5340 + $0x28] sm:$0xff]
    %v5347 = vld [vmem:[%s5340 + $0x30] sm:$0xff]
    %v5348 = vld [vmem:[%s5340 + $0x38] sm:$0xff]
    %v5351 = vunpack.c.l.b16 %v4807
    %v5352 = vunpack.c.l.b16 %v4823
    %v5353 = vrot.slane %v5352, 7
    %v5354 = vsel %vm2728, %v5353, %v5351
    %v5355 = vpack.c.b16 %v5354, %v5354
    %v5364 = vunpack.c.l.b16 %v5341
    %v5365 = vunpack.c.h.b16 %v5341
    %v5366 = vunpack.c.l.b16 %v5342
    %v5367 = vunpack.c.h.b16 %v5342
    %v5368 = vunpack.c.l.b16 %v5343
    %v5369 = vunpack.c.h.b16 %v5343
    %v5370 = vunpack.c.l.b16 %v5344
    %v5371 = vunpack.c.h.b16 %v5344
    %v5372 = vunpack.c.l.b16 %v5345
    %v5373 = vunpack.c.h.b16 %v5345
    %v5374 = vunpack.c.l.b16 %v5346
    %v5375 = vunpack.c.h.b16 %v5346
    %v5376 = vunpack.c.l.b16 %v5347
    %v5377 = vunpack.c.h.b16 %v5347
    %v5378 = vunpack.c.l.b16 %v5348
    %v5379 = vunpack.c.h.b16 %v5348
    %v5380 = vpack.c.b16 %v5366, %v5364
    %v5381 = vpack.c.b16 %v5367, %v5365
    %v5382 = vpack.c.b16 %v5370, %v5368
    %v5383 = vpack.c.b16 %v5371, %v5369
    %v5384 = vpack.c.b16 %v5374, %v5372
    %v5385 = vpack.c.b16 %v5375, %v5373
    %v5386 = vpack.c.b16 %v5378, %v5376
    %v5387 = vpack.c.b16 %v5379, %v5377
    %v5397 = vsel %vm4898, %v5355, 0
    %5399 = vmatprep.subr.bf16.mxu0 %v5381
    %5400 = vmatpush1.bf16.msra.mxu0 %v5380
    %5401 = vmatprep.subr.bf16.mxu0 %v5383
    %5402 = vmatpush1.bf16.msra.mxu0 %v5382
    %5403 = vmatprep.subr.bf16.mxu0 %v5385
    %5404 = vmatpush1.bf16.msra.mxu0 %v5384
    %5405 = vmatprep.subr.bf16.mxu0 %v5387
    %5406 = vmatpush1.bf16.msra.mxu0 %v5386
    %5407 = vmatprep.subr.bf16.mxu0 0
    %5408 = vmatpush1.bf16.msra.mxu0 0
    %5409 = vmatprep.subr.bf16.mxu0 0
    %5410 = vmatpush1.bf16.msra.mxu0 0
    %5411 = vmatprep.subr.bf16.mxu0 0
    %5412 = vmatpush1.bf16.msra.mxu0 0
    %5413 = vmatprep.subr.bf16.mxu0 0
    %5414 = vmatpush1.bf16.msra.mxu0 0
    %5415 = vmatprep.subr.bf16.mxu0 0
    %5416 = vmatpush1.bf16.msra.mxu0 0
    %5417 = vmatprep.subr.bf16.mxu0 0
    %5418 = vmatpush1.bf16.msra.mxu0 0
    %5419 = vmatprep.subr.bf16.mxu0 0
    %5420 = vmatpush1.bf16.msra.mxu0 0
    %5421 = vmatprep.subr.bf16.mxu0 0
    %5422 = vmatpush1.bf16.msra.mxu0 0
    %5423 = vmatprep.subr.bf16.mxu0 0
    %5424 = vmatpush1.bf16.msra.mxu0 0
    %5425 = vmatprep.subr.bf16.mxu0 0
    %5426 = vmatpush1.bf16.msra.mxu0 0
    %5427 = vmatprep.subr.bf16.mxu0 0
    %5428 = vmatpush1.bf16.msra.mxu0 0
    %5429 = vmatprep.subr.bf16.mxu0 0
    %5430 = vmatpush1.bf16.msra.mxu0 0
    %5431 = vmatprep.mubr.bf16.mxu0 0
    %5432 = vmatmul.mubr.bf16.gmra.mrb[0].mxu0 %v5397
    %v5433 = vpop.f32.mrb[0].mxu0
    %v5434 = vadd.f32 0.0, %v5433
    %v5435 = vpop.f32.mrb[0].mxu0
    %v5436 = vadd.f32 0.0, %v5435
    %v5437 = vpop.f32.mrb[0].mxu0
    %v5438 = vpop.f32.mrb[0].mxu0
    %5439 = vdwg.mxu0
    %v5440 = vadd.f32 %v5338, %v5434
    %v5441 = vadd.f32 %v5339, %v5436
    %s5442 = scalar_lea.vmem [#allocation8], 384
    %v5443 = vld [vmem:[%s5442] sm:$0xff]
    %v5444 = vld [vmem:[%s5442 + $0x8] sm:$0xff]
    %v5445 = vld [vmem:[%s5442 + $0x10] sm:$0xff]
    %v5446 = vld [vmem:[%s5442 + $0x18] sm:$0xff]
    %v5447 = vld [vmem:[%s5442 + $0x20] sm:$0xff]
    %v5448 = vld [vmem:[%s5442 + $0x28] sm:$0xff]
    %v5449 = vld [vmem:[%s5442 + $0x30] sm:$0xff]
    %v5450 = vld [vmem:[%s5442 + $0x38] sm:$0xff]
    %v5453 = vunpack.c.l.b16 %v4808
    %v5454 = vunpack.c.l.b16 %v4824
    %v5455 = vrot.slane %v5454, 7
    %v5456 = vsel %vm2728, %v5455, %v5453
    %v5457 = vpack.c.b16 %v5456, %v5456
    %v5466 = vunpack.c.l.b16 %v5443
    %v5467 = vunpack.c.h.b16 %v5443
    %v5468 = vunpack.c.l.b16 %v5444
    %v5469 = vunpack.c.h.b16 %v5444
    %v5470 = vunpack.c.l.b16 %v5445
    %v5471 = vunpack.c.h.b16 %v5445
    %v5472 = vunpack.c.l.b16 %v5446
    %v5473 = vunpack.c.h.b16 %v5446
    %v5474 = vunpack.c.l.b16 %v5447
    %v5475 = vunpack.c.h.b16 %v5447
    %v5476 = vunpack.c.l.b16 %v5448
    %v5477 = vunpack.c.h.b16 %v5448
    %v5478 = vunpack.c.l.b16 %v5449
    %v5479 = vunpack.c.h.b16 %v5449
    %v5480 = vunpack.c.l.b16 %v5450
    %v5481 = vunpack.c.h.b16 %v5450
    %v5482 = vpack.c.b16 %v5468, %v5466
    %v5483 = vpack.c.b16 %v5469, %v5467
    %v5484 = vpack.c.b16 %v5472, %v5470
    %v5485 = vpack.c.b16 %v5473, %v5471
    %v5486 = vpack.c.b16 %v5476, %v5474
    %v5487 = vpack.c.b16 %v5477, %v5475
    %v5488 = vpack.c.b16 %v5480, %v5478
    %v5489 = vpack.c.b16 %v5481, %v5479
    %v5499 = vsel %vm4898, %v5457, 0
    %5501 = vmatprep.subr.bf16.mxu0 %v5483
    %5502 = vmatpush1.bf16.msra.mxu0 %v5482
    %5503 = vmatprep.subr.bf16.mxu0 %v5485
    %5504 = vmatpush1.bf16.msra.mxu0 %v5484
    %5505 = vmatprep.subr.bf16.mxu0 %v5487
    %5506 = vmatpush1.bf16.msra.mxu0 %v5486
    %5507 = vmatprep.subr.bf16.mxu0 %v5489
    %5508 = vmatpush1.bf16.msra.mxu0 %v5488
    %5509 = vmatprep.subr.bf16.mxu0 0
    %5510 = vmatpush1.bf16.msra.mxu0 0
    %5511 = vmatprep.subr.bf16.mxu0 0
    %5512 = vmatpush1.bf16.msra.mxu0 0
    %5513 = vmatprep.subr.bf16.mxu0 0
    %5514 = vmatpush1.bf16.msra.mxu0 0
    %5515 = vmatprep.subr.bf16.mxu0 0
    %5516 = vmatpush1.bf16.msra.mxu0 0
    %5517 = vmatprep.subr.bf16.mxu0 0
    %5518 = vmatpush1.bf16.msra.mxu0 0
    %5519 = vmatprep.subr.bf16.mxu0 0
    %5520 = vmatpush1.bf16.msra.mxu0 0
    %5521 = vmatprep.subr.bf16.mxu0 0
    %5522 = vmatpush1.bf16.msra.mxu0 0
    %5523 = vmatprep.subr.bf16.mxu0 0
    %5524 = vmatpush1.bf16.msra.mxu0 0
    %5525 = vmatprep.subr.bf16.mxu0 0
    %5526 = vmatpush1.bf16.msra.mxu0 0
    %5527 = vmatprep.subr.bf16.mxu0 0
    %5528 = vmatpush1.bf16.msra.mxu0 0
    %5529 = vmatprep.subr.bf16.mxu0 0
    %5530 = vmatpush1.bf16.msra.mxu0 0
    %5531 = vmatprep.subr.bf16.mxu0 0
    %5532 = vmatpush1.bf16.msra.mxu0 0
    %5533 = vmatprep.mubr.bf16.mxu0 0
    %5534 = vmatmul.mubr.bf16.gmra.mrb[0].mxu0 %v5499
    %v5535 = vpop.f32.mrb[0].mxu0
    %v5536 = vadd.f32 0.0, %v5535
    %v5537 = vpop.f32.mrb[0].mxu0
    %v5538 = vadd.f32 0.0, %v5537
    %v5539 = vpop.f32.mrb[0].mxu0
    %v5540 = vpop.f32.mrb[0].mxu0
    %5541 = vdwg.mxu0
    %v5542 = vadd.f32 %v5440, %v5536
    %v5543 = vadd.f32 %v5441, %v5538
    %s5544 = scalar_lea.vmem [#allocation8], 448
    %v5545 = vld [vmem:[%s5544] sm:$0xff]
    %v5546 = vld [vmem:[%s5544 + $0x8] sm:$0xff]
    %v5547 = vld [vmem:[%s5544 + $0x10] sm:$0xff]
    %v5548 = vld [vmem:[%s5544 + $0x18] sm:$0xff]
    %v5549 = vld [vmem:[%s5544 + $0x20] sm:$0xff]
    %v5550 = vld [vmem:[%s5544 + $0x28] sm:$0xff]
    %v5551 = vld [vmem:[%s5544 + $0x30] sm:$0xff]
    %v5552 = vld [vmem:[%s5544 + $0x38] sm:$0xff]
    %v5555 = vunpack.c.l.b16 %v4809
    %v5556 = vunpack.c.l.b16 %v4825
    %v5557 = vrot.slane %v5556, 7
    %v5558 = vsel %vm2728, %v5557, %v5555
    %v5559 = vpack.c.b16 %v5558, %v5558
    %v5568 = vunpack.c.l.b16 %v5545
    %v5569 = vunpack.c.h.b16 %v5545
    %v5570 = vunpack.c.l.b16 %v5546
    %v5571 = vunpack.c.h.b16 %v5546
    %v5572 = vunpack.c.l.b16 %v5547
    %v5573 = vunpack.c.h.b16 %v5547
    %v5574 = vunpack.c.l.b16 %v5548
    %v5575 = vunpack.c.h.b16 %v5548
    %v5576 = vunpack.c.l.b16 %v5549
    %v5577 = vunpack.c.h.b16 %v5549
    %v5578 = vunpack.c.l.b16 %v5550
    %v5579 = vunpack.c.h.b16 %v5550
    %v5580 = vunpack.c.l.b16 %v5551
    %v5581 = vunpack.c.h.b16 %v5551
    %v5582 = vunpack.c.l.b16 %v5552
    %v5583 = vunpack.c.h.b16 %v5552
    %v5584 = vpack.c.b16 %v5570, %v5568
    %v5585 = vpack.c.b16 %v5571, %v5569
    %v5586 = vpack.c.b16 %v5574, %v5572
    %v5587 = vpack.c.b16 %v5575, %v5573
    %v5588 = vpack.c.b16 %v5578, %v5576
    %v5589 = vpack.c.b16 %v5579, %v5577
    %v5590 = vpack.c.b16 %v5582, %v5580
    %v5591 = vpack.c.b16 %v5583, %v5581
    %v5601 = vsel %vm4898, %v5559, 0
    %5603 = vmatprep.subr.bf16.mxu0 %v5585
    %5604 = vmatpush1.bf16.msra.mxu0 %v5584
    %5605 = vmatprep.subr.bf16.mxu0 %v5587
    %5606 = vmatpush1.bf16.msra.mxu0 %v5586
    %5607 = vmatprep.subr.bf16.mxu0 %v5589
    %5608 = vmatpush1.bf16.msra.mxu0 %v5588
    %5609 = vmatprep.subr.bf16.mxu0 %v5591
    %5610 = vmatpush1.bf16.msra.mxu0 %v5590
    %5611 = vmatprep.subr.bf16.mxu0 0
    %5612 = vmatpush1.bf16.msra.mxu0 0
    %5613 = vmatprep.subr.bf16.mxu0 0
    %5614 = vmatpush1.bf16.msra.mxu0 0
    %5615 = vmatprep.subr.bf16.mxu0 0
    %5616 = vmatpush1.bf16.msra.mxu0 0
    %5617 = vmatprep.subr.bf16.mxu0 0
    %5618 = vmatpush1.bf16.msra.mxu0 0
    %5619 = vmatprep.subr.bf16.mxu0 0
    %5620 = vmatpush1.bf16.msra.mxu0 0
    %5621 = vmatprep.subr.bf16.mxu0 0
    %5622 = vmatpush1.bf16.msra.mxu0 0
    %5623 = vmatprep.subr.bf16.mxu0 0
    %5624 = vmatpush1.bf16.msra.mxu0 0
    %5625 = vmatprep.subr.bf16.mxu0 0
    %5626 = vmatpush1.bf16.msra.mxu0 0
    %5627 = vmatprep.subr.bf16.mxu0 0
    %5628 = vmatpush1.bf16.msra.mxu0 0
    %5629 = vmatprep.subr.bf16.mxu0 0
    %5630 = vmatpush1.bf16.msra.mxu0 0
    %5631 = vmatprep.subr.bf16.mxu0 0
    %5632 = vmatpush1.bf16.msra.mxu0 0
    %5633 = vmatprep.subr.bf16.mxu0 0
    %5634 = vmatpush1.bf16.msra.mxu0 0
    %5635 = vmatprep.mubr.bf16.mxu0 0
    %5636 = vmatmul.mubr.bf16.gmra.mrb[0].mxu0 %v5601
    %v5637 = vpop.f32.mrb[0].mxu0
    %v5638 = vadd.f32 0.0, %v5637
    %v5639 = vpop.f32.mrb[0].mxu0
    %v5640 = vadd.f32 0.0, %v5639
    %v5641 = vpop.f32.mrb[0].mxu0
    %v5642 = vpop.f32.mrb[0].mxu0
    %5643 = vdwg.mxu0
    %v5644 = vadd.f32 %v5542, %v5638
    %v5645 = vadd.f32 %v5543, %v5640
    %s5646 = scalar_lea.vmem [#allocation8], 512
    %v5647 = vld [vmem:[%s5646] sm:$0xff]
    %v5648 = vld [vmem:[%s5646 + $0x8] sm:$0xff]
    %v5649 = vld [vmem:[%s5646 + $0x10] sm:$0xff]
    %v5650 = vld [vmem:[%s5646 + $0x18] sm:$0xff]
    %v5651 = vld [vmem:[%s5646 + $0x20] sm:$0xff]
    %v5652 = vld [vmem:[%s5646 + $0x28] sm:$0xff]
    %v5653 = vld [vmem:[%s5646 + $0x30] sm:$0xff]
    %v5654 = vld [vmem:[%s5646 + $0x38] sm:$0xff]
    %v5657 = vunpack.c.l.b16 %v4810
    %v5658 = vunpack.c.l.b16 %v4826
    %v5659 = vrot.slane %v5658, 7
    %v5660 = vsel %vm2728, %v5659, %v5657
    %v5661 = vpack.c.b16 %v5660, %v5660
    %v5670 = vunpack.c.l.b16 %v5647
    %v5671 = vunpack.c.h.b16 %v5647
    %v5672 = vunpack.c.l.b16 %v5648
    %v5673 = vunpack.c.h.b16 %v5648
    %v5674 = vunpack.c.l.b16 %v5649
    %v5675 = vunpack.c.h.b16 %v5649
    %v5676 = vunpack.c.l.b16 %v5650
    %v5677 = vunpack.c.h.b16 %v5650
    %v5678 = vunpack.c.l.b16 %v5651
    %v5679 = vunpack.c.h.b16 %v5651
    %v5680 = vunpack.c.l.b16 %v5652
    %v5681 = vunpack.c.h.b16 %v5652
    %v5682 = vunpack.c.l.b16 %v5653
    %v5683 = vunpack.c.h.b16 %v5653
    %v5684 = vunpack.c.l.b16 %v5654
    %v5685 = vunpack.c.h.b16 %v5654
    %v5686 = vpack.c.b16 %v5672, %v5670
    %v5687 = vpack.c.b16 %v5673, %v5671
    %v5688 = vpack.c.b16 %v5676, %v5674
    %v5689 = vpack.c.b16 %v5677, %v5675
    %v5690 = vpack.c.b16 %v5680, %v5678
    %v5691 = vpack.c.b16 %v5681, %v5679
    %v5692 = vpack.c.b16 %v5684, %v5682
    %v5693 = vpack.c.b16 %v5685, %v5683
    %v5703 = vsel %vm4898, %v5661, 0
    %5705 = vmatprep.subr.bf16.mxu0 %v5687
    %5706 = vmatpush1.bf16.msra.mxu0 %v5686
    %5707 = vmatprep.subr.bf16.mxu0 %v5689
    %5708 = vmatpush1.bf16.msra.mxu0 %v5688
    %5709 = vmatprep.subr.bf16.mxu0 %v5691
    %5710 = vmatpush1.bf16.msra.mxu0 %v5690
    %5711 = vmatprep.subr.bf16.mxu0 %v5693
    %5712 = vmatpush1.bf16.msra.mxu0 %v5692
    %5713 = vmatprep.subr.bf16.mxu0 0
    %5714 = vmatpush1.bf16.msra.mxu0 0
    %5715 = vmatprep.subr.bf16.mxu0 0
    %5716 = vmatpush1.bf16.msra.mxu0 0
    %5717 = vmatprep.subr.bf16.mxu0 0
    %5718 = vmatpush1.bf16.msra.mxu0 0
    %5719 = vmatprep.subr.bf16.mxu0 0
    %5720 = vmatpush1.bf16.msra.mxu0 0
    %5721 = vmatprep.subr.bf16.mxu0 0
    %5722 = vmatpush1.bf16.msra.mxu0 0
    %5723 = vmatprep.subr.bf16.mxu0 0
    %5724 = vmatpush1.bf16.msra.mxu0 0
    %5725 = vmatprep.subr.bf16.mxu0 0
    %5726 = vmatpush1.bf16.msra.mxu0 0
    %5727 = vmatprep.subr.bf16.mxu0 0
    %5728 = vmatpush1.bf16.msra.mxu0 0
    %5729 = vmatprep.subr.bf16.mxu0 0
    %5730 = vmatpush1.bf16.msra.mxu0 0
    %5731 = vmatprep.subr.bf16.mxu0 0
    %5732 = vmatpush1.bf16.msra.mxu0 0
    %5733 = vmatprep.subr.bf16.mxu0 0
    %5734 = vmatpush1.bf16.msra.mxu0 0
    %5735 = vmatprep.subr.bf16.mxu0 0
    %5736 = vmatpush1.bf16.msra.mxu0 0
    %5737 = vmatprep.mubr.bf16.mxu0 0
    %5738 = vmatmul.mubr.bf16.gmra.mrb[0].mxu0 %v5703
    %v5739 = vpop.f32.mrb[0].mxu0
    %v5740 = vadd.f32 0.0, %v5739
    %v5741 = vpop.f32.mrb[0].mxu0
    %v5742 = vadd.f32 0.0, %v5741
    %v5743 = vpop.f32.mrb[0].mxu0
    %v5744 = vpop.f32.mrb[0].mxu0
    %5745 = vdwg.mxu0
    %v5746 = vadd.f32 %v5644, %v5740
    %v5747 = vadd.f32 %v5645, %v5742
    %s5748 = scalar_lea.vmem [#allocation8], 576
    %v5749 = vld [vmem:[%s5748] sm:$0xff]
    %v5750 = vld [vmem:[%s5748 + $0x8] sm:$0xff]
    %v5751 = vld [vmem:[%s5748 + $0x10] sm:$0xff]
    %v5752 = vld [vmem:[%s5748 + $0x18] sm:$0xff]
    %v5753 = vld [vmem:[%s5748 + $0x20] sm:$0xff]
    %v5754 = vld [vmem:[%s5748 + $0x28] sm:$0xff]
    %v5755 = vld [vmem:[%s5748 + $0x30] sm:$0xff]
    %v5756 = vld [vmem:[%s5748 + $0x38] sm:$0xff]
    %v5759 = vunpack.c.l.b16 %v4811
    %v5760 = vunpack.c.l.b16 %v4827
    %v5761 = vrot.slane %v5760, 7
    %v5762 = vsel %vm2728, %v5761, %v5759
    %v5763 = vpack.c.b16 %v5762, %v5762
    %v5772 = vunpack.c.l.b16 %v5749
    %v5773 = vunpack.c.h.b16 %v5749
    %v5774 = vunpack.c.l.b16 %v5750
    %v5775 = vunpack.c.h.b16 %v5750
    %v5776 = vunpack.c.l.b16 %v5751
    %v5777 = vunpack.c.h.b16 %v5751
    %v5778 = vunpack.c.l.b16 %v5752
    %v5779 = vunpack.c.h.b16 %v5752
    %v5780 = vunpack.c.l.b16 %v5753
    %v5781 = vunpack.c.h.b16 %v5753
    %v5782 = vunpack.c.l.b16 %v5754
    %v5783 = vunpack.c.h.b16 %v5754
    %v5784 = vunpack.c.l.b16 %v5755
    %v5785 = vunpack.c.h.b16 %v5755
    %v5786 = vunpack.c.l.b16 %v5756
    %v5787 = vunpack.c.h.b16 %v5756
    %v5788 = vpack.c.b16 %v5774, %v5772
    %v5789 = vpack.c.b16 %v5775, %v5773
    %v5790 = vpack.c.b16 %v5778, %v5776
    %v5791 = vpack.c.b16 %v5779, %v5777
    %v5792 = vpack.c.b16 %v5782, %v5780
    %v5793 = vpack.c.b16 %v5783, %v5781
    %v5794 = vpack.c.b16 %v5786, %v5784
    %v5795 = vpack.c.b16 %v5787, %v5785
    %v5805 = vsel %vm4898, %v5763, 0
    %5807 = vmatprep.subr.bf16.mxu0 %v5789
    %5808 = vmatpush1.bf16.msra.mxu0 %v5788
    %5809 = vmatprep.subr.bf16.mxu0 %v5791
    %5810 = vmatpush1.bf16.msra.mxu0 %v5790
    %5811 = vmatprep.subr.bf16.mxu0 %v5793
    %5812 = vmatpush1.bf16.msra.mxu0 %v5792
    %5813 = vmatprep.subr.bf16.mxu0 %v5795
    %5814 = vmatpush1.bf16.msra.mxu0 %v5794
    %5815 = vmatprep.subr.bf16.mxu0 0
    %5816 = vmatpush1.bf16.msra.mxu0 0
    %5817 = vmatprep.subr.bf16.mxu0 0
    %5818 = vmatpush1.bf16.msra.mxu0 0
    %5819 = vmatprep.subr.bf16.mxu0 0
    %5820 = vmatpush1.bf16.msra.mxu0 0
    %5821 = vmatprep.subr.bf16.mxu0 0
    %5822 = vmatpush1.bf16.msra.mxu0 0
    %5823 = vmatprep.subr.bf16.mxu0 0
    %5824 = vmatpush1.bf16.msra.mxu0 0
    %5825 = vmatprep.subr.bf16.mxu0 0
    %5826 = vmatpush1.bf16.msra.mxu0 0
    %5827 = vmatprep.subr.bf16.mxu0 0
    %5828 = vmatpush1.bf16.msra.mxu0 0
    %5829 = vmatprep.subr.bf16.mxu0 0
    %5830 = vmatpush1.bf16.msra.mxu0 0
    %5831 = vmatprep.subr.bf16.mxu0 0
    %5832 = vmatpush1.bf16.msra.mxu0 0
    %5833 = vmatprep.subr.bf16.mxu0 0
    %5834 = vmatpush1.bf16.msra.mxu0 0
    %5835 = vmatprep.subr.bf16.mxu0 0
    %5836 = vmatpush1.bf16.msra.mxu0 0
    %5837 = vmatprep.subr.bf16.mxu0 0
    %5838 = vmatpush1.bf16.msra.mxu0 0
    %5839 = vmatprep.mubr.bf16.mxu0 0
    %5840 = vmatmul.mubr.bf16.gmra.mrb[0].mxu0 %v5805
    %v5841 = vpop.f32.mrb[0].mxu0
    %v5842 = vadd.f32 0.0, %v5841
    %v5843 = vpop.f32.mrb[0].mxu0
    %v5844 = vadd.f32 0.0, %v5843
    %v5845 = vpop.f32.mrb[0].mxu0
    %v5846 = vpop.f32.mrb[0].mxu0
    %5847 = vdwg.mxu0
    %v5848 = vadd.f32 %v5746, %v5842
    %v5849 = vadd.f32 %v5747, %v5844
    %s5850 = scalar_lea.vmem [#allocation8], 640
    %v5851 = vld [vmem:[%s5850] sm:$0xff]
    %v5852 = vld [vmem:[%s5850 + $0x8] sm:$0xff]
    %v5853 = vld [vmem:[%s5850 + $0x10] sm:$0xff]
    %v5854 = vld [vmem:[%s5850 + $0x18] sm:$0xff]
    %v5855 = vld [vmem:[%s5850 + $0x20] sm:$0xff]
    %v5856 = vld [vmem:[%s5850 + $0x28] sm:$0xff]
    %v5857 = vld [vmem:[%s5850 + $0x30] sm:$0xff]
    %v5858 = vld [vmem:[%s5850 + $0x38] sm:$0xff]
    %v5861 = vunpack.c.l.b16 %v4812
    %v5862 = vunpack.c.l.b16 %v4828
    %v5863 = vrot.slane %v5862, 7
    %v5864 = vsel %vm2728, %v5863, %v5861
    %v5865 = vpack.c.b16 %v5864, %v5864
    %v5874 = vunpack.c.l.b16 %v5851
    %v5875 = vunpack.c.h.b16 %v5851
    %v5876 = vunpack.c.l.b16 %v5852
    %v5877 = vunpack.c.h.b16 %v5852
    %v5878 = vunpack.c.l.b16 %v5853
    %v5879 = vunpack.c.h.b16 %v5853
    %v5880 = vunpack.c.l.b16 %v5854
    %v5881 = vunpack.c.h.b16 %v5854
    %v5882 = vunpack.c.l.b16 %v5855
    %v5883 = vunpack.c.h.b16 %v5855
    %v5884 = vunpack.c.l.b16 %v5856
    %v5885 = vunpack.c.h.b16 %v5856
    %v5886 = vunpack.c.l.b16 %v5857
    %v5887 = vunpack.c.h.b16 %v5857
    %v5888 = vunpack.c.l.b16 %v5858
    %v5889 = vunpack.c.h.b16 %v5858
    %v5890 = vpack.c.b16 %v5876, %v5874
    %v5891 = vpack.c.b16 %v5877, %v5875
    %v5892 = vpack.c.b16 %v5880, %v5878
    %v5893 = vpack.c.b16 %v5881, %v5879
    %v5894 = vpack.c.b16 %v5884, %v5882
    %v5895 = vpack.c.b16 %v5885, %v5883
    %v5896 = vpack.c.b16 %v5888, %v5886
    %v5897 = vpack.c.b16 %v5889, %v5887
    %v5907 = vsel %vm4898, %v5865, 0
    %5909 = vmatprep.subr.bf16.mxu0 %v5891
    %5910 = vmatpush1.bf16.msra.mxu0 %v5890
    %5911 = vmatprep.subr.bf16.mxu0 %v5893
    %5912 = vmatpush1.bf16.msra.mxu0 %v5892
    %5913 = vmatprep.subr.bf16.mxu0 %v5895
    %5914 = vmatpush1.bf16.msra.mxu0 %v5894
    %5915 = vmatprep.subr.bf16.mxu0 %v5897
    %5916 = vmatpush1.bf16.msra.mxu0 %v5896
    %5917 = vmatprep.subr.bf16.mxu0 0
    %5918 = vmatpush1.bf16.msra.mxu0 0
    %5919 = vmatprep.subr.bf16.mxu0 0
    %5920 = vmatpush1.bf16.msra.mxu0 0
    %5921 = vmatprep.subr.bf16.mxu0 0
    %5922 = vmatpush1.bf16.msra.mxu0 0
    %5923 = vmatprep.subr.bf16.mxu0 0
    %5924 = vmatpush1.bf16.msra.mxu0 0
    %5925 = vmatprep.subr.bf16.mxu0 0
    %5926 = vmatpush1.bf16.msra.mxu0 0
    %5927 = vmatprep.subr.bf16.mxu0 0
    %5928 = vmatpush1.bf16.msra.mxu0 0
    %5929 = vmatprep.subr.bf16.mxu0 0
    %5930 = vmatpush1.bf16.msra.mxu0 0
    %5931 = vmatprep.subr.bf16.mxu0 0
    %5932 = vmatpush1.bf16.msra.mxu0 0
    %5933 = vmatprep.subr.bf16.mxu0 0
    %5934 = vmatpush1.bf16.msra.mxu0 0
    %5935 = vmatprep.subr.bf16.mxu0 0
    %5936 = vmatpush1.bf16.msra.mxu0 0
    %5937 = vmatprep.subr.bf16.mxu0 0
    %5938 = vmatpush1.bf16.msra.mxu0 0
    %5939 = vmatprep.subr.bf16.mxu0 0
    %5940 = vmatpush1.bf16.msra.mxu0 0
    %5941 = vmatprep.mubr.bf16.mxu0 0
    %5942 = vmatmul.mubr.bf16.gmra.mrb[0].mxu0 %v5907
    %v5943 = vpop.f32.mrb[0].mxu0
    %v5944 = vadd.f32 0.0, %v5943
    %v5945 = vpop.f32.mrb[0].mxu0
    %v5946 = vadd.f32 0.0, %v5945
    %v5947 = vpop.f32.mrb[0].mxu0
    %v5948 = vpop.f32.mrb[0].mxu0
    %5949 = vdwg.mxu0
    %v5950 = vadd.f32 %v5848, %v5944
    %v5951 = vadd.f32 %v5849, %v5946
    %s5952 = scalar_lea.vmem [#allocation8], 704
    %v5953 = vld [vmem:[%s5952] sm:$0xff]
    %v5954 = vld [vmem:[%s5952 + $0x8] sm:$0xff]
    %v5955 = vld [vmem:[%s5952 + $0x10] sm:$0xff]
    %v5956 = vld [vmem:[%s5952 + $0x18] sm:$0xff]
    %v5957 = vld [vmem:[%s5952 + $0x20] sm:$0xff]
    %v5958 = vld [vmem:[%s5952 + $0x28] sm:$0xff]
    %v5959 = vld [vmem:[%s5952 + $0x30] sm:$0xff]
    %v5960 = vld [vmem:[%s5952 + $0x38] sm:$0xff]
    %v5963 = vunpack.c.l.b16 %v4813
    %v5964 = vunpack.c.l.b16 %v4829
    %v5965 = vrot.slane %v5964, 7
    %v5966 = vsel %vm2728, %v5965, %v5963
    %v5967 = vpack.c.b16 %v5966, %v5966
    %v5976 = vunpack.c.l.b16 %v5953
    %v5977 = vunpack.c.h.b16 %v5953
    %v5978 = vunpack.c.l.b16 %v5954
    %v5979 = vunpack.c.h.b16 %v5954
    %v5980 = vunpack.c.l.b16 %v5955
    %v5981 = vunpack.c.h.b16 %v5955
    %v5982 = vunpack.c.l.b16 %v5956
    %v5983 = vunpack.c.h.b16 %v5956
    %v5984 = vunpack.c.l.b16 %v5957
    %v5985 = vunpack.c.h.b16 %v5957
    %v5986 = vunpack.c.l.b16 %v5958
    %v5987 = vunpack.c.h.b16 %v5958
    %v5988 = vunpack.c.l.b16 %v5959
    %v5989 = vunpack.c.h.b16 %v5959
    %v5990 = vunpack.c.l.b16 %v5960
    %v5991 = vunpack.c.h.b16 %v5960
    %v5992 = vpack.c.b16 %v5978, %v5976
    %v5993 = vpack.c.b16 %v5979, %v5977
    %v5994 = vpack.c.b16 %v5982, %v5980
    %v5995 = vpack.c.b16 %v5983, %v5981
    %v5996 = vpack.c.b16 %v5986, %v5984
    %v5997 = vpack.c.b16 %v5987, %v5985
    %v5998 = vpack.c.b16 %v5990, %v5988
    %v5999 = vpack.c.b16 %v5991, %v5989
    %v6009 = vsel %vm4898, %v5967, 0
    %6011 = vmatprep.subr.bf16.mxu0 %v5993
    %6012 = vmatpush1.bf16.msra.mxu0 %v5992
    %6013 = vmatprep.subr.bf16.mxu0 %v5995
    %6014 = vmatpush1.bf16.msra.mxu0 %v5994
    %6015 = vmatprep.subr.bf16.mxu0 %v5997
    %6016 = vmatpush1.bf16.msra.mxu0 %v5996
    %6017 = vmatprep.subr.bf16.mxu0 %v5999
    %6018 = vmatpush1.bf16.msra.mxu0 %v5998
    %6019 = vmatprep.subr.bf16.mxu0 0
    %6020 = vmatpush1.bf16.msra.mxu0 0
    %6021 = vmatprep.subr.bf16.mxu0 0
    %6022 = vmatpush1.bf16.msra.mxu0 0
    %6023 = vmatprep.subr.bf16.mxu0 0
    %6024 = vmatpush1.bf16.msra.mxu0 0
    %6025 = vmatprep.subr.bf16.mxu0 0
    %6026 = vmatpush1.bf16.msra.mxu0 0
    %6027 = vmatprep.subr.bf16.mxu0 0
    %6028 = vmatpush1.bf16.msra.mxu0 0
    %6029 = vmatprep.subr.bf16.mxu0 0
    %6030 = vmatpush1.bf16.msra.mxu0 0
    %6031 = vmatprep.subr.bf16.mxu0 0
    %6032 = vmatpush1.bf16.msra.mxu0 0
    %6033 = vmatprep.subr.bf16.mxu0 0
    %6034 = vmatpush1.bf16.msra.mxu0 0
    %6035 = vmatprep.subr.bf16.mxu0 0
    %6036 = vmatpush1.bf16.msra.mxu0 0
    %6037 = vmatprep.subr.bf16.mxu0 0
    %6038 = vmatpush1.bf16.msra.mxu0 0
    %6039 = vmatprep.subr.bf16.mxu0 0
    %6040 = vmatpush1.bf16.msra.mxu0 0
    %6041 = vmatprep.subr.bf16.mxu0 0
    %6042 = vmatpush1.bf16.msra.mxu0 0
    %6043 = vmatprep.mubr.bf16.mxu0 0
    %6044 = vmatmul.mubr.bf16.gmra.mrb[0].mxu0 %v6009
    %v6045 = vpop.f32.mrb[0].mxu0
    %v6046 = vadd.f32 0.0, %v6045
    %v6047 = vpop.f32.mrb[0].mxu0
    %v6048 = vadd.f32 0.0, %v6047
    %v6049 = vpop.f32.mrb[0].mxu0
    %v6050 = vpop.f32.mrb[0].mxu0
    %6051 = vdwg.mxu0
    %v6052 = vadd.f32 %v5950, %v6046
    %v6053 = vadd.f32 %v5951, %v6048
    %s6054 = scalar_lea.vmem [#allocation8], 768
    %v6055 = vld [vmem:[%s6054] sm:$0xff]
    %v6056 = vld [vmem:[%s6054 + $0x8] sm:$0xff]
    %v6057 = vld [vmem:[%s6054 + $0x10] sm:$0xff]
    %v6058 = vld [vmem:[%s6054 + $0x18] sm:$0xff]
    %v6059 = vld [vmem:[%s6054 + $0x20] sm:$0xff]
    %v6060 = vld [vmem:[%s6054 + $0x28] sm:$0xff]
    %v6061 = vld [vmem:[%s6054 + $0x30] sm:$0xff]
    %v6062 = vld [vmem:[%s6054 + $0x38] sm:$0xff]
    %v6065 = vunpack.c.l.b16 %v4814
    %v6066 = vunpack.c.l.b16 %v4830
    %v6067 = vrot.slane %v6066, 7
    %v6068 = vsel %vm2728, %v6067, %v6065
    %v6069 = vpack.c.b16 %v6068, %v6068
    %v6078 = vunpack.c.l.b16 %v6055
    %v6079 = vunpack.c.h.b16 %v6055
    %v6080 = vunpack.c.l.b16 %v6056
    %v6081 = vunpack.c.h.b16 %v6056
    %v6082 = vunpack.c.l.b16 %v6057
    %v6083 = vunpack.c.h.b16 %v6057
    %v6084 = vunpack.c.l.b16 %v6058
    %v6085 = vunpack.c.h.b16 %v6058
    %v6086 = vunpack.c.l.b16 %v6059
    %v6087 = vunpack.c.h.b16 %v6059
    %v6088 = vunpack.c.l.b16 %v6060
    %v6089 = vunpack.c.h.b16 %v6060
    %v6090 = vunpack.c.l.b16 %v6061
    %v6091 = vunpack.c.h.b16 %v6061
    %v6092 = vunpack.c.l.b16 %v6062
    %v6093 = vunpack.c.h.b16 %v6062
    %v6094 = vpack.c.b16 %v6080, %v6078
    %v6095 = vpack.c.b16 %v6081, %v6079
    %v6096 = vpack.c.b16 %v6084, %v6082
    %v6097 = vpack.c.b16 %v6085, %v6083
    %v6098 = vpack.c.b16 %v6088, %v6086
    %v6099 = vpack.c.b16 %v6089, %v6087
    %v6100 = vpack.c.b16 %v6092, %v6090
    %v6101 = vpack.c.b16 %v6093, %v6091
    %v6111 = vsel %vm4898, %v6069, 0
    %6113 = vmatprep.subr.bf16.mxu0 %v6095
    %6114 = vmatpush1.bf16.msra.mxu0 %v6094
    %6115 = vmatprep.subr.bf16.mxu0 %v6097
    %6116 = vmatpush1.bf16.msra.mxu0 %v6096
    %6117 = vmatprep.subr.bf16.mxu0 %v6099
    %6118 = vmatpush1.bf16.msra.mxu0 %v6098
    %6119 = vmatprep.subr.bf16.mxu0 %v6101
    %6120 = vmatpush1.bf16.msra.mxu0 %v6100
    %6121 = vmatprep.subr.bf16.mxu0 0
    %6122 = vmatpush1.bf16.msra.mxu0 0
    %6123 = vmatprep.subr.bf16.mxu0 0
    %6124 = vmatpush1.bf16.msra.mxu0 0
    %6125 = vmatprep.subr.bf16.mxu0 0
    %6126 = vmatpush1.bf16.msra.mxu0 0
    %6127 = vmatprep.subr.bf16.mxu0 0
    %6128 = vmatpush1.bf16.msra.mxu0 0
    %6129 = vmatprep.subr.bf16.mxu0 0
    %6130 = vmatpush1.bf16.msra.mxu0 0
    %6131 = vmatprep.subr.bf16.mxu0 0
    %6132 = vmatpush1.bf16.msra.mxu0 0
    %6133 = vmatprep.subr.bf16.mxu0 0
    %6134 = vmatpush1.bf16.msra.mxu0 0
    %6135 = vmatprep.subr.bf16.mxu0 0
    %6136 = vmatpush1.bf16.msra.mxu0 0
    %6137 = vmatprep.subr.bf16.mxu0 0
    %6138 = vmatpush1.bf16.msra.mxu0 0
    %6139 = vmatprep.subr.bf16.mxu0 0
    %6140 = vmatpush1.bf16.msra.mxu0 0
    %6141 = vmatprep.subr.bf16.mxu0 0
    %6142 = vmatpush1.bf16.msra.mxu0 0
    %6143 = vmatprep.subr.bf16.mxu0 0
    %6144 = vmatpush1.bf16.msra.mxu0 0
    %6145 = vmatprep.mubr.bf16.mxu0 0
    %6146 = vmatmul.mubr.bf16.gmra.mrb[0].mxu0 %v6111
    %v6147 = vpop.f32.mrb[0].mxu0
    %v6148 = vadd.f32 0.0, %v6147
    %v6149 = vpop.f32.mrb[0].mxu0
    %v6150 = vadd.f32 0.0, %v6149
    %v6151 = vpop.f32.mrb[0].mxu0
    %v6152 = vpop.f32.mrb[0].mxu0
    %6153 = vdwg.mxu0
    %v6154 = vadd.f32 %v6052, %v6148
    %v6155 = vadd.f32 %v6053, %v6150
    %s6156 = scalar_lea.vmem [#allocation8], 832
    %v6157 = vld [vmem:[%s6156] sm:$0xff]
    %v6158 = vld [vmem:[%s6156 + $0x8] sm:$0xff]
    %v6159 = vld [vmem:[%s6156 + $0x10] sm:$0xff]
    %v6160 = vld [vmem:[%s6156 + $0x18] sm:$0xff]
    %v6161 = vld [vmem:[%s6156 + $0x20] sm:$0xff]
    %v6162 = vld [vmem:[%s6156 + $0x28] sm:$0xff]
    %v6163 = vld [vmem:[%s6156 + $0x30] sm:$0xff]
    %v6164 = vld [vmem:[%s6156 + $0x38] sm:$0xff]
    %v6167 = vunpack.c.l.b16 %v4815
    %v6168 = vunpack.c.l.b16 %v4831
    %v6169 = vrot.slane %v6168, 7
    %v6170 = vsel %vm2728, %v6169, %v6167
    %v6171 = vpack.c.b16 %v6170, %v6170
    %v6180 = vunpack.c.l.b16 %v6157
    %v6181 = vunpack.c.h.b16 %v6157
    %v6182 = vunpack.c.l.b16 %v6158
    %v6183 = vunpack.c.h.b16 %v6158
    %v6184 = vunpack.c.l.b16 %v6159
    %v6185 = vunpack.c.h.b16 %v6159
    %v6186 = vunpack.c.l.b16 %v6160
    %v6187 = vunpack.c.h.b16 %v6160
    %v6188 = vunpack.c.l.b16 %v6161
    %v6189 = vunpack.c.h.b16 %v6161
    %v6190 = vunpack.c.l.b16 %v6162
    %v6191 = vunpack.c.h.b16 %v6162
    %v6192 = vunpack.c.l.b16 %v6163
    %v6193 = vunpack.c.h.b16 %v6163
    %v6194 = vunpack.c.l.b16 %v6164
    %v6195 = vunpack.c.h.b16 %v6164
    %v6196 = vpack.c.b16 %v6182, %v6180
    %v6197 = vpack.c.b16 %v6183, %v6181
    %v6198 = vpack.c.b16 %v6186, %v6184
    %v6199 = vpack.c.b16 %v6187, %v6185
    %v6200 = vpack.c.b16 %v6190, %v6188
    %v6201 = vpack.c.b16 %v6191, %v6189
    %v6202 = vpack.c.b16 %v6194, %v6192
    %v6203 = vpack.c.b16 %v6195, %v6193
    %v6213 = vsel %vm4898, %v6171, 0
    %6215 = vmatprep.subr.bf16.mxu0 %v6197
    %6216 = vmatpush1.bf16.msra.mxu0 %v6196
    %6217 = vmatprep.subr.bf16.mxu0 %v6199
    %6218 = vmatpush1.bf16.msra.mxu0 %v6198
    %6219 = vmatprep.subr.bf16.mxu0 %v6201
    %6220 = vmatpush1.bf16.msra.mxu0 %v6200
    %6221 = vmatprep.subr.bf16.mxu0 %v6203
    %6222 = vmatpush1.bf16.msra.mxu0 %v6202
    %6223 = vmatprep.subr.bf16.mxu0 0
    %6224 = vmatpush1.bf16.msra.mxu0 0
    %6225 = vmatprep.subr.bf16.mxu0 0
    %6226 = vmatpush1.bf16.msra.mxu0 0
    %6227 = vmatprep.subr.bf16.mxu0 0
    %6228 = vmatpush1.bf16.msra.mxu0 0
    %6229 = vmatprep.subr.bf16.mxu0 0
    %6230 = vmatpush1.bf16.msra.mxu0 0
    %6231 = vmatprep.subr.bf16.mxu0 0
    %6232 = vmatpush1.bf16.msra.mxu0 0
    %6233 = vmatprep.subr.bf16.mxu0 0
    %6234 = vmatpush1.bf16.msra.mxu0 0
    %6235 = vmatprep.subr.bf16.mxu0 0
    %6236 = vmatpush1.bf16.msra.mxu0 0
    %6237 = vmatprep.subr.bf16.mxu0 0
    %6238 = vmatpush1.bf16.msra.mxu0 0
    %6239 = vmatprep.subr.bf16.mxu0 0
    %6240 = vmatpush1.bf16.msra.mxu0 0
    %6241 = vmatprep.subr.bf16.mxu0 0
    %6242 = vmatpush1.bf16.msra.mxu0 0
    %6243 = vmatprep.subr.bf16.mxu0 0
    %6244 = vmatpush1.bf16.msra.mxu0 0
    %6245 = vmatprep.subr.bf16.mxu0 0
    %6246 = vmatpush1.bf16.msra.mxu0 0
    %6247 = vmatprep.mubr.bf16.mxu0 0
    %6248 = vmatmul.mubr.bf16.gmra.mrb[0].mxu0 %v6213
    %v6249 = vpop.f32.mrb[0].mxu0
    %v6250 = vadd.f32 0.0, %v6249
    %v6251 = vpop.f32.mrb[0].mxu0
    %v6252 = vadd.f32 0.0, %v6251
    %v6253 = vpop.f32.mrb[0].mxu0
    %v6254 = vpop.f32.mrb[0].mxu0
    %6255 = vdwg.mxu0
    %v6256 = vadd.f32 %v6154, %v6250
    %v6257 = vadd.f32 %v6155, %v6252
    %s6258 = scalar_lea.vmem [#allocation8], 896
    %v6259 = vld [vmem:[%s6258] sm:$0xff]
    %v6260 = vld [vmem:[%s6258 + $0x8] sm:$0xff]
    %v6261 = vld [vmem:[%s6258 + $0x10] sm:$0xff]
    %v6262 = vld [vmem:[%s6258 + $0x18] sm:$0xff]
    %v6263 = vld [vmem:[%s6258 + $0x20] sm:$0xff]
    %v6264 = vld [vmem:[%s6258 + $0x28] sm:$0xff]
    %v6265 = vld [vmem:[%s6258 + $0x30] sm:$0xff]
    %v6266 = vld [vmem:[%s6258 + $0x38] sm:$0xff]
    %v6269 = vunpack.c.l.b16 %v4816
    %v6270 = vunpack.c.l.b16 %v4832
    %v6271 = vrot.slane %v6270, 7
    %v6272 = vsel %vm2728, %v6271, %v6269
    %v6273 = vpack.c.b16 %v6272, %v6272
    %v6282 = vunpack.c.l.b16 %v6259
    %v6283 = vunpack.c.h.b16 %v6259
    %v6284 = vunpack.c.l.b16 %v6260
    %v6285 = vunpack.c.h.b16 %v6260
    %v6286 = vunpack.c.l.b16 %v6261
    %v6287 = vunpack.c.h.b16 %v6261
    %v6288 = vunpack.c.l.b16 %v6262
    %v6289 = vunpack.c.h.b16 %v6262
    %v6290 = vunpack.c.l.b16 %v6263
    %v6291 = vunpack.c.h.b16 %v6263
    %v6292 = vunpack.c.l.b16 %v6264
    %v6293 = vunpack.c.h.b16 %v6264
    %v6294 = vunpack.c.l.b16 %v6265
    %v6295 = vunpack.c.h.b16 %v6265
    %v6296 = vunpack.c.l.b16 %v6266
    %v6297 = vunpack.c.h.b16 %v6266
    %v6298 = vpack.c.b16 %v6284, %v6282
    %v6299 = vpack.c.b16 %v6285, %v6283
    %v6300 = vpack.c.b16 %v6288, %v6286
    %v6301 = vpack.c.b16 %v6289, %v6287
    %v6302 = vpack.c.b16 %v6292, %v6290
    %v6303 = vpack.c.b16 %v6293, %v6291
    %v6304 = vpack.c.b16 %v6296, %v6294
    %v6305 = vpack.c.b16 %v6297, %v6295
    %v6315 = vsel %vm4898, %v6273, 0
    %6317 = vmatprep.subr.bf16.mxu0 %v6299
    %6318 = vmatpush1.bf16.msra.mxu0 %v6298
    %6319 = vmatprep.subr.bf16.mxu0 %v6301
    %6320 = vmatpush1.bf16.msra.mxu0 %v6300
    %6321 = vmatprep.subr.bf16.mxu0 %v6303
    %6322 = vmatpush1.bf16.msra.mxu0 %v6302
    %6323 = vmatprep.subr.bf16.mxu0 %v6305
    %6324 = vmatpush1.bf16.msra.mxu0 %v6304
    %6325 = vmatprep.subr.bf16.mxu0 0
    %6326 = vmatpush1.bf16.msra.mxu0 0
    %6327 = vmatprep.subr.bf16.mxu0 0
    %6328 = vmatpush1.bf16.msra.mxu0 0
    %6329 = vmatprep.subr.bf16.mxu0 0
    %6330 = vmatpush1.bf16.msra.mxu0 0
    %6331 = vmatprep.subr.bf16.mxu0 0
    %6332 = vmatpush1.bf16.msra.mxu0 0
    %6333 = vmatprep.subr.bf16.mxu0 0
    %6334 = vmatpush1.bf16.msra.mxu0 0
    %6335 = vmatprep.subr.bf16.mxu0 0
    %6336 = vmatpush1.bf16.msra.mxu0 0
    %6337 = vmatprep.subr.bf16.mxu0 0
    %6338 = vmatpush1.bf16.msra.mxu0 0
    %6339 = vmatprep.subr.bf16.mxu0 0
    %6340 = vmatpush1.bf16.msra.mxu0 0
    %6341 = vmatprep.subr.bf16.mxu0 0
    %6342 = vmatpush1.bf16.msra.mxu0 0
    %6343 = vmatprep.subr.bf16.mxu0 0
    %6344 = vmatpush1.bf16.msra.mxu0 0
    %6345 = vmatprep.subr.bf16.mxu0 0
    %6346 = vmatpush1.bf16.msra.mxu0 0
    %6347 = vmatprep.subr.bf16.mxu0 0
    %6348 = vmatpush1.bf16.msra.mxu0 0
    %6349 = vmatprep.mubr.bf16.mxu0 0
    %6350 = vmatmul.mubr.bf16.gmra.mrb[0].mxu0 %v6315
    %v6351 = vpop.f32.mrb[0].mxu0
    %v6352 = vadd.f32 0.0, %v6351
    %v6353 = vpop.f32.mrb[0].mxu0
    %v6354 = vadd.f32 0.0, %v6353
    %v6355 = vpop.f32.mrb[0].mxu0
    %v6356 = vpop.f32.mrb[0].mxu0
    %6357 = vdwg.mxu0
    %v6358 = vadd.f32 %v6256, %v6352
    %v6359 = vadd.f32 %v6257, %v6354
    %s6360 = scalar_lea.vmem [#allocation8], 960
    %v6361 = vld [vmem:[%s6360] sm:$0xff]
    %v6362 = vld [vmem:[%s6360 + $0x8] sm:$0xff]
    %v6363 = vld [vmem:[%s6360 + $0x10] sm:$0xff]
    %v6364 = vld [vmem:[%s6360 + $0x18] sm:$0xff]
    %v6365 = vld [vmem:[%s6360 + $0x20] sm:$0xff]
    %v6366 = vld [vmem:[%s6360 + $0x28] sm:$0xff]
    %v6367 = vld [vmem:[%s6360 + $0x30] sm:$0xff]
    %v6368 = vld [vmem:[%s6360 + $0x38] sm:$0xff]
    %v6371 = vunpack.c.l.b16 %v4817
    %v6372 = vunpack.c.l.b16 %v4833
    %v6373 = vrot.slane %v6372, 7
    %v6374 = vsel %vm2728, %v6373, %v6371
    %v6375 = vpack.c.b16 %v6374, %v6374
    %v6384 = vunpack.c.l.b16 %v6361
    %v6385 = vunpack.c.h.b16 %v6361
    %v6386 = vunpack.c.l.b16 %v6362
    %v6387 = vunpack.c.h.b16 %v6362
    %v6388 = vunpack.c.l.b16 %v6363
    %v6389 = vunpack.c.h.b16 %v6363
    %v6390 = vunpack.c.l.b16 %v6364
    %v6391 = vunpack.c.h.b16 %v6364
    %v6392 = vunpack.c.l.b16 %v6365
    %v6393 = vunpack.c.h.b16 %v6365
    %v6394 = vunpack.c.l.b16 %v6366
    %v6395 = vunpack.c.h.b16 %v6366
    %v6396 = vunpack.c.l.b16 %v6367
    %v6397 = vunpack.c.h.b16 %v6367
    %v6398 = vunpack.c.l.b16 %v6368
    %v6399 = vunpack.c.h.b16 %v6368
    %v6400 = vpack.c.b16 %v6386, %v6384
    %v6401 = vpack.c.b16 %v6387, %v6385
    %v6402 = vpack.c.b16 %v6390, %v6388
    %v6403 = vpack.c.b16 %v6391, %v6389
    %v6404 = vpack.c.b16 %v6394, %v6392
    %v6405 = vpack.c.b16 %v6395, %v6393
    %v6406 = vpack.c.b16 %v6398, %v6396
    %v6407 = vpack.c.b16 %v6399, %v6397
    %v6417 = vsel %vm4898, %v6375, 0
    %6419 = vmatprep.subr.bf16.mxu0 %v6401
    %6420 = vmatpush1.bf16.msra.mxu0 %v6400
    %6421 = vmatprep.subr.bf16.mxu0 %v6403
    %6422 = vmatpush1.bf16.msra.mxu0 %v6402
    %6423 = vmatprep.subr.bf16.mxu0 %v6405
    %6424 = vmatpush1.bf16.msra.mxu0 %v6404
    %6425 = vmatprep.subr.bf16.mxu0 %v6407
    %6426 = vmatpush1.bf16.msra.mxu0 %v6406
    %6427 = vmatprep.subr.bf16.mxu0 0
    %6428 = vmatpush1.bf16.msra.mxu0 0
    %6429 = vmatprep.subr.bf16.mxu0 0
    %6430 = vmatpush1.bf16.msra.mxu0 0
    %6431 = vmatprep.subr.bf16.mxu0 0
    %6432 = vmatpush1.bf16.msra.mxu0 0
    %6433 = vmatprep.subr.bf16.mxu0 0
    %6434 = vmatpush1.bf16.msra.mxu0 0
    %6435 = vmatprep.subr.bf16.mxu0 0
    %6436 = vmatpush1.bf16.msra.mxu0 0
    %6437 = vmatprep.subr.bf16.mxu0 0
    %6438 = vmatpush1.bf16.msra.mxu0 0
    %6439 = vmatprep.subr.bf16.mxu0 0
    %6440 = vmatpush1.bf16.msra.mxu0 0
    %6441 = vmatprep.subr.bf16.mxu0 0
    %6442 = vmatpush1.bf16.msra.mxu0 0
    %6443 = vmatprep.subr.bf16.mxu0 0
    %6444 = vmatpush1.bf16.msra.mxu0 0
    %6445 = vmatprep.subr.bf16.mxu0 0
    %6446 = vmatpush1.bf16.msra.mxu0 0
    %6447 = vmatprep.subr.bf16.mxu0 0
    %6448 = vmatpush1.bf16.msra.mxu0 0
    %6449 = vmatprep.subr.bf16.mxu0 0
    %6450 = vmatpush1.bf16.msra.mxu0 0
    %6451 = vmatprep.mubr.bf16.mxu0 0
    %6452 = vmatmul.mubr.bf16.gmra.mrb[0].mxu0 %v6417
    %v6453 = vpop.f32.mrb[0].mxu0
    %v6454 = vadd.f32 0.0, %v6453
    %v6455 = vpop.f32.mrb[0].mxu0
    %v6456 = vadd.f32 0.0, %v6455
    %v6457 = vpop.f32.mrb[0].mxu0
    %v6458 = vpop.f32.mrb[0].mxu0
    %6459 = vdwg.mxu0
    %v6460 = vadd.f32 %v6358, %v6454
    %v6461 = vadd.f32 %v6359, %v6456
    %v6462 = vld [vmem:[%s6] sm:$0x3]
    %v6464 = vlaneseq
    %v6465 = vshrl.u32 %v6464, 7
    %v6466 = vsub.s32 0, %v6465
    %v6467 = vrot.slane %v6462, %v6466
    %v6468 = vlaneseq
    %v6469 = vshrl.u32 %v6468, 7
    %v6470 = vsub.s32 1, %v6469
    %v6471 = vrot.slane %v6462, %v6470
    %v6474 = vadd.f32 %v6460, %v6467
    %v6475 = vadd.f32 %v6461, %v6471
    %v6476 = vmax.f32 %v6474, 0.0
    %v6477 = vmax.f32 %v6475, 0.0
    %v6478 = vpack.c.bf16 %v6476, %v6476
    %v6479 = vpack.c.bf16 %v6477, %v6477
    %v6480 = vld [vmem:[#allocation9] sm:$0xf]
    %v6481 = vld [vmem:[#allocation9 + $0x4] sm:$0xf]
    %v6482 = vld [vmem:[#allocation9 + $0x8] sm:$0xf]
    %v6483 = vld [vmem:[#allocation9 + $0xc] sm:$0xf]
    %v6484 = vld [vmem:[#allocation9 + $0x10] sm:$0xf]
    %v6485 = vld [vmem:[#allocation9 + $0x14] sm:$0xf]
    %v6486 = vld [vmem:[#allocation9 + $0x18] sm:$0xf]
    %v6487 = vld [vmem:[#allocation9 + $0x1c] sm:$0xf]
    %v6488 = vld [vmem:[#allocation9 + $0x20] sm:$0xf]
    %v6489 = vld [vmem:[#allocation9 + $0x24] sm:$0xf]
    %v6490 = vld [vmem:[#allocation9 + $0x28] sm:$0xf]
    %v6491 = vld [vmem:[#allocation9 + $0x2c] sm:$0xf]
    %v6492 = vld [vmem:[#allocation9 + $0x30] sm:$0xf]
    %v6493 = vld [vmem:[#allocation9 + $0x34] sm:$0xf]
    %v6494 = vld [vmem:[#allocation9 + $0x38] sm:$0xf]
    %v6495 = vld [vmem:[#allocation9 + $0x3c] sm:$0xf]
    %v6496 = vld [vmem:[#allocation9 + $0x40] sm:$0xf]
    %v6497 = vld [vmem:[#allocation9 + $0x44] sm:$0xf]
    %v6498 = vld [vmem:[#allocation9 + $0x48] sm:$0xf]
    %v6499 = vld [vmem:[#allocation9 + $0x4c] sm:$0xf]
    %v6500 = vld [vmem:[#allocation9 + $0x50] sm:$0xf]
    %v6501 = vld [vmem:[#allocation9 + $0x54] sm:$0xf]
    %v6502 = vld [vmem:[#allocation9 + $0x58] sm:$0xf]
    %v6503 = vld [vmem:[#allocation9 + $0x5c] sm:$0xf]
    %v6504 = vld [vmem:[#allocation9 + $0x60] sm:$0xf]
    %v6505 = vld [vmem:[#allocation9 + $0x64] sm:$0xf]
    %v6506 = vld [vmem:[#allocation9 + $0x68] sm:$0xf]
    %v6507 = vld [vmem:[#allocation9 + $0x6c] sm:$0xf]
    %v6508 = vld [vmem:[#allocation9 + $0x70] sm:$0xf]
    %v6509 = vld [vmem:[#allocation9 + $0x74] sm:$0xf]
    %v6510 = vld [vmem:[#allocation9 + $0x78] sm:$0xf]
    %v6511 = vld [vmem:[#allocation9 + $0x7c] sm:$0xf]
    %v6512 = vld [vmem:[%s8] sm:$0x1]
    %v6514 = vlaneseq
    %v6515 = vshrl.u32 %v6514, 7
    %v6516 = vsub.s32 0, %v6515
    %v6517 = vrot.slane %v6512, %v6516
    %v6551 = vunpack.c.l.b16 %v6480
    %v6552 = vunpack.c.l.b16 %v6481
    %v6553 = vunpack.c.l.b16 %v6482
    %v6554 = vunpack.c.l.b16 %v6483
    %v6555 = vunpack.c.l.b16 %v6484
    %v6556 = vunpack.c.l.b16 %v6485
    %v6557 = vunpack.c.l.b16 %v6486
    %v6558 = vunpack.c.l.b16 %v6487
    %v6559 = vunpack.c.l.b16 %v6488
    %v6560 = vunpack.c.l.b16 %v6489
    %v6561 = vunpack.c.l.b16 %v6490
    %v6562 = vunpack.c.l.b16 %v6491
    %v6563 = vunpack.c.l.b16 %v6492
    %v6564 = vunpack.c.l.b16 %v6493
    %v6565 = vunpack.c.l.b16 %v6494
    %v6566 = vunpack.c.l.b16 %v6495
    %v6567 = vunpack.c.l.b16 %v6496
    %v6568 = vunpack.c.l.b16 %v6497
    %v6569 = vunpack.c.l.b16 %v6498
    %v6570 = vunpack.c.l.b16 %v6499
    %v6571 = vunpack.c.l.b16 %v6500
    %v6572 = vunpack.c.l.b16 %v6501
    %v6573 = vunpack.c.l.b16 %v6502
    %v6574 = vunpack.c.l.b16 %v6503
    %v6575 = vunpack.c.l.b16 %v6504
    %v6576 = vunpack.c.l.b16 %v6505
    %v6577 = vunpack.c.l.b16 %v6506
    %v6578 = vunpack.c.l.b16 %v6507
    %v6579 = vunpack.c.l.b16 %v6508
    %v6580 = vunpack.c.l.b16 %v6509
    %v6581 = vunpack.c.l.b16 %v6510
    %v6582 = vunpack.c.l.b16 %v6511
    %v6583 = vpack.c.b16 %v6552, %v6551
    %v6584 = vpack.c.b16 %v6554, %v6553
    %v6585 = vpack.c.b16 %v6556, %v6555
    %v6586 = vpack.c.b16 %v6558, %v6557
    %v6587 = vpack.c.b16 %v6560, %v6559
    %v6588 = vpack.c.b16 %v6562, %v6561
    %v6589 = vpack.c.b16 %v6564, %v6563
    %v6590 = vpack.c.b16 %v6566, %v6565
    %v6591 = vpack.c.b16 %v6568, %v6567
    %v6592 = vpack.c.b16 %v6570, %v6569
    %v6593 = vpack.c.b16 %v6572, %v6571
    %v6594 = vpack.c.b16 %v6574, %v6573
    %v6595 = vpack.c.b16 %v6576, %v6575
    %v6596 = vpack.c.b16 %v6578, %v6577
    %v6597 = vpack.c.b16 %v6580, %v6579
    %v6598 = vpack.c.b16 %v6582, %v6581
    %6615 = vmatprep.subr.bf16.mxu0 0
    %6616 = vmatpush1.bf16.msra.mxu0 %v6583
    %6617 = vmatprep.subr.bf16.mxu0 0
    %6618 = vmatpush1.bf16.msra.mxu0 %v6584
    %6619 = vmatprep.subr.bf16.mxu0 0
    %6620 = vmatpush1.bf16.msra.mxu0 %v6585
    %6621 = vmatprep.subr.bf16.mxu0 0
    %6622 = vmatpush1.bf16.msra.mxu0 %v6586
    %6623 = vmatprep.subr.bf16.mxu0 0
    %6624 = vmatpush1.bf16.msra.mxu0 %v6587
    %6625 = vmatprep.subr.bf16.mxu0 0
    %6626 = vmatpush1.bf16.msra.mxu0 %v6588
    %6627 = vmatprep.subr.bf16.mxu0 0
    %6628 = vmatpush1.bf16.msra.mxu0 %v6589
    %6629 = vmatprep.subr.bf16.mxu0 0
    %6630 = vmatpush1.bf16.msra.mxu0 %v6590
    %6631 = vmatprep.subr.bf16.mxu0 0
    %6632 = vmatpush1.bf16.msra.mxu0 %v6591
    %6633 = vmatprep.subr.bf16.mxu0 0
    %6634 = vmatpush1.bf16.msra.mxu0 %v6592
    %6635 = vmatprep.subr.bf16.mxu0 0
    %6636 = vmatpush1.bf16.msra.mxu0 %v6593
    %6637 = vmatprep.subr.bf16.mxu0 0
    %6638 = vmatpush1.bf16.msra.mxu0 %v6594
    %6639 = vmatprep.subr.bf16.mxu0 0
    %6640 = vmatpush1.bf16.msra.mxu0 %v6595
    %6641 = vmatprep.subr.bf16.mxu0 0
    %6642 = vmatpush1.bf16.msra.mxu0 %v6596
    %6643 = vmatprep.subr.bf16.mxu0 0
    %6644 = vmatpush1.bf16.msra.mxu0 %v6597
    %6645 = vmatprep.subr.bf16.mxu0 0
    %6646 = vmatpush1.bf16.msra.mxu0 %v6598
    %6647 = vmatprep.mubr.bf16.mxu0 %v6479
    %6648 = vmatmul.mubr.bf16.gmra.mrb[0].mxu0 %v6478
    %v6649 = vpop.f32.mrb[0].mxu0
    %v6650 = vadd.f32 %v6517, %v6649
    %v6651 = vpop.f32.mrb[0].mxu0
    %v6652 = vpop.f32.mrb[0].mxu0
    %v6653 = vpop.f32.mrb[0].mxu0
    %6654 = vdwg.mxu0
    %6655 = vst [vmem:[#allocation11] sm:$0x3] %v6650
    // Predicated region
    $region58: #{tpu_custom_call.1} parent=1 // pred_check
      _
    $region59: #{tpu_custom_call.1} parent=1 // pred_check_branch
      %6657 = sbr.rel (0) target = $region61
    $region60: #{tpu_custom_call.1} parent=1 // pred_region
      %s6659 = ssub.s32 32, 32
      %6660 = vsyncadd [#allocation5], %s6659
      %s6662 = sshll.u32 [#allocation11], 4
      %s6663 = int_to_ptr.vmem [resolvable:$true] %s6662
      %6665 = dma.vmem_to_hbm [thread:$0]  %s6663, 32, %s9, [#allocation5]
    $region61: #{tpu_custom_call.1} parent=1 // pred_fallthru
      _
    // Predicated region
    $region62: #{tpu_custom_call.1} parent=1 // pred_check
      _
    $region63: #{tpu_custom_call.1} parent=1 // pred_check_branch
      %6667 = sbr.rel (0) target = $region65
    $region64: #{tpu_custom_call.1} parent=1 // pred_region
      %6668 = dma.done [#allocation5], 32
    $region65: #{tpu_custom_call.1} parent=1 // pred_fallthru
      _
    %6669 = vsyncpa [#allocation4], 1
    %6670 = vsyncpa [#allocation7], 1
    %6671 = vsyncpa [#allocation10], 1
    %6672 = vsyncpa [#allocation5], 1

</llo_original>
